<compile_context>
chip_gen: v7x
topology: tpu7x:2x2x1
jax: 0.10.0
libtpu: 0.0.40
codegen_flags: <defaults>
</compile_context>

<pallas_src>
import functools

import jax
import jax.numpy as jnp
from jax import lax
from jax.experimental import pallas as pl
from jax.experimental.pallas import tpu as pltpu


def _tbrnn_kernel(inp_ref, noise_ref, x0_ref, wa_ref, e_ref,
                  traj_ref,
                  x_state,
                  *, hid, t_chunk, noise_std, tau):
    c = pl.program_id(0)

    # initialize the recurrent state once (scratch persists across grid steps)
    @pl.when(c == 0)
    def _():
        x_state[...] = x0_ref[...]

    # hoist loop-invariant weight loads out of the unrolled time loop
    wa = wa_ref[...]                       # (H, H*H)
    e_sel = e_ref[...]                     # (H*H, H)
    one_minus_tau = 1.0 - tau

    def step(s, x):
        r = jnp.tanh(x)                                                 # (B, H)
        # bilinear (third-order) recurrent term:
        #   M[b, i*H+k] = sum_j r_j w_hh[i,j,k]
        #   P[b, i*H+k] = M * r_k          (tile gives r_k at fast index)
        #   hidden_W    = P @ E            (segmented sum over k per i)
        m = jnp.dot(r, wa, preferred_element_type=jnp.float32)          # (B, H*H)
        p = m * jnp.tile(r, (1, hid))                                   # (B, H*H)
        hidden_w = jnp.dot(p, e_sel, preferred_element_type=jnp.float32)  # (B, H)
        rec_x = hidden_w + inp_ref[s]      # input projection precomputed in JAX
        # mode == 'cont' Euler step with additive noise (fused form)
        x_new = one_minus_tau * x + tau * rec_x + noise_std * noise_ref[s]
        traj_ref[s] = x_new
        return x_new

    x_final = lax.fori_loop(0, t_chunk, step, x_state[...], unroll=True)
    x_state[...] = x_final


def _pick_chunk(seq, max_chunk=16):
    for c in range(min(seq, max_chunk), 0, -1):
        if seq % c == 0:
            return c
    return 1


def tbrnn_forward(u, x0, noise, params, *, noise_std=0.05, tau=0.2):
    """u: (B, S, I); x0: (B, H) or None; noise: (S, B, H).  Returns
    (output (B,S,I), x_final (B,H), trajectories (B,S,H)) — matching PyTorch."""
    w_hh = params["w_hh"]
    b, seq, in_dim = u.shape
    hid = w_hh.shape[0]
    if x0 is None:
        x0 = jnp.zeros((b, hid), jnp.float32)

    # ---- hoisted, time-independent math (plain JAX, single big matmuls) ----
    u_tm = jnp.transpose(u, (1, 0, 2)).astype(jnp.float32)             # (S, B, I)
    win_T = params["w_in_w"].T.astype(jnp.float32)                     # (I, H)
    inp_tm = (u_tm.reshape(seq * b, in_dim) @ win_T
              + params["w_in_b"].astype(jnp.float32)).reshape(seq, b, hid)

    # weight re-layouts for the in-kernel bilinear term
    w_a = jnp.transpose(w_hh, (1, 0, 2)).reshape(hid, hid * hid)       # (H, H*H)
    e_sel = jnp.repeat(jnp.eye(hid, dtype=jnp.float32), hid, axis=0)   # (H*H, H)

    t_chunk = _pick_chunk(seq)
    num_chunks = seq // t_chunk

    kernel = functools.partial(_tbrnn_kernel, hid=hid, t_chunk=t_chunk,
                               noise_std=noise_std, tau=tau)

    traj_tm = pl.pallas_call(
        kernel,
        grid=(num_chunks,),
        in_specs=[
            pl.BlockSpec((t_chunk, b, hid), lambda c: (c, 0, 0)),   # input_I (time-major)
            pl.BlockSpec((t_chunk, b, hid), lambda c: (c, 0, 0)),   # noise
            pl.BlockSpec((b, hid), lambda c: (0, 0)),               # x0
            pl.BlockSpec((hid, hid * hid), lambda c: (0, 0)),       # W_a (bilinear)
            pl.BlockSpec((hid * hid, hid), lambda c: (0, 0)),       # E selector
        ],
        out_specs=pl.BlockSpec((t_chunk, b, hid), lambda c: (c, 0, 0)),
        out_shape=jax.ShapeDtypeStruct((seq, b, hid), jnp.float32),
        scratch_shapes=[pltpu.VMEM((b, hid), jnp.float32)],
        compiler_params=pltpu.CompilerParams(
            dimension_semantics=("arbitrary",)),                    # recurrence -> sequential
    )(inp_tm, noise.astype(jnp.float32), x0.astype(jnp.float32), w_a, e_sel)

    trajectories = jnp.transpose(traj_tm, (1, 0, 2))                # (B, S, H)
    x_final = trajectories[:, -1]

    # readout hoisted out of the kernel: W_out(tanh(traj)) as one big matmul
    wout_T = params["w_out_w"].T.astype(jnp.float32)                # (H, I)
    output = jnp.tanh(trajectories) @ wout_T + params["w_out_b"].astype(jnp.float32)
    return output, x_final, trajectories


def tbrnn_reference(u, x0, noise, params, *, noise_std=0.05, tau=0.2):
    """Pure-JAX mirror of the PyTorch forward (form='rate', mode='cont')."""
    w_hh = params["w_hh"]
    b, seq, _ = u.shape
    hid = w_hh.shape[0]
    if x0 is None:
        x0 = jnp.zeros((b, hid), jnp.float32)
    x = x0
    trajs = []
    for t in range(seq):
        r = jnp.tanh(x)
        input_I = u[:, t] @ params["w_in_w"].T + params["w_in_b"]
        hidden_W = jnp.einsum("bj,ijk,bk->bi", r, w_hh, r)
        rec_x = hidden_W + input_I
        x = x + noise_std * noise[t] + tau * (-x + rec_x)
        trajs.append(x)
    traj = jnp.stack(trajs, axis=1)
    out = jnp.tanh(traj) @ params["w_out_w"].T + params["w_out_b"]
    return out, x, traj


if __name__ == "__main__":
    B, SEQ, IN, HID = 2, 8, 4, 32
    key = jax.random.PRNGKey(0)
    k = jax.random.split(key, 8)
    bound = 1.0 / (HID ** 0.5)

    # deterministic parameter init mirroring the module's __init__
    params = {
        "w_hh": (0.1 / HID) * jax.random.normal(k[0], (HID, HID, HID), jnp.float32),
        "w_in_w": jax.random.normal(k[1], (HID, IN), jnp.float32),   # nn.init.normal_
        "w_in_b": jnp.zeros((HID,), jnp.float32),                    # zeros_
        "w_out_w": jax.random.uniform(k[2], (IN, HID), jnp.float32, -bound, bound),
        "w_out_b": jax.random.uniform(k[3], (IN,), jnp.float32, -bound, bound),
    }

    u = jax.random.normal(k[4], (B, SEQ, IN), jnp.float32)
    x0 = 0.1 * jax.random.normal(k[5], (B, HID), jnp.float32)
    # TODO(synk): torch.randn noise is drawn inside forward(); here the noise tensor
    # is generated deterministically host-side and fed to the kernel.
    noise = jax.random.normal(k[6], (SEQ, B, HID), jnp.float32)

    out, x_final, traj = tbrnn_forward(u, x0, noise, params)
    jax.block_until_ready((out, x_final, traj))

    out_r, x_r, traj_r = tbrnn_reference(u, x0, noise, params)
    assert jnp.allclose(out, out_r, atol=2e-3, rtol=2e-3), "output mismatch"
    assert jnp.allclose(x_final, x_r, atol=2e-3, rtol=2e-3), "final state mismatch"
    assert jnp.allclose(traj, traj_r, atol=2e-3, rtol=2e-3), "trajectory mismatch"

    print("KERNEL_OK")
</pallas_src>

<mosaic_0001>
module attributes {stable_mosaic.version = 11 : i64} {
  func.func @_tbrnn_kernel(%arg0: i32, %arg1: memref<8x2x32xf32, #tpu.memory_space<vmem>>, %arg2: memref<8x2x32xf32, #tpu.memory_space<vmem>>, %arg3: memref<2x32xf32, #tpu.memory_space<vmem>>, %arg4: memref<32x1024xf32, #tpu.memory_space<vmem>>, %arg5: memref<1024x32xf32, #tpu.memory_space<vmem>>, %arg6: memref<8x2x32xf32, #tpu.memory_space<vmem>>, %arg7: memref<2x32xf32, #tpu.memory_space<vmem>>) attributes {dimension_semantics = [#tpu.dimension_semantics<arbitrary>], iteration_bounds = array<i64: 1>, scalar_prefetch = 0 : i64, scratch_operands = 1 : i64, tpu.core_type = #tpu.core_type<tc>, window_params = [{transform_indices = @transform_0, window_bounds = array<i64: 8, 2, 32>}, {transform_indices = @transform_1, window_bounds = array<i64: 8, 2, 32>}, {pipeline_mode = #tpu.pipeline_mode<synchronous>, transform_indices = @transform_2, window_bounds = array<i64: 2, 32>}, {pipeline_mode = #tpu.pipeline_mode<synchronous>, transform_indices = @transform_3, window_bounds = array<i64: 32, 1024>}, {pipeline_mode = #tpu.pipeline_mode<synchronous>, transform_indices = @transform_4, window_bounds = array<i64: 1024, 32>}, {transform_indices = @transform_5, window_bounds = array<i64: 8, 2, 32>}]} {
    %c0_i32 = arith.constant 0 : i32
    %0 = arith.cmpi eq, %arg0, %c0_i32 : i32
    %1 = arith.extui %0 : i1 to i32
    %c0_i32_0 = arith.constant 0 : i32
    %2 = arith.cmpi ne, %1, %c0_i32_0 : i32
    scf.if %2 {
      %c0_96 = arith.constant 0 : index
      %c0_97 = arith.constant 0 : index
      %199 = vector.load %arg3[%c0_96, %c0_97] : memref<2x32xf32, #tpu.memory_space<vmem>>, vector<2x32xf32>
      %c0_98 = arith.constant 0 : index
      %c0_99 = arith.constant 0 : index
      %200 = vector.load %arg7[%c0_98, %c0_99] : memref<2x32xf32, #tpu.memory_space<vmem>>, vector<2x32xf32>
      tpu.vector_store %arg7[%c0_98, %c0_99], %199 {strides = array<i32>} : memref<2x32xf32, #tpu.memory_space<vmem>>, vector<2x32xf32>,
    } else {
    }
    %c0 = arith.constant 0 : index
    %c0_1 = arith.constant 0 : index
    %3 = vector.load %arg4[%c0, %c0_1] : memref<32x1024xf32, #tpu.memory_space<vmem>>, vector<32x1024xf32>
    %c0_2 = arith.constant 0 : index
    %c0_3 = arith.constant 0 : index
    %4 = vector.load %arg5[%c0_2, %c0_3] : memref<1024x32xf32, #tpu.memory_space<vmem>>, vector<1024x32xf32>
    %c0_4 = arith.constant 0 : index
    %c0_5 = arith.constant 0 : index
    %5 = vector.load %arg7[%c0_4, %c0_5] : memref<2x32xf32, #tpu.memory_space<vmem>>, vector<2x32xf32>
    %c0_i32_6 = arith.constant 0 : i32
    %6 = math.tanh %5 : vector<2x32xf32>
    %cst = arith.constant dense<0.000000e+00> : vector<2x1024xf32>
    %7 = tpu.matmul %6, %3, %cst {dimension_numbers = #tpu.dot_dimension_numbers<[1], [0], [0], [1], [0, 0, 1, 1], [], []>} : vector<2x32xf32>, vector<32x1024xf32>, vector<2x1024xf32> -> vector<2x1024xf32>
    %8 = tpu.concatenate %6, %6, %6, %6, %6, %6, %6, %6, %6, %6, %6, %6, %6, %6, %6, %6, %6, %6, %6, %6, %6, %6, %6, %6, %6, %6, %6, %6, %6, %6, %6, %6 in 1 : vector<2x32xf32>, vector<2x32xf32>, vector<2x32xf32>, vector<2x32xf32>, vector<2x32xf32>, vector<2x32xf32>, vector<2x32xf32>, vector<2x32xf32>, vector<2x32xf32>, vector<2x32xf32>, vector<2x32xf32>, vector<2x32xf32>, vector<2x32xf32>, vector<2x32xf32>, vector<2x32xf32>, vector<2x32xf32>, vector<2x32xf32>, vector<2x32xf32>, vector<2x32xf32>, vector<2x32xf32>, vector<2x32xf32>, vector<2x32xf32>, vector<2x32xf32>, vector<2x32xf32>, vector<2x32xf32>, vector<2x32xf32>, vector<2x32xf32>, vector<2x32xf32>, vector<2x32xf32>, vector<2x32xf32>, vector<2x32xf32>, vector<2x32xf32> -> vector<2x1024xf32>
    %9 = arith.mulf %7, %8 : vector<2x1024xf32>
    %cst_7 = arith.constant dense<0.000000e+00> : vector<2x32xf32>
    %10 = tpu.matmul %9, %4, %cst_7 {dimension_numbers = #tpu.dot_dimension_numbers<[1], [0], [0], [1], [0, 0, 1, 1], [], []>} : vector<2x1024xf32>, vector<1024x32xf32>, vector<2x32xf32> -> vector<2x32xf32>
    %11 = arith.index_cast %c0_i32_6 : i32 to index
    %c0_8 = arith.constant 0 : index
    %c0_9 = arith.constant 0 : index
    %12 = vector.load %arg1[%11, %c0_8, %c0_9] : memref<8x2x32xf32, #tpu.memory_space<vmem>>, vector<1x2x32xf32>
    %13 = vector.shape_cast %12 : vector<1x2x32xf32> to vector<2x32xf32>
    %14 = arith.addf %10, %13 : vector<2x32xf32>
    %cst_10 = arith.constant 8.000000e-01 : f32
    %15 = vector.broadcast %cst_10 : f32 to vector<2x32xf32>
    %16 = arith.mulf %15, %5 : vector<2x32xf32>
    %cst_11 = arith.constant 2.000000e-01 : f32
    %17 = vector.broadcast %cst_11 : f32 to vector<2x32xf32>
    %18 = arith.mulf %17, %14 : vector<2x32xf32>
    %19 = arith.addf %16, %18 : vector<2x32xf32>
    %20 = arith.index_cast %c0_i32_6 : i32 to index
    %c0_12 = arith.constant 0 : index
    %c0_13 = arith.constant 0 : index
    %21 = vector.load %arg2[%20, %c0_12, %c0_13] : memref<8x2x32xf32, #tpu.memory_space<vmem>>, vector<1x2x32xf32>
    %22 = vector.shape_cast %21 : vector<1x2x32xf32> to vector<2x32xf32>
    %cst_14 = arith.constant 5.000000e-02 : f32
    %23 = vector.broadcast %cst_14 : f32 to vector<2x32xf32>
    %24 = arith.mulf %23, %22 : vector<2x32xf32>
    %25 = arith.addf %19, %24 : vector<2x32xf32>
    %26 = arith.index_cast %c0_i32_6 : i32 to index
    %c0_15 = arith.constant 0 : index
    %c0_16 = arith.constant 0 : index
    %27 = vector.load %arg6[%26, %c0_15, %c0_16] : memref<8x2x32xf32, #tpu.memory_space<vmem>>, vector<1x2x32xf32>
    %28 = vector.shape_cast %27 : vector<1x2x32xf32> to vector<2x32xf32>
    %29 = vector.shape_cast %25 : vector<2x32xf32> to vector<1x2x32xf32>
    tpu.vector_store %arg6[%26, %c0_15, %c0_16], %29 {strides = array<i32>} : memref<8x2x32xf32, #tpu.memory_space<vmem>>, vector<1x2x32xf32>,
    %c1_i32 = arith.constant 1 : i32
    %30 = math.tanh %25 : vector<2x32xf32>
    %cst_17 = arith.constant dense<0.000000e+00> : vector<2x1024xf32>
    %31 = tpu.matmul %30, %3, %cst_17 {dimension_numbers = #tpu.dot_dimension_numbers<[1], [0], [0], [1], [0, 0, 1, 1], [], []>} : vector<2x32xf32>, vector<32x1024xf32>, vector<2x1024xf32> -> vector<2x1024xf32>
    %32 = tpu.concatenate %30, %30, %30, %30, %30, %30, %30, %30, %30, %30, %30, %30, %30, %30, %30, %30, %30, %30, %30, %30, %30, %30, %30, %30, %30, %30, %30, %30, %30, %30, %30, %30 in 1 : vector<2x32xf32>, vector<2x32xf32>, vector<2x32xf32>, vector<2x32xf32>, vector<2x32xf32>, vector<2x32xf32>, vector<2x32xf32>, vector<2x32xf32>, vector<2x32xf32>, vector<2x32xf32>, vector<2x32xf32>, vector<2x32xf32>, vector<2x32xf32>, vector<2x32xf32>, vector<2x32xf32>, vector<2x32xf32>, vector<2x32xf32>, vector<2x32xf32>, vector<2x32xf32>, vector<2x32xf32>, vector<2x32xf32>, vector<2x32xf32>, vector<2x32xf32>, vector<2x32xf32>, vector<2x32xf32>, vector<2x32xf32>, vector<2x32xf32>, vector<2x32xf32>, vector<2x32xf32>, vector<2x32xf32>, vector<2x32xf32>, vector<2x32xf32> -> vector<2x1024xf32>
    %33 = arith.mulf %31, %32 : vector<2x1024xf32>
    %cst_18 = arith.constant dense<0.000000e+00> : vector<2x32xf32>
    %34 = tpu.matmul %33, %4, %cst_18 {dimension_numbers = #tpu.dot_dimension_numbers<[1], [0], [0], [1], [0, 0, 1, 1], [], []>} : vector<2x1024xf32>, vector<1024x32xf32>, vector<2x32xf32> -> vector<2x32xf32>
    %35 = arith.index_cast %c1_i32 : i32 to index
    %c0_19 = arith.constant 0 : index
    %c0_20 = arith.constant 0 : index
    %36 = vector.load %arg1[%35, %c0_19, %c0_20] : memref<8x2x32xf32, #tpu.memory_space<vmem>>, vector<1x2x32xf32>
    %37 = vector.shape_cast %36 : vector<1x2x32xf32> to vector<2x32xf32>
    %38 = arith.addf %34, %37 : vector<2x32xf32>
    %cst_21 = arith.constant 8.000000e-01 : f32
    %39 = vector.broadcast %cst_21 : f32 to vector<2x32xf32>
    %40 = arith.mulf %39, %25 : vector<2x32xf32>
    %cst_22 = arith.constant 2.000000e-01 : f32
    %41 = vector.broadcast %cst_22 : f32 to vector<2x32xf32>
    %42 = arith.mulf %41, %38 : vector<2x32xf32>
    %43 = arith.addf %40, %42 : vector<2x32xf32>
    %44 = arith.index_cast %c1_i32 : i32 to index
    %c0_23 = arith.constant 0 : index
    %c0_24 = arith.constant 0 : index
    %45 = vector.load %arg2[%44, %c0_23, %c0_24] : memref<8x2x32xf32, #tpu.memory_space<vmem>>, vector<1x2x32xf32>
    %46 = vector.shape_cast %45 : vector<1x2x32xf32> to vector<2x32xf32>
    %cst_25 = arith.constant 5.000000e-02 : f32
    %47 = vector.broadcast %cst_25 : f32 to vector<2x32xf32>
    %48 = arith.mulf %47, %46 : vector<2x32xf32>
    %49 = arith.addf %43, %48 : vector<2x32xf32>
    %50 = arith.index_cast %c1_i32 : i32 to index
    %c0_26 = arith.constant 0 : index
    %c0_27 = arith.constant 0 : index
    %51 = vector.load %arg6[%50, %c0_26, %c0_27] : memref<8x2x32xf32, #tpu.memory_space<vmem>>, vector<1x2x32xf32>
    %52 = vector.shape_cast %51 : vector<1x2x32xf32> to vector<2x32xf32>
    %53 = vector.shape_cast %49 : vector<2x32xf32> to vector<1x2x32xf32>
    tpu.vector_store %arg6[%50, %c0_26, %c0_27], %53 {strides = array<i32>} : memref<8x2x32xf32, #tpu.memory_space<vmem>>, vector<1x2x32xf32>,
    %c2_i32 = arith.constant 2 : i32
    %54 = math.tanh %49 : vector<2x32xf32>
    %cst_28 = arith.constant dense<0.000000e+00> : vector<2x1024xf32>
    %55 = tpu.matmul %54, %3, %cst_28 {dimension_numbers = #tpu.dot_dimension_numbers<[1], [0], [0], [1], [0, 0, 1, 1], [], []>} : vector<2x32xf32>, vector<32x1024xf32>, vector<2x1024xf32> -> vector<2x1024xf32>
    %56 = tpu.concatenate %54, %54, %54, %54, %54, %54, %54, %54, %54, %54, %54, %54, %54, %54, %54, %54, %54, %54, %54, %54, %54, %54, %54, %54, %54, %54, %54, %54, %54, %54, %54, %54 in 1 : vector<2x32xf32>, vector<2x32xf32>, vector<2x32xf32>, vector<2x32xf32>, vector<2x32xf32>, vector<2x32xf32>, vector<2x32xf32>, vector<2x32xf32>, vector<2x32xf32>, vector<2x32xf32>, vector<2x32xf32>, vector<2x32xf32>, vector<2x32xf32>, vector<2x32xf32>, vector<2x32xf32>, vector<2x32xf32>, vector<2x32xf32>, vector<2x32xf32>, vector<2x32xf32>, vector<2x32xf32>, vector<2x32xf32>, vector<2x32xf32>, vector<2x32xf32>, vector<2x32xf32>, vector<2x32xf32>, vector<2x32xf32>, vector<2x32xf32>, vector<2x32xf32>, vector<2x32xf32>, vector<2x32xf32>, vector<2x32xf32>, vector<2x32xf32> -> vector<2x1024xf32>
    %57 = arith.mulf %55, %56 : vector<2x1024xf32>
    %cst_29 = arith.constant dense<0.000000e+00> : vector<2x32xf32>
    %58 = tpu.matmul %57, %4, %cst_29 {dimension_numbers = #tpu.dot_dimension_numbers<[1], [0], [0], [1], [0, 0, 1, 1], [], []>} : vector<2x1024xf32>, vector<1024x32xf32>, vector<2x32xf32> -> vector<2x32xf32>
    %59 = arith.index_cast %c2_i32 : i32 to index
    %c0_30 = arith.constant 0 : index
    %c0_31 = arith.constant 0 : index
    %60 = vector.load %arg1[%59, %c0_30, %c0_31] : memref<8x2x32xf32, #tpu.memory_space<vmem>>, vector<1x2x32xf32>
    %61 = vector.shape_cast %60 : vector<1x2x32xf32> to vector<2x32xf32>
    %62 = arith.addf %58, %61 : vector<2x32xf32>
    %cst_32 = arith.constant 8.000000e-01 : f32
    %63 = vector.broadcast %cst_32 : f32 to vector<2x32xf32>
    %64 = arith.mulf %63, %49 : vector<2x32xf32>
    %cst_33 = arith.constant 2.000000e-01 : f32
    %65 = vector.broadcast %cst_33 : f32 to vector<2x32xf32>
    %66 = arith.mulf %65, %62 : vector<2x32xf32>
    %67 = arith.addf %64, %66 : vector<2x32xf32>
    %68 = arith.index_cast %c2_i32 : i32 to index
    %c0_34 = arith.constant 0 : index
    %c0_35 = arith.constant 0 : index
    %69 = vector.load %arg2[%68, %c0_34, %c0_35] : memref<8x2x32xf32, #tpu.memory_space<vmem>>, vector<1x2x32xf32>
    %70 = vector.shape_cast %69 : vector<1x2x32xf32> to vector<2x32xf32>
    %cst_36 = arith.constant 5.000000e-02 : f32
    %71 = vector.broadcast %cst_36 : f32 to vector<2x32xf32>
    %72 = arith.mulf %71, %70 : vector<2x32xf32>
    %73 = arith.addf %67, %72 : vector<2x32xf32>
    %74 = arith.index_cast %c2_i32 : i32 to index
    %c0_37 = arith.constant 0 : index
    %c0_38 = arith.constant 0 : index
    %75 = vector.load %arg6[%74, %c0_37, %c0_38] : memref<8x2x32xf32, #tpu.memory_space<vmem>>, vector<1x2x32xf32>
    %76 = vector.shape_cast %75 : vector<1x2x32xf32> to vector<2x32xf32>
    %77 = vector.shape_cast %73 : vector<2x32xf32> to vector<1x2x32xf32>
    tpu.vector_store %arg6[%74, %c0_37, %c0_38], %77 {strides = array<i32>} : memref<8x2x32xf32, #tpu.memory_space<vmem>>, vector<1x2x32xf32>,
    %c3_i32 = arith.constant 3 : i32
    %78 = math.tanh %73 : vector<2x32xf32>
    %cst_39 = arith.constant dense<0.000000e+00> : vector<2x1024xf32>
    %79 = tpu.matmul %78, %3, %cst_39 {dimension_numbers = #tpu.dot_dimension_numbers<[1], [0], [0], [1], [0, 0, 1, 1], [], []>} : vector<2x32xf32>, vector<32x1024xf32>, vector<2x1024xf32> -> vector<2x1024xf32>
    %80 = tpu.concatenate %78, %78, %78, %78, %78, %78, %78, %78, %78, %78, %78, %78, %78, %78, %78, %78, %78, %78, %78, %78, %78, %78, %78, %78, %78, %78, %78, %78, %78, %78, %78, %78 in 1 : vector<2x32xf32>, vector<2x32xf32>, vector<2x32xf32>, vector<2x32xf32>, vector<2x32xf32>, vector<2x32xf32>, vector<2x32xf32>, vector<2x32xf32>, vector<2x32xf32>, vector<2x32xf32>, vector<2x32xf32>, vector<2x32xf32>, vector<2x32xf32>, vector<2x32xf32>, vector<2x32xf32>, vector<2x32xf32>, vector<2x32xf32>, vector<2x32xf32>, vector<2x32xf32>, vector<2x32xf32>, vector<2x32xf32>, vector<2x32xf32>, vector<2x32xf32>, vector<2x32xf32>, vector<2x32xf32>, vector<2x32xf32>, vector<2x32xf32>, vector<2x32xf32>, vector<2x32xf32>, vector<2x32xf32>, vector<2x32xf32>, vector<2x32xf32> -> vector<2x1024xf32>
    %81 = arith.mulf %79, %80 : vector<2x1024xf32>
    %cst_40 = arith.constant dense<0.000000e+00> : vector<2x32xf32>
    %82 = tpu.matmul %81, %4, %cst_40 {dimension_numbers = #tpu.dot_dimension_numbers<[1], [0], [0], [1], [0, 0, 1, 1], [], []>} : vector<2x1024xf32>, vector<1024x32xf32>, vector<2x32xf32> -> vector<2x32xf32>
    %83 = arith.index_cast %c3_i32 : i32 to index
    %c0_41 = arith.constant 0 : index
    %c0_42 = arith.constant 0 : index
    %84 = vector.load %arg1[%83, %c0_41, %c0_42] : memref<8x2x32xf32, #tpu.memory_space<vmem>>, vector<1x2x32xf32>
    %85 = vector.shape_cast %84 : vector<1x2x32xf32> to vector<2x32xf32>
    %86 = arith.addf %82, %85 : vector<2x32xf32>
    %cst_43 = arith.constant 8.000000e-01 : f32
    %87 = vector.broadcast %cst_43 : f32 to vector<2x32xf32>
    %88 = arith.mulf %87, %73 : vector<2x32xf32>
    %cst_44 = arith.constant 2.000000e-01 : f32
    %89 = vector.broadcast %cst_44 : f32 to vector<2x32xf32>
    %90 = arith.mulf %89, %86 : vector<2x32xf32>
    %91 = arith.addf %88, %90 : vector<2x32xf32>
    %92 = arith.index_cast %c3_i32 : i32 to index
    %c0_45 = arith.constant 0 : index
    %c0_46 = arith.constant 0 : index
    %93 = vector.load %arg2[%92, %c0_45, %c0_46] : memref<8x2x32xf32, #tpu.memory_space<vmem>>, vector<1x2x32xf32>
    %94 = vector.shape_cast %93 : vector<1x2x32xf32> to vector<2x32xf32>
    %cst_47 = arith.constant 5.000000e-02 : f32
    %95 = vector.broadcast %cst_47 : f32 to vector<2x32xf32>
    %96 = arith.mulf %95, %94 : vector<2x32xf32>
    %97 = arith.addf %91, %96 : vector<2x32xf32>
    %98 = arith.index_cast %c3_i32 : i32 to index
    %c0_48 = arith.constant 0 : index
    %c0_49 = arith.constant 0 : index
    %99 = vector.load %arg6[%98, %c0_48, %c0_49] : memref<8x2x32xf32, #tpu.memory_space<vmem>>, vector<1x2x32xf32>
    %100 = vector.shape_cast %99 : vector<1x2x32xf32> to vector<2x32xf32>
    %101 = vector.shape_cast %97 : vector<2x32xf32> to vector<1x2x32xf32>
    tpu.vector_store %arg6[%98, %c0_48, %c0_49], %101 {strides = array<i32>} : memref<8x2x32xf32, #tpu.memory_space<vmem>>, vector<1x2x32xf32>,
    %c4_i32 = arith.constant 4 : i32
    %102 = math.tanh %97 : vector<2x32xf32>
    %cst_50 = arith.constant dense<0.000000e+00> : vector<2x1024xf32>
    %103 = tpu.matmul %102, %3, %cst_50 {dimension_numbers = #tpu.dot_dimension_numbers<[1], [0], [0], [1], [0, 0, 1, 1], [], []>} : vector<2x32xf32>, vector<32x1024xf32>, vector<2x1024xf32> -> vector<2x1024xf32>
    %104 = tpu.concatenate %102, %102, %102, %102, %102, %102, %102, %102, %102, %102, %102, %102, %102, %102, %102, %102, %102, %102, %102, %102, %102, %102, %102, %102, %102, %102, %102, %102, %102, %102, %102, %102 in 1 : vector<2x32xf32>, vector<2x32xf32>, vector<2x32xf32>, vector<2x32xf32>, vector<2x32xf32>, vector<2x32xf32>, vector<2x32xf32>, vector<2x32xf32>, vector<2x32xf32>, vector<2x32xf32>, vector<2x32xf32>, vector<2x32xf32>, vector<2x32xf32>, vector<2x32xf32>, vector<2x32xf32>, vector<2x32xf32>, vector<2x32xf32>, vector<2x32xf32>, vector<2x32xf32>, vector<2x32xf32>, vector<2x32xf32>, vector<2x32xf32>, vector<2x32xf32>, vector<2x32xf32>, vector<2x32xf32>, vector<2x32xf32>, vector<2x32xf32>, vector<2x32xf32>, vector<2x32xf32>, vector<2x32xf32>, vector<2x32xf32>, vector<2x32xf32> -> vector<2x1024xf32>
    %105 = arith.mulf %103, %104 : vector<2x1024xf32>
    %cst_51 = arith.constant dense<0.000000e+00> : vector<2x32xf32>
    %106 = tpu.matmul %105, %4, %cst_51 {dimension_numbers = #tpu.dot_dimension_numbers<[1], [0], [0], [1], [0, 0, 1, 1], [], []>} : vector<2x1024xf32>, vector<1024x32xf32>, vector<2x32xf32> -> vector<2x32xf32>
    %107 = arith.index_cast %c4_i32 : i32 to index
    %c0_52 = arith.constant 0 : index
    %c0_53 = arith.constant 0 : index
    %108 = vector.load %arg1[%107, %c0_52, %c0_53] : memref<8x2x32xf32, #tpu.memory_space<vmem>>, vector<1x2x32xf32>
    %109 = vector.shape_cast %108 : vector<1x2x32xf32> to vector<2x32xf32>
    %110 = arith.addf %106, %109 : vector<2x32xf32>
    %cst_54 = arith.constant 8.000000e-01 : f32
    %111 = vector.broadcast %cst_54 : f32 to vector<2x32xf32>
    %112 = arith.mulf %111, %97 : vector<2x32xf32>
    %cst_55 = arith.constant 2.000000e-01 : f32
    %113 = vector.broadcast %cst_55 : f32 to vector<2x32xf32>
    %114 = arith.mulf %113, %110 : vector<2x32xf32>
    %115 = arith.addf %112, %114 : vector<2x32xf32>
    %116 = arith.index_cast %c4_i32 : i32 to index
    %c0_56 = arith.constant 0 : index
    %c0_57 = arith.constant 0 : index
    %117 = vector.load %arg2[%116, %c0_56, %c0_57] : memref<8x2x32xf32, #tpu.memory_space<vmem>>, vector<1x2x32xf32>
    %118 = vector.shape_cast %117 : vector<1x2x32xf32> to vector<2x32xf32>
    %cst_58 = arith.constant 5.000000e-02 : f32
    %119 = vector.broadcast %cst_58 : f32 to vector<2x32xf32>
    %120 = arith.mulf %119, %118 : vector<2x32xf32>
    %121 = arith.addf %115, %120 : vector<2x32xf32>
    %122 = arith.index_cast %c4_i32 : i32 to index
    %c0_59 = arith.constant 0 : index
    %c0_60 = arith.constant 0 : index
    %123 = vector.load %arg6[%122, %c0_59, %c0_60] : memref<8x2x32xf32, #tpu.memory_space<vmem>>, vector<1x2x32xf32>
    %124 = vector.shape_cast %123 : vector<1x2x32xf32> to vector<2x32xf32>
    %125 = vector.shape_cast %121 : vector<2x32xf32> to vector<1x2x32xf32>
    tpu.vector_store %arg6[%122, %c0_59, %c0_60], %125 {strides = array<i32>} : memref<8x2x32xf32, #tpu.memory_space<vmem>>, vector<1x2x32xf32>,
    %c5_i32 = arith.constant 5 : i32
    %126 = math.tanh %121 : vector<2x32xf32>
    %cst_61 = arith.constant dense<0.000000e+00> : vector<2x1024xf32>
    %127 = tpu.matmul %126, %3, %cst_61 {dimension_numbers = #tpu.dot_dimension_numbers<[1], [0], [0], [1], [0, 0, 1, 1], [], []>} : vector<2x32xf32>, vector<32x1024xf32>, vector<2x1024xf32> -> vector<2x1024xf32>
    %128 = tpu.concatenate %126, %126, %126, %126, %126, %126, %126, %126, %126, %126, %126, %126, %126, %126, %126, %126, %126, %126, %126, %126, %126, %126, %126, %126, %126, %126, %126, %126, %126, %126, %126, %126 in 1 : vector<2x32xf32>, vector<2x32xf32>, vector<2x32xf32>, vector<2x32xf32>, vector<2x32xf32>, vector<2x32xf32>, vector<2x32xf32>, vector<2x32xf32>, vector<2x32xf32>, vector<2x32xf32>, vector<2x32xf32>, vector<2x32xf32>, vector<2x32xf32>, vector<2x32xf32>, vector<2x32xf32>, vector<2x32xf32>, vector<2x32xf32>, vector<2x32xf32>, vector<2x32xf32>, vector<2x32xf32>, vector<2x32xf32>, vector<2x32xf32>, vector<2x32xf32>, vector<2x32xf32>, vector<2x32xf32>, vector<2x32xf32>, vector<2x32xf32>, vector<2x32xf32>, vector<2x32xf32>, vector<2x32xf32>, vector<2x32xf32>, vector<2x32xf32> -> vector<2x1024xf32>
    %129 = arith.mulf %127, %128 : vector<2x1024xf32>
    %cst_62 = arith.constant dense<0.000000e+00> : vector<2x32xf32>
    %130 = tpu.matmul %129, %4, %cst_62 {dimension_numbers = #tpu.dot_dimension_numbers<[1], [0], [0], [1], [0, 0, 1, 1], [], []>} : vector<2x1024xf32>, vector<1024x32xf32>, vector<2x32xf32> -> vector<2x32xf32>
    %131 = arith.index_cast %c5_i32 : i32 to index
    %c0_63 = arith.constant 0 : index
    %c0_64 = arith.constant 0 : index
    %132 = vector.load %arg1[%131, %c0_63, %c0_64] : memref<8x2x32xf32, #tpu.memory_space<vmem>>, vector<1x2x32xf32>
    %133 = vector.shape_cast %132 : vector<1x2x32xf32> to vector<2x32xf32>
    %134 = arith.addf %130, %133 : vector<2x32xf32>
    %cst_65 = arith.constant 8.000000e-01 : f32
    %135 = vector.broadcast %cst_65 : f32 to vector<2x32xf32>
    %136 = arith.mulf %135, %121 : vector<2x32xf32>
    %cst_66 = arith.constant 2.000000e-01 : f32
    %137 = vector.broadcast %cst_66 : f32 to vector<2x32xf32>
    %138 = arith.mulf %137, %134 : vector<2x32xf32>
    %139 = arith.addf %136, %138 : vector<2x32xf32>
    %140 = arith.index_cast %c5_i32 : i32 to index
    %c0_67 = arith.constant 0 : index
    %c0_68 = arith.constant 0 : index
    %141 = vector.load %arg2[%140, %c0_67, %c0_68] : memref<8x2x32xf32, #tpu.memory_space<vmem>>, vector<1x2x32xf32>
    %142 = vector.shape_cast %141 : vector<1x2x32xf32> to vector<2x32xf32>
    %cst_69 = arith.constant 5.000000e-02 : f32
    %143 = vector.broadcast %cst_69 : f32 to vector<2x32xf32>
    %144 = arith.mulf %143, %142 : vector<2x32xf32>
    %145 = arith.addf %139, %144 : vector<2x32xf32>
    %146 = arith.index_cast %c5_i32 : i32 to index
    %c0_70 = arith.constant 0 : index
    %c0_71 = arith.constant 0 : index
    %147 = vector.load %arg6[%146, %c0_70, %c0_71] : memref<8x2x32xf32, #tpu.memory_space<vmem>>, vector<1x2x32xf32>
    %148 = vector.shape_cast %147 : vector<1x2x32xf32> to vector<2x32xf32>
    %149 = vector.shape_cast %145 : vector<2x32xf32> to vector<1x2x32xf32>
    tpu.vector_store %arg6[%146, %c0_70, %c0_71], %149 {strides = array<i32>} : memref<8x2x32xf32, #tpu.memory_space<vmem>>, vector<1x2x32xf32>,
    %c6_i32 = arith.constant 6 : i32
    %150 = math.tanh %145 : vector<2x32xf32>
    %cst_72 = arith.constant dense<0.000000e+00> : vector<2x1024xf32>
    %151 = tpu.matmul %150, %3, %cst_72 {dimension_numbers = #tpu.dot_dimension_numbers<[1], [0], [0], [1], [0, 0, 1, 1], [], []>} : vector<2x32xf32>, vector<32x1024xf32>, vector<2x1024xf32> -> vector<2x1024xf32>
    %152 = tpu.concatenate %150, %150, %150, %150, %150, %150, %150, %150, %150, %150, %150, %150, %150, %150, %150, %150, %150, %150, %150, %150, %150, %150, %150, %150, %150, %150, %150, %150, %150, %150, %150, %150 in 1 : vector<2x32xf32>, vector<2x32xf32>, vector<2x32xf32>, vector<2x32xf32>, vector<2x32xf32>, vector<2x32xf32>, vector<2x32xf32>, vector<2x32xf32>, vector<2x32xf32>, vector<2x32xf32>, vector<2x32xf32>, vector<2x32xf32>, vector<2x32xf32>, vector<2x32xf32>, vector<2x32xf32>, vector<2x32xf32>, vector<2x32xf32>, vector<2x32xf32>, vector<2x32xf32>, vector<2x32xf32>, vector<2x32xf32>, vector<2x32xf32>, vector<2x32xf32>, vector<2x32xf32>, vector<2x32xf32>, vector<2x32xf32>, vector<2x32xf32>, vector<2x32xf32>, vector<2x32xf32>, vector<2x32xf32>, vector<2x32xf32>, vector<2x32xf32> -> vector<2x1024xf32>
    %153 = arith.mulf %151, %152 : vector<2x1024xf32>
    %cst_73 = arith.constant dense<0.000000e+00> : vector<2x32xf32>
    %154 = tpu.matmul %153, %4, %cst_73 {dimension_numbers = #tpu.dot_dimension_numbers<[1], [0], [0], [1], [0, 0, 1, 1], [], []>} : vector<2x1024xf32>, vector<1024x32xf32>, vector<2x32xf32> -> vector<2x32xf32>
    %155 = arith.index_cast %c6_i32 : i32 to index
    %c0_74 = arith.constant 0 : index
    %c0_75 = arith.constant 0 : index
    %156 = vector.load %arg1[%155, %c0_74, %c0_75] : memref<8x2x32xf32, #tpu.memory_space<vmem>>, vector<1x2x32xf32>
    %157 = vector.shape_cast %156 : vector<1x2x32xf32> to vector<2x32xf32>
    %158 = arith.addf %154, %157 : vector<2x32xf32>
    %cst_76 = arith.constant 8.000000e-01 : f32
    %159 = vector.broadcast %cst_76 : f32 to vector<2x32xf32>
    %160 = arith.mulf %159, %145 : vector<2x32xf32>
    %cst_77 = arith.constant 2.000000e-01 : f32
    %161 = vector.broadcast %cst_77 : f32 to vector<2x32xf32>
    %162 = arith.mulf %161, %158 : vector<2x32xf32>
    %163 = arith.addf %160, %162 : vector<2x32xf32>
    %164 = arith.index_cast %c6_i32 : i32 to index
    %c0_78 = arith.constant 0 : index
    %c0_79 = arith.constant 0 : index
    %165 = vector.load %arg2[%164, %c0_78, %c0_79] : memref<8x2x32xf32, #tpu.memory_space<vmem>>, vector<1x2x32xf32>
    %166 = vector.shape_cast %165 : vector<1x2x32xf32> to vector<2x32xf32>
    %cst_80 = arith.constant 5.000000e-02 : f32
    %167 = vector.broadcast %cst_80 : f32 to vector<2x32xf32>
    %168 = arith.mulf %167, %166 : vector<2x32xf32>
    %169 = arith.addf %163, %168 : vector<2x32xf32>
    %170 = arith.index_cast %c6_i32 : i32 to index
    %c0_81 = arith.constant 0 : index
    %c0_82 = arith.constant 0 : index
    %171 = vector.load %arg6[%170, %c0_81, %c0_82] : memref<8x2x32xf32, #tpu.memory_space<vmem>>, vector<1x2x32xf32>
    %172 = vector.shape_cast %171 : vector<1x2x32xf32> to vector<2x32xf32>
    %173 = vector.shape_cast %169 : vector<2x32xf32> to vector<1x2x32xf32>
    tpu.vector_store %arg6[%170, %c0_81, %c0_82], %173 {strides = array<i32>} : memref<8x2x32xf32, #tpu.memory_space<vmem>>, vector<1x2x32xf32>,
    %c7_i32 = arith.constant 7 : i32
    %174 = math.tanh %169 : vector<2x32xf32>
    %cst_83 = arith.constant dense<0.000000e+00> : vector<2x1024xf32>
    %175 = tpu.matmul %174, %3, %cst_83 {dimension_numbers = #tpu.dot_dimension_numbers<[1], [0], [0], [1], [0, 0, 1, 1], [], []>} : vector<2x32xf32>, vector<32x1024xf32>, vector<2x1024xf32> -> vector<2x1024xf32>
    %176 = tpu.concatenate %174, %174, %174, %174, %174, %174, %174, %174, %174, %174, %174, %174, %174, %174, %174, %174, %174, %174, %174, %174, %174, %174, %174, %174, %174, %174, %174, %174, %174, %174, %174, %174 in 1 : vector<2x32xf32>, vector<2x32xf32>, vector<2x32xf32>, vector<2x32xf32>, vector<2x32xf32>, vector<2x32xf32>, vector<2x32xf32>, vector<2x32xf32>, vector<2x32xf32>, vector<2x32xf32>, vector<2x32xf32>, vector<2x32xf32>, vector<2x32xf32>, vector<2x32xf32>, vector<2x32xf32>, vector<2x32xf32>, vector<2x32xf32>, vector<2x32xf32>, vector<2x32xf32>, vector<2x32xf32>, vector<2x32xf32>, vector<2x32xf32>, vector<2x32xf32>, vector<2x32xf32>, vector<2x32xf32>, vector<2x32xf32>, vector<2x32xf32>, vector<2x32xf32>, vector<2x32xf32>, vector<2x32xf32>, vector<2x32xf32>, vector<2x32xf32> -> vector<2x1024xf32>
    %177 = arith.mulf %175, %176 : vector<2x1024xf32>
    %cst_84 = arith.constant dense<0.000000e+00> : vector<2x32xf32>
    %178 = tpu.matmul %177, %4, %cst_84 {dimension_numbers = #tpu.dot_dimension_numbers<[1], [0], [0], [1], [0, 0, 1, 1], [], []>} : vector<2x1024xf32>, vector<1024x32xf32>, vector<2x32xf32> -> vector<2x32xf32>
    %179 = arith.index_cast %c7_i32 : i32 to index
    %c0_85 = arith.constant 0 : index
    %c0_86 = arith.constant 0 : index
    %180 = vector.load %arg1[%179, %c0_85, %c0_86] : memref<8x2x32xf32, #tpu.memory_space<vmem>>, vector<1x2x32xf32>
    %181 = vector.shape_cast %180 : vector<1x2x32xf32> to vector<2x32xf32>
    %182 = arith.addf %178, %181 : vector<2x32xf32>
    %cst_87 = arith.constant 8.000000e-01 : f32
    %183 = vector.broadcast %cst_87 : f32 to vector<2x32xf32>
    %184 = arith.mulf %183, %169 : vector<2x32xf32>
    %cst_88 = arith.constant 2.000000e-01 : f32
    %185 = vector.broadcast %cst_88 : f32 to vector<2x32xf32>
    %186 = arith.mulf %185, %182 : vector<2x32xf32>
    %187 = arith.addf %184, %186 : vector<2x32xf32>
    %188 = arith.index_cast %c7_i32 : i32 to index
    %c0_89 = arith.constant 0 : index
    %c0_90 = arith.constant 0 : index
    %189 = vector.load %arg2[%188, %c0_89, %c0_90] : memref<8x2x32xf32, #tpu.memory_space<vmem>>, vector<1x2x32xf32>
    %190 = vector.shape_cast %189 : vector<1x2x32xf32> to vector<2x32xf32>
    %cst_91 = arith.constant 5.000000e-02 : f32
    %191 = vector.broadcast %cst_91 : f32 to vector<2x32xf32>
    %192 = arith.mulf %191, %190 : vector<2x32xf32>
    %193 = arith.addf %187, %192 : vector<2x32xf32>
    %194 = arith.index_cast %c7_i32 : i32 to index
    %c0_92 = arith.constant 0 : index
    %c0_93 = arith.constant 0 : index
    %195 = vector.load %arg6[%194, %c0_92, %c0_93] : memref<8x2x32xf32, #tpu.memory_space<vmem>>, vector<1x2x32xf32>
    %196 = vector.shape_cast %195 : vector<1x2x32xf32> to vector<2x32xf32>
    %197 = vector.shape_cast %193 : vector<2x32xf32> to vector<1x2x32xf32>
    tpu.vector_store %arg6[%194, %c0_92, %c0_93], %197 {strides = array<i32>} : memref<8x2x32xf32, #tpu.memory_space<vmem>>, vector<1x2x32xf32>,
    %c8_i32 = arith.constant 8 : i32
    %c0_94 = arith.constant 0 : index
    %c0_95 = arith.constant 0 : index
    %198 = vector.load %arg7[%c0_94, %c0_95] : memref<2x32xf32, #tpu.memory_space<vmem>>, vector<2x32xf32>
    tpu.vector_store %arg7[%c0_94, %c0_95], %193 {strides = array<i32>} : memref<2x32xf32, #tpu.memory_space<vmem>>, vector<2x32xf32>,
    return
  }
  func.func @transform_0(%arg0: i32) -> (i32, i32, i32) {
    %c0_i32 = arith.constant 0 : i32
    %c0_i32_0 = arith.constant 0 : i32
    %c0_i32_1 = arith.constant 0 : i32
    return %arg0, %c0_i32, %c0_i32_0 : i32, i32, i32
  }
  func.func @transform_1(%arg0: i32) -> (i32, i32, i32) {
    %c0_i32 = arith.constant 0 : i32
    %c0_i32_0 = arith.constant 0 : i32
    %c0_i32_1 = arith.constant 0 : i32
    return %arg0, %c0_i32, %c0_i32_0 : i32, i32, i32
  }
  func.func @transform_2(%arg0: i32) -> (i32, i32) {
    %c0_i32 = arith.constant 0 : i32
    %c0_i32_0 = arith.constant 0 : i32
    %c0_i32_1 = arith.constant 0 : i32
    return %c0_i32, %c0_i32_0 : i32, i32
  }
  func.func @transform_3(%arg0: i32) -> (i32, i32) {
    %c0_i32 = arith.constant 0 : i32
    %c0_i32_0 = arith.constant 0 : i32
    %c0_i32_1 = arith.constant 0 : i32
    return %c0_i32, %c0_i32_0 : i32, i32
  }
  func.func @transform_4(%arg0: i32) -> (i32, i32) {
    %c0_i32 = arith.constant 0 : i32
    %c0_i32_0 = arith.constant 0 : i32
    %c0_i32_1 = arith.constant 0 : i32
    return %c0_i32, %c0_i32_0 : i32, i32
  }
  func.func @transform_5(%arg0: i32) -> (i32, i32, i32) {
    %c0_i32 = arith.constant 0 : i32
    %c0_i32_0 = arith.constant 0 : i32
    %c0_i32_1 = arith.constant 0 : i32
    return %arg0, %c0_i32, %c0_i32_0 : i32, i32, i32
  }
}

</mosaic_0001>

<llo_original>
// kernel: tpu_custom_call.1
$region0: #{tpu_custom_call.1}
  #allocation0 [shape = 'u32[]', space=smem, size = 0x4, offset = 0x4, fixed_abs, tag = 'smem constant byte address 0x4 - core index']
  #allocation1 [shape = 'u32[144,128]{1,0:T(1,128)}', space=vmem, size = 0x12000, scoped, tag = 'internal scratch']
  #allocation2 [shape = 'f32[2,32]{1,0:T(2,128)}', space=vmem, size = 0x400, scoped, tag = 'scratch operand']
  %s0 = inlined_call_operand.vmem [shape: f32[8,2,32], index: 0, kind: input, shape index: {}]
  %s1 = inlined_call_operand.vmem [shape: f32[8,2,32], index: 1, kind: input, shape index: {}]
  %s2 = inlined_call_operand.vmem [shape: f32[2,32], index: 2, kind: input, shape index: {}]
  %s3 = inlined_call_operand.vmem [shape: f32[32,1024], index: 3, kind: input, shape index: {}]
  %s4 = inlined_call_operand.vmem [shape: f32[1024,32], index: 4, kind: input, shape index: {}]
  %s5 = inlined_call_operand.hbm [shape: f32[8,2,32], index: 5, kind: output, shape index: {}]
  %s6 = sld [smem:[#allocation0]]
  $region34: #{tpu_custom_call.1} parent=0
    _
  %s8 = ssub.s32 1, %s6
  %s9 = scalar_select 0, %s8, %s6
  $region1: #{tpu_custom_call.1} parent=0
    #allocation3 [shape = 'u8[8192]{0}', space=vmem, size = 0x2000, scoped, tag = 'output window, operand 0, single buffered']
    #allocation4 [shape = 's32[1]{0}', space=sflag, size = 0x4, scoped, tag = 'scoped memory for tpu_custom_call.1']
    %10 = vsyncpa [#allocation4], 0
    // Predicated region
    $region2: #{tpu_custom_call.1} parent=1 // pred_check
      _
    $region3: #{tpu_custom_call.1} parent=1 // pred_check_branch
      %12 = sbr.rel (0) target = $region5
    $region4: #{tpu_custom_call.1} parent=1 // pred_region
      _
    $region5: #{tpu_custom_call.1} parent=1 // pred_fallthru
      _
    // Predicated region
    $region6: #{tpu_custom_call.1} parent=1 // pred_check
      _
    $region7: #{tpu_custom_call.1} parent=1 // pred_check_branch
      %14 = sbr.rel (0) target = $region9
    $region8: #{tpu_custom_call.1} parent=1 // pred_region
      _
    $region9: #{tpu_custom_call.1} parent=1 // pred_fallthru
      _
    // Predicated region
    $region10: #{tpu_custom_call.1} parent=1 // pred_check
      _
    $region11: #{tpu_custom_call.1} parent=1 // pred_check_branch
      %16 = sbr.rel (0) target = $region13
    $region12: #{tpu_custom_call.1} parent=1 // pred_region
      _
    $region13: #{tpu_custom_call.1} parent=1 // pred_fallthru
      _
    // Predicated region
    $region14: #{tpu_custom_call.1} parent=1 // pred_check
      _
    $region15: #{tpu_custom_call.1} parent=1 // pred_check_branch
      %18 = sbr.rel (0) target = $region17
    $region16: #{tpu_custom_call.1} parent=1 // pred_region
      _
    $region17: #{tpu_custom_call.1} parent=1 // pred_fallthru
      _
    // Predicated region
    $region18: #{tpu_custom_call.1} parent=1 // pred_check
      _
    $region19: #{tpu_custom_call.1} parent=1 // pred_check_branch
      %20 = sbr.rel (0) target = $region21
    $region20: #{tpu_custom_call.1} parent=1 // pred_region
      _
    $region21: #{tpu_custom_call.1} parent=1 // pred_fallthru
      _
    %p21 = scmp.eq.s32.totalorder 0, 0
    // Predicated region
    $region22: #{tpu_custom_call.1} parent=1 // pred_check
      %p22 = pneg %p21
    $region23: #{tpu_custom_call.1} parent=1 // pred_check_branch
      %24 = sbr.rel (%p22) target = $region25
    $region24: #{tpu_custom_call.1} parent=1 // pred_region
      %v25 = vld [vmem:[%s2] sm:$0x3]
      %vm26 = vcmask 254976
      %27 = vst.msk [vmem:[#allocation2] sm:$0x3] %vm26, %v25
    $region25: #{tpu_custom_call.1} parent=1 // pred_fallthru
      _
    %v28 = vld [vmem:[%s3] sm:$0xff]
    %v29 = vld [vmem:[%s3 + $0x8] sm:$0xff]
    %v30 = vld [vmem:[%s3 + $0x10] sm:$0xff]
    %v31 = vld [vmem:[%s3 + $0x18] sm:$0xff]
    %v32 = vld [vmem:[%s3 + $0x20] sm:$0xff]
    %v33 = vld [vmem:[%s3 + $0x28] sm:$0xff]
    %v34 = vld [vmem:[%s3 + $0x30] sm:$0xff]
    %v35 = vld [vmem:[%s3 + $0x38] sm:$0xff]
    %v36 = vld [vmem:[%s3 + $0x40] sm:$0xff]
    %v37 = vld [vmem:[%s3 + $0x48] sm:$0xff]
    %v38 = vld [vmem:[%s3 + $0x50] sm:$0xff]
    %v39 = vld [vmem:[%s3 + $0x58] sm:$0xff]
    %v40 = vld [vmem:[%s3 + $0x60] sm:$0xff]
    %v41 = vld [vmem:[%s3 + $0x68] sm:$0xff]
    %v42 = vld [vmem:[%s3 + $0x70] sm:$0xff]
    %v43 = vld [vmem:[%s3 + $0x78] sm:$0xff]
    %v44 = vld [vmem:[%s3 + $0x80] sm:$0xff]
    %v45 = vld [vmem:[%s3 + $0x88] sm:$0xff]
    %v46 = vld [vmem:[%s3 + $0x90] sm:$0xff]
    %v47 = vld [vmem:[%s3 + $0x98] sm:$0xff]
    %v48 = vld [vmem:[%s3 + $0xa0] sm:$0xff]
    %v49 = vld [vmem:[%s3 + $0xa8] sm:$0xff]
    %v50 = vld [vmem:[%s3 + $0xb0] sm:$0xff]
    %v51 = vld [vmem:[%s3 + $0xb8] sm:$0xff]
    %v52 = vld [vmem:[%s3 + $0xc0] sm:$0xff]
    %v53 = vld [vmem:[%s3 + $0xc8] sm:$0xff]
    %v54 = vld [vmem:[%s3 + $0xd0] sm:$0xff]
    %v55 = vld [vmem:[%s3 + $0xd8] sm:$0xff]
    %v56 = vld [vmem:[%s3 + $0xe0] sm:$0xff]
    %v57 = vld [vmem:[%s3 + $0xe8] sm:$0xff]
    %v58 = vld [vmem:[%s3 + $0xf0] sm:$0xff]
    %v59 = vld [vmem:[%s3 + $0xf8] sm:$0xff]
    %v60 = vld [vmem:[%s4] sm:$0xff]
    %v61 = vld [vmem:[%s4 + $0x8] sm:$0xff]
    %v62 = vld [vmem:[%s4 + $0x10] sm:$0xff]
    %v63 = vld [vmem:[%s4 + $0x18] sm:$0xff]
    %v64 = vld [vmem:[%s4 + $0x20] sm:$0xff]
    %v65 = vld [vmem:[%s4 + $0x28] sm:$0xff]
    %v66 = vld [vmem:[%s4 + $0x30] sm:$0xff]
    %v67 = vld [vmem:[%s4 + $0x38] sm:$0xff]
    %v68 = vld [vmem:[%s4 + $0x40] sm:$0xff]
    %v69 = vld [vmem:[%s4 + $0x48] sm:$0xff]
    %v70 = vld [vmem:[%s4 + $0x50] sm:$0xff]
    %v71 = vld [vmem:[%s4 + $0x58] sm:$0xff]
    %v72 = vld [vmem:[%s4 + $0x60] sm:$0xff]
    %v73 = vld [vmem:[%s4 + $0x68] sm:$0xff]
    %v74 = vld [vmem:[%s4 + $0x70] sm:$0xff]
    %v75 = vld [vmem:[%s4 + $0x78] sm:$0xff]
    %v76 = vld [vmem:[%s4 + $0x80] sm:$0xff]
    %v77 = vld [vmem:[%s4 + $0x88] sm:$0xff]
    %v78 = vld [vmem:[%s4 + $0x90] sm:$0xff]
    %v79 = vld [vmem:[%s4 + $0x98] sm:$0xff]
    %v80 = vld [vmem:[%s4 + $0xa0] sm:$0xff]
    %v81 = vld [vmem:[%s4 + $0xa8] sm:$0xff]
    %v82 = vld [vmem:[%s4 + $0xb0] sm:$0xff]
    %v83 = vld [vmem:[%s4 + $0xb8] sm:$0xff]
    %v84 = vld [vmem:[%s4 + $0xc0] sm:$0xff]
    %v85 = vld [vmem:[%s4 + $0xc8] sm:$0xff]
    %v86 = vld [vmem:[%s4 + $0xd0] sm:$0xff]
    %v87 = vld [vmem:[%s4 + $0xd8] sm:$0xff]
    %v88 = vld [vmem:[%s4 + $0xe0] sm:$0xff]
    %v89 = vld [vmem:[%s4 + $0xe8] sm:$0xff]
    %v90 = vld [vmem:[%s4 + $0xf0] sm:$0xff]
    %v91 = vld [vmem:[%s4 + $0xf8] sm:$0xff]
    %v92 = vld [vmem:[%s4 + $0x100] sm:$0xff]
    %v93 = vld [vmem:[%s4 + $0x108] sm:$0xff]
    %v94 = vld [vmem:[%s4 + $0x110] sm:$0xff]
    %v95 = vld [vmem:[%s4 + $0x118] sm:$0xff]
    %v96 = vld [vmem:[%s4 + $0x120] sm:$0xff]
    %v97 = vld [vmem:[%s4 + $0x128] sm:$0xff]
    %v98 = vld [vmem:[%s4 + $0x130] sm:$0xff]
    %v99 = vld [vmem:[%s4 + $0x138] sm:$0xff]
    %v100 = vld [vmem:[%s4 + $0x140] sm:$0xff]
    %v101 = vld [vmem:[%s4 + $0x148] sm:$0xff]
    %v102 = vld [vmem:[%s4 + $0x150] sm:$0xff]
    %v103 = vld [vmem:[%s4 + $0x158] sm:$0xff]
    %v104 = vld [vmem:[%s4 + $0x160] sm:$0xff]
    %v105 = vld [vmem:[%s4 + $0x168] sm:$0xff]
    %v106 = vld [vmem:[%s4 + $0x170] sm:$0xff]
    %v107 = vld [vmem:[%s4 + $0x178] sm:$0xff]
    %v108 = vld [vmem:[%s4 + $0x180] sm:$0xff]
    %v109 = vld [vmem:[%s4 + $0x188] sm:$0xff]
    %v110 = vld [vmem:[%s4 + $0x190] sm:$0xff]
    %v111 = vld [vmem:[%s4 + $0x198] sm:$0xff]
    %v112 = vld [vmem:[%s4 + $0x1a0] sm:$0xff]
    %v113 = vld [vmem:[%s4 + $0x1a8] sm:$0xff]
    %v114 = vld [vmem:[%s4 + $0x1b0] sm:$0xff]
    %v115 = vld [vmem:[%s4 + $0x1b8] sm:$0xff]
    %v116 = vld [vmem:[%s4 + $0x1c0] sm:$0xff]
    %v117 = vld [vmem:[%s4 + $0x1c8] sm:$0xff]
    %v118 = vld [vmem:[%s4 + $0x1d0] sm:$0xff]
    %v119 = vld [vmem:[%s4 + $0x1d8] sm:$0xff]
    %v120 = vld [vmem:[%s4 + $0x1e0] sm:$0xff]
    %v121 = vld [vmem:[%s4 + $0x1e8] sm:$0xff]
    %v122 = vld [vmem:[%s4 + $0x1f0] sm:$0xff]
    %v123 = vld [vmem:[%s4 + $0x1f8] sm:$0xff]
    %v124 = vld [vmem:[%s4 + $0x200] sm:$0xff]
    %v125 = vld [vmem:[%s4 + $0x208] sm:$0xff]
    %v126 = vld [vmem:[%s4 + $0x210] sm:$0xff]
    %v127 = vld [vmem:[%s4 + $0x218] sm:$0xff]
    %v128 = vld [vmem:[%s4 + $0x220] sm:$0xff]
    %v129 = vld [vmem:[%s4 + $0x228] sm:$0xff]
    %v130 = vld [vmem:[%s4 + $0x230] sm:$0xff]
    %v131 = vld [vmem:[%s4 + $0x238] sm:$0xff]
    %v132 = vld [vmem:[%s4 + $0x240] sm:$0xff]
    %v133 = vld [vmem:[%s4 + $0x248] sm:$0xff]
    %v134 = vld [vmem:[%s4 + $0x250] sm:$0xff]
    %v135 = vld [vmem:[%s4 + $0x258] sm:$0xff]
    %v136 = vld [vmem:[%s4 + $0x260] sm:$0xff]
    %v137 = vld [vmem:[%s4 + $0x268] sm:$0xff]
    %v138 = vld [vmem:[%s4 + $0x270] sm:$0xff]
    %v139 = vld [vmem:[%s4 + $0x278] sm:$0xff]
    %v140 = vld [vmem:[%s4 + $0x280] sm:$0xff]
    %v141 = vld [vmem:[%s4 + $0x288] sm:$0xff]
    %v142 = vld [vmem:[%s4 + $0x290] sm:$0xff]
    %v143 = vld [vmem:[%s4 + $0x298] sm:$0xff]
    %v144 = vld [vmem:[%s4 + $0x2a0] sm:$0xff]
    %v145 = vld [vmem:[%s4 + $0x2a8] sm:$0xff]
    %v146 = vld [vmem:[%s4 + $0x2b0] sm:$0xff]
    %v147 = vld [vmem:[%s4 + $0x2b8] sm:$0xff]
    %v148 = vld [vmem:[%s4 + $0x2c0] sm:$0xff]
    %v149 = vld [vmem:[%s4 + $0x2c8] sm:$0xff]
    %v150 = vld [vmem:[%s4 + $0x2d0] sm:$0xff]
    %v151 = vld [vmem:[%s4 + $0x2d8] sm:$0xff]
    %v152 = vld [vmem:[%s4 + $0x2e0] sm:$0xff]
    %v153 = vld [vmem:[%s4 + $0x2e8] sm:$0xff]
    %v154 = vld [vmem:[%s4 + $0x2f0] sm:$0xff]
    %v155 = vld [vmem:[%s4 + $0x2f8] sm:$0xff]
    %v156 = vld [vmem:[%s4 + $0x300] sm:$0xff]
    %v157 = vld [vmem:[%s4 + $0x308] sm:$0xff]
    %v158 = vld [vmem:[%s4 + $0x310] sm:$0xff]
    %v159 = vld [vmem:[%s4 + $0x318] sm:$0xff]
    %v160 = vld [vmem:[%s4 + $0x320] sm:$0xff]
    %v161 = vld [vmem:[%s4 + $0x328] sm:$0xff]
    %v162 = vld [vmem:[%s4 + $0x330] sm:$0xff]
    %v163 = vld [vmem:[%s4 + $0x338] sm:$0xff]
    %v164 = vld [vmem:[%s4 + $0x340] sm:$0xff]
    %v165 = vld [vmem:[%s4 + $0x348] sm:$0xff]
    %v166 = vld [vmem:[%s4 + $0x350] sm:$0xff]
    %v167 = vld [vmem:[%s4 + $0x358] sm:$0xff]
    %v168 = vld [vmem:[%s4 + $0x360] sm:$0xff]
    %v169 = vld [vmem:[%s4 + $0x368] sm:$0xff]
    %v170 = vld [vmem:[%s4 + $0x370] sm:$0xff]
    %v171 = vld [vmem:[%s4 + $0x378] sm:$0xff]
    %v172 = vld [vmem:[%s4 + $0x380] sm:$0xff]
    %v173 = vld [vmem:[%s4 + $0x388] sm:$0xff]
    %v174 = vld [vmem:[%s4 + $0x390] sm:$0xff]
    %v175 = vld [vmem:[%s4 + $0x398] sm:$0xff]
    %v176 = vld [vmem:[%s4 + $0x3a0] sm:$0xff]
    %v177 = vld [vmem:[%s4 + $0x3a8] sm:$0xff]
    %v178 = vld [vmem:[%s4 + $0x3b0] sm:$0xff]
    %v179 = vld [vmem:[%s4 + $0x3b8] sm:$0xff]
    %v180 = vld [vmem:[%s4 + $0x3c0] sm:$0xff]
    %v181 = vld [vmem:[%s4 + $0x3c8] sm:$0xff]
    %v182 = vld [vmem:[%s4 + $0x3d0] sm:$0xff]
    %v183 = vld [vmem:[%s4 + $0x3d8] sm:$0xff]
    %v184 = vld [vmem:[%s4 + $0x3e0] sm:$0xff]
    %v185 = vld [vmem:[%s4 + $0x3e8] sm:$0xff]
    %v186 = vld [vmem:[%s4 + $0x3f0] sm:$0xff]
    %v187 = vld [vmem:[%s4 + $0x3f8] sm:$0xff]
    %v188 = vld [vmem:[#allocation2] sm:$0x3]
    %v189 = vtanh.pop %v188
    %vm190 = vcmask 261120
    %v192 = vsel %vm190, %v189, 0
    %194 = vmatprep.subr.mxu0 %v29
    %195 = vmatpush1.msra.mxu0 %v28
    %196 = vmatprep.subr.mxu0 %v37
    %197 = vmatpush1.msra.mxu0 %v36
    %198 = vmatprep.subr.mxu0 %v45
    %199 = vmatpush1.msra.mxu0 %v44
    %200 = vmatprep.subr.mxu0 %v53
    %201 = vmatpush1.msra.mxu0 %v52
    %202 = vmatprep.subr.mxu0 0.0
    %203 = vmatpush1.msra.mxu0 0.0
    %204 = vmatprep.subr.mxu0 0.0
    %205 = vmatpush1.msra.mxu0 0.0
    %206 = vmatprep.subr.mxu0 0.0
    %207 = vmatpush1.msra.mxu0 0.0
    %208 = vmatprep.subr.mxu0 0.0
    %209 = vmatpush1.msra.mxu0 0.0
    %210 = vmatprep.subr.mxu0 0.0
    %211 = vmatpush1.msra.mxu0 0.0
    %212 = vmatprep.subr.mxu0 0.0
    %213 = vmatpush1.msra.mxu0 0.0
    %214 = vmatprep.subr.mxu0 0.0
    %215 = vmatpush1.msra.mxu0 0.0
    %216 = vmatprep.subr.mxu0 0.0
    %217 = vmatpush1.msra.mxu0 0.0
    %218 = vmatprep.subr.mxu0 0.0
    %219 = vmatpush1.msra.mxu0 0.0
    %220 = vmatprep.subr.mxu0 0.0
    %221 = vmatpush1.msra.mxu0 0.0
    %222 = vmatprep.subr.mxu0 0.0
    %223 = vmatpush1.msra.mxu0 0.0
    %224 = vmatprep.subr.mxu0 0.0
    %225 = vmatpush1.msra.mxu0 0.0
    %226 = vmatprep.subr.mxu0 0.0
    %227 = vmatpush1.msra.mxu0 0.0
    %228 = vmatprep.subr.mxu0 0.0
    %229 = vmatpush1.msra.mxu0 0.0
    %230 = vmatprep.subr.mxu0 0.0
    %231 = vmatpush1.msra.mxu0 0.0
    %232 = vmatprep.subr.mxu0 0.0
    %233 = vmatpush1.msra.mxu0 0.0
    %234 = vmatprep.subr.mxu0 0.0
    %235 = vmatpush1.msra.mxu0 0.0
    %236 = vmatprep.subr.mxu0 0.0
    %237 = vmatpush1.msra.mxu0 0.0
    %238 = vmatprep.subr.mxu0 0.0
    %239 = vmatpush1.msra.mxu0 0.0
    %240 = vmatprep.subr.mxu0 0.0
    %241 = vmatpush1.msra.mxu0 0.0
    %242 = vmatprep.subr.mxu0 0.0
    %243 = vmatpush1.msra.mxu0 0.0
    %244 = vmatprep.subr.mxu0 0.0
    %245 = vmatpush1.msra.mxu0 0.0
    %246 = vmatprep.subr.mxu0 0.0
    %247 = vmatpush1.msra.mxu0 0.0
    %248 = vmatprep.subr.mxu0 0.0
    %249 = vmatpush1.msra.mxu0 0.0
    %250 = vmatprep.subr.mxu0 0.0
    %251 = vmatpush1.msra.mxu0 0.0
    %252 = vmatprep.subr.mxu0 0.0
    %253 = vmatpush1.msra.mxu0 0.0
    %254 = vmatprep.subr.mxu0 0.0
    %255 = vmatpush1.msra.mxu0 0.0
    %256 = vmatprep.subr.mxu0 0.0
    %257 = vmatpush1.msra.mxu0 0.0
    %258 = vmatprep.mubr.f32.mxu0 0.0
    %259 = vmatmul.mubr.f32.gmra.mrb[0].mxu0 %v192
    %v260 = vpop.f32.mrb[0].mxu0
    %v261 = vadd.f32 0.0, %v260
    %v262 = vpop.f32.mrb[0].mxu0
    %v263 = vadd.f32 0.0, %v262
    %264 = vdwg.mxu0
    %265 = vmatprep.subr.mxu0 %v31
    %266 = vmatpush1.msra.mxu0 %v30
    %267 = vmatprep.subr.mxu0 %v39
    %268 = vmatpush1.msra.mxu0 %v38
    %269 = vmatprep.subr.mxu0 %v47
    %270 = vmatpush1.msra.mxu0 %v46
    %271 = vmatprep.subr.mxu0 %v55
    %272 = vmatpush1.msra.mxu0 %v54
    %273 = vmatprep.subr.mxu0 0.0
    %274 = vmatpush1.msra.mxu0 0.0
    %275 = vmatprep.subr.mxu0 0.0
    %276 = vmatpush1.msra.mxu0 0.0
    %277 = vmatprep.subr.mxu0 0.0
    %278 = vmatpush1.msra.mxu0 0.0
    %279 = vmatprep.subr.mxu0 0.0
    %280 = vmatpush1.msra.mxu0 0.0
    %281 = vmatprep.subr.mxu0 0.0
    %282 = vmatpush1.msra.mxu0 0.0
    %283 = vmatprep.subr.mxu0 0.0
    %284 = vmatpush1.msra.mxu0 0.0
    %285 = vmatprep.subr.mxu0 0.0
    %286 = vmatpush1.msra.mxu0 0.0
    %287 = vmatprep.subr.mxu0 0.0
    %288 = vmatpush1.msra.mxu0 0.0
    %289 = vmatprep.subr.mxu0 0.0
    %290 = vmatpush1.msra.mxu0 0.0
    %291 = vmatprep.subr.mxu0 0.0
    %292 = vmatpush1.msra.mxu0 0.0
    %293 = vmatprep.subr.mxu0 0.0
    %294 = vmatpush1.msra.mxu0 0.0
    %295 = vmatprep.subr.mxu0 0.0
    %296 = vmatpush1.msra.mxu0 0.0
    %297 = vmatprep.subr.mxu0 0.0
    %298 = vmatpush1.msra.mxu0 0.0
    %299 = vmatprep.subr.mxu0 0.0
    %300 = vmatpush1.msra.mxu0 0.0
    %301 = vmatprep.subr.mxu0 0.0
    %302 = vmatpush1.msra.mxu0 0.0
    %303 = vmatprep.subr.mxu0 0.0
    %304 = vmatpush1.msra.mxu0 0.0
    %305 = vmatprep.subr.mxu0 0.0
    %306 = vmatpush1.msra.mxu0 0.0
    %307 = vmatprep.subr.mxu0 0.0
    %308 = vmatpush1.msra.mxu0 0.0
    %309 = vmatprep.subr.mxu0 0.0
    %310 = vmatpush1.msra.mxu0 0.0
    %311 = vmatprep.subr.mxu0 0.0
    %312 = vmatpush1.msra.mxu0 0.0
    %313 = vmatprep.subr.mxu0 0.0
    %314 = vmatpush1.msra.mxu0 0.0
    %315 = vmatprep.subr.mxu0 0.0
    %316 = vmatpush1.msra.mxu0 0.0
    %317 = vmatprep.subr.mxu0 0.0
    %318 = vmatpush1.msra.mxu0 0.0
    %319 = vmatprep.subr.mxu0 0.0
    %320 = vmatpush1.msra.mxu0 0.0
    %321 = vmatprep.subr.mxu0 0.0
    %322 = vmatpush1.msra.mxu0 0.0
    %323 = vmatprep.subr.mxu0 0.0
    %324 = vmatpush1.msra.mxu0 0.0
    %325 = vmatprep.subr.mxu0 0.0
    %326 = vmatpush1.msra.mxu0 0.0
    %327 = vmatprep.subr.mxu0 0.0
    %328 = vmatpush1.msra.mxu0 0.0
    %329 = vmatprep.mubr.f32.mxu0 0.0
    %330 = vmatmul.mubr.f32.gmra.mrb[0].mxu0 %v192
    %v331 = vpop.f32.mrb[0].mxu0
    %v332 = vadd.f32 0.0, %v331
    %v333 = vpop.f32.mrb[0].mxu0
    %v334 = vadd.f32 0.0, %v333
    %335 = vdwg.mxu0
    %336 = vmatprep.subr.mxu0 %v33
    %337 = vmatpush1.msra.mxu0 %v32
    %338 = vmatprep.subr.mxu0 %v41
    %339 = vmatpush1.msra.mxu0 %v40
    %340 = vmatprep.subr.mxu0 %v49
    %341 = vmatpush1.msra.mxu0 %v48
    %342 = vmatprep.subr.mxu0 %v57
    %343 = vmatpush1.msra.mxu0 %v56
    %344 = vmatprep.subr.mxu0 0.0
    %345 = vmatpush1.msra.mxu0 0.0
    %346 = vmatprep.subr.mxu0 0.0
    %347 = vmatpush1.msra.mxu0 0.0
    %348 = vmatprep.subr.mxu0 0.0
    %349 = vmatpush1.msra.mxu0 0.0
    %350 = vmatprep.subr.mxu0 0.0
    %351 = vmatpush1.msra.mxu0 0.0
    %352 = vmatprep.subr.mxu0 0.0
    %353 = vmatpush1.msra.mxu0 0.0
    %354 = vmatprep.subr.mxu0 0.0
    %355 = vmatpush1.msra.mxu0 0.0
    %356 = vmatprep.subr.mxu0 0.0
    %357 = vmatpush1.msra.mxu0 0.0
    %358 = vmatprep.subr.mxu0 0.0
    %359 = vmatpush1.msra.mxu0 0.0
    %360 = vmatprep.subr.mxu0 0.0
    %361 = vmatpush1.msra.mxu0 0.0
    %362 = vmatprep.subr.mxu0 0.0
    %363 = vmatpush1.msra.mxu0 0.0
    %364 = vmatprep.subr.mxu0 0.0
    %365 = vmatpush1.msra.mxu0 0.0
    %366 = vmatprep.subr.mxu0 0.0
    %367 = vmatpush1.msra.mxu0 0.0
    %368 = vmatprep.subr.mxu0 0.0
    %369 = vmatpush1.msra.mxu0 0.0
    %370 = vmatprep.subr.mxu0 0.0
    %371 = vmatpush1.msra.mxu0 0.0
    %372 = vmatprep.subr.mxu0 0.0
    %373 = vmatpush1.msra.mxu0 0.0
    %374 = vmatprep.subr.mxu0 0.0
    %375 = vmatpush1.msra.mxu0 0.0
    %376 = vmatprep.subr.mxu0 0.0
    %377 = vmatpush1.msra.mxu0 0.0
    %378 = vmatprep.subr.mxu0 0.0
    %379 = vmatpush1.msra.mxu0 0.0
    %380 = vmatprep.subr.mxu0 0.0
    %381 = vmatpush1.msra.mxu0 0.0
    %382 = vmatprep.subr.mxu0 0.0
    %383 = vmatpush1.msra.mxu0 0.0
    %384 = vmatprep.subr.mxu0 0.0
    %385 = vmatpush1.msra.mxu0 0.0
    %386 = vmatprep.subr.mxu0 0.0
    %387 = vmatpush1.msra.mxu0 0.0
    %388 = vmatprep.subr.mxu0 0.0
    %389 = vmatpush1.msra.mxu0 0.0
    %390 = vmatprep.subr.mxu0 0.0
    %391 = vmatpush1.msra.mxu0 0.0
    %392 = vmatprep.subr.mxu0 0.0
    %393 = vmatpush1.msra.mxu0 0.0
    %394 = vmatprep.subr.mxu0 0.0
    %395 = vmatpush1.msra.mxu0 0.0
    %396 = vmatprep.subr.mxu0 0.0
    %397 = vmatpush1.msra.mxu0 0.0
    %398 = vmatprep.subr.mxu0 0.0
    %399 = vmatpush1.msra.mxu0 0.0
    %400 = vmatprep.mubr.f32.mxu0 0.0
    %401 = vmatmul.mubr.f32.gmra.mrb[0].mxu0 %v192
    %v402 = vpop.f32.mrb[0].mxu0
    %v403 = vadd.f32 0.0, %v402
    %v404 = vpop.f32.mrb[0].mxu0
    %v405 = vadd.f32 0.0, %v404
    %406 = vdwg.mxu0
    %407 = vmatprep.subr.mxu0 %v35
    %408 = vmatpush1.msra.mxu0 %v34
    %409 = vmatprep.subr.mxu0 %v43
    %410 = vmatpush1.msra.mxu0 %v42
    %411 = vmatprep.subr.mxu0 %v51
    %412 = vmatpush1.msra.mxu0 %v50
    %413 = vmatprep.subr.mxu0 %v59
    %414 = vmatpush1.msra.mxu0 %v58
    %415 = vmatprep.subr.mxu0 0.0
    %416 = vmatpush1.msra.mxu0 0.0
    %417 = vmatprep.subr.mxu0 0.0
    %418 = vmatpush1.msra.mxu0 0.0
    %419 = vmatprep.subr.mxu0 0.0
    %420 = vmatpush1.msra.mxu0 0.0
    %421 = vmatprep.subr.mxu0 0.0
    %422 = vmatpush1.msra.mxu0 0.0
    %423 = vmatprep.subr.mxu0 0.0
    %424 = vmatpush1.msra.mxu0 0.0
    %425 = vmatprep.subr.mxu0 0.0
    %426 = vmatpush1.msra.mxu0 0.0
    %427 = vmatprep.subr.mxu0 0.0
    %428 = vmatpush1.msra.mxu0 0.0
    %429 = vmatprep.subr.mxu0 0.0
    %430 = vmatpush1.msra.mxu0 0.0
    %431 = vmatprep.subr.mxu0 0.0
    %432 = vmatpush1.msra.mxu0 0.0
    %433 = vmatprep.subr.mxu0 0.0
    %434 = vmatpush1.msra.mxu0 0.0
    %435 = vmatprep.subr.mxu0 0.0
    %436 = vmatpush1.msra.mxu0 0.0
    %437 = vmatprep.subr.mxu0 0.0
    %438 = vmatpush1.msra.mxu0 0.0
    %439 = vmatprep.subr.mxu0 0.0
    %440 = vmatpush1.msra.mxu0 0.0
    %441 = vmatprep.subr.mxu0 0.0
    %442 = vmatpush1.msra.mxu0 0.0
    %443 = vmatprep.subr.mxu0 0.0
    %444 = vmatpush1.msra.mxu0 0.0
    %445 = vmatprep.subr.mxu0 0.0
    %446 = vmatpush1.msra.mxu0 0.0
    %447 = vmatprep.subr.mxu0 0.0
    %448 = vmatpush1.msra.mxu0 0.0
    %449 = vmatprep.subr.mxu0 0.0
    %450 = vmatpush1.msra.mxu0 0.0
    %451 = vmatprep.subr.mxu0 0.0
    %452 = vmatpush1.msra.mxu0 0.0
    %453 = vmatprep.subr.mxu0 0.0
    %454 = vmatpush1.msra.mxu0 0.0
    %455 = vmatprep.subr.mxu0 0.0
    %456 = vmatpush1.msra.mxu0 0.0
    %457 = vmatprep.subr.mxu0 0.0
    %458 = vmatpush1.msra.mxu0 0.0
    %459 = vmatprep.subr.mxu0 0.0
    %460 = vmatpush1.msra.mxu0 0.0
    %461 = vmatprep.subr.mxu0 0.0
    %462 = vmatpush1.msra.mxu0 0.0
    %463 = vmatprep.subr.mxu0 0.0
    %464 = vmatpush1.msra.mxu0 0.0
    %465 = vmatprep.subr.mxu0 0.0
    %466 = vmatpush1.msra.mxu0 0.0
    %467 = vmatprep.subr.mxu0 0.0
    %468 = vmatpush1.msra.mxu0 0.0
    %469 = vmatprep.subr.mxu0 0.0
    %470 = vmatpush1.msra.mxu0 0.0
    %471 = vmatprep.mubr.f32.mxu0 0.0
    %472 = vmatmul.mubr.f32.gmra.mrb[0].mxu0 %v192
    %v473 = vpop.f32.mrb[0].mxu0
    %v474 = vadd.f32 0.0, %v473
    %v475 = vpop.f32.mrb[0].mxu0
    %v476 = vadd.f32 0.0, %v475
    %477 = vdwg.mxu0
    %478 = vrot.lane.b32.xlu0 %v189, 32
    %v479 = vpop.permute.xlu0 %478
    %481 = vrot.lane.b32.xlu0 %v189, 64
    %v482 = vpop.permute.xlu0 %481
    %484 = vrot.lane.b32.xlu0 %v189, 96
    %v485 = vpop.permute.xlu0 %484
    %v487 = vsel %vm190, %v189, %v479
    %vm488 = vcmask 523264
    %v489 = vsel %vm488, %v487, %v482
    %vm490 = vcmask 785408
    %v491 = vsel %vm490, %v489, %v485
    %v492 = vmul.f32 %v261, %v491
    %v493 = vmul.f32 %v263, %v491
    %v494 = vmul.f32 %v332, %v491
    %v495 = vmul.f32 %v334, %v491
    %v496 = vmul.f32 %v403, %v491
    %v497 = vmul.f32 %v405, %v491
    %v498 = vmul.f32 %v474, %v491
    %v499 = vmul.f32 %v476, %v491
    %v500 = vld [vmem:[%s0] sm:$0x3]
    %501 = vmatprep.subr.mxu0 0.0
    %502 = vmatpush1.msra.mxu0 %v60
    %503 = vmatprep.subr.mxu0 0.0
    %504 = vmatpush1.msra.mxu0 %v61
    %505 = vmatprep.subr.mxu0 0.0
    %506 = vmatpush1.msra.mxu0 %v62
    %507 = vmatprep.subr.mxu0 0.0
    %508 = vmatpush1.msra.mxu0 %v63
    %509 = vmatprep.subr.mxu0 0.0
    %510 = vmatpush1.msra.mxu0 %v64
    %511 = vmatprep.subr.mxu0 0.0
    %512 = vmatpush1.msra.mxu0 %v65
    %513 = vmatprep.subr.mxu0 0.0
    %514 = vmatpush1.msra.mxu0 %v66
    %515 = vmatprep.subr.mxu0 0.0
    %516 = vmatpush1.msra.mxu0 %v67
    %517 = vmatprep.subr.mxu0 0.0
    %518 = vmatpush1.msra.mxu0 %v68
    %519 = vmatprep.subr.mxu0 0.0
    %520 = vmatpush1.msra.mxu0 %v69
    %521 = vmatprep.subr.mxu0 0.0
    %522 = vmatpush1.msra.mxu0 %v70
    %523 = vmatprep.subr.mxu0 0.0
    %524 = vmatpush1.msra.mxu0 %v71
    %525 = vmatprep.subr.mxu0 0.0
    %526 = vmatpush1.msra.mxu0 %v72
    %527 = vmatprep.subr.mxu0 0.0
    %528 = vmatpush1.msra.mxu0 %v73
    %529 = vmatprep.subr.mxu0 0.0
    %530 = vmatpush1.msra.mxu0 %v74
    %531 = vmatprep.subr.mxu0 0.0
    %532 = vmatpush1.msra.mxu0 %v75
    %533 = vmatprep.subr.mxu0 0.0
    %534 = vmatpush1.msra.mxu0 %v76
    %535 = vmatprep.subr.mxu0 0.0
    %536 = vmatpush1.msra.mxu0 %v77
    %537 = vmatprep.subr.mxu0 0.0
    %538 = vmatpush1.msra.mxu0 %v78
    %539 = vmatprep.subr.mxu0 0.0
    %540 = vmatpush1.msra.mxu0 %v79
    %541 = vmatprep.subr.mxu0 0.0
    %542 = vmatpush1.msra.mxu0 %v80
    %543 = vmatprep.subr.mxu0 0.0
    %544 = vmatpush1.msra.mxu0 %v81
    %545 = vmatprep.subr.mxu0 0.0
    %546 = vmatpush1.msra.mxu0 %v82
    %547 = vmatprep.subr.mxu0 0.0
    %548 = vmatpush1.msra.mxu0 %v83
    %549 = vmatprep.subr.mxu0 0.0
    %550 = vmatpush1.msra.mxu0 %v84
    %551 = vmatprep.subr.mxu0 0.0
    %552 = vmatpush1.msra.mxu0 %v85
    %553 = vmatprep.subr.mxu0 0.0
    %554 = vmatpush1.msra.mxu0 %v86
    %555 = vmatprep.subr.mxu0 0.0
    %556 = vmatpush1.msra.mxu0 %v87
    %557 = vmatprep.subr.mxu0 0.0
    %558 = vmatpush1.msra.mxu0 %v88
    %559 = vmatprep.subr.mxu0 0.0
    %560 = vmatpush1.msra.mxu0 %v89
    %561 = vmatprep.subr.mxu0 0.0
    %562 = vmatpush1.msra.mxu0 %v90
    %563 = vmatprep.subr.mxu0 0.0
    %564 = vmatpush1.msra.mxu0 %v91
    %565 = vmatprep.mubr.f32.mxu0 %v493
    %566 = vmatmul.mubr.f32.gmra.mrb[0].mxu0 %v492
    %v567 = vpop.f32.mrb[0].mxu0
    %v568 = vadd.f32 %v500, %v567
    %v569 = vpop.f32.mrb[0].mxu0
    %570 = vdwg.mxu0
    %571 = vmatprep.subr.mxu0 0.0
    %572 = vmatpush1.msra.mxu0 %v92
    %573 = vmatprep.subr.mxu0 0.0
    %574 = vmatpush1.msra.mxu0 %v93
    %575 = vmatprep.subr.mxu0 0.0
    %576 = vmatpush1.msra.mxu0 %v94
    %577 = vmatprep.subr.mxu0 0.0
    %578 = vmatpush1.msra.mxu0 %v95
    %579 = vmatprep.subr.mxu0 0.0
    %580 = vmatpush1.msra.mxu0 %v96
    %581 = vmatprep.subr.mxu0 0.0
    %582 = vmatpush1.msra.mxu0 %v97
    %583 = vmatprep.subr.mxu0 0.0
    %584 = vmatpush1.msra.mxu0 %v98
    %585 = vmatprep.subr.mxu0 0.0
    %586 = vmatpush1.msra.mxu0 %v99
    %587 = vmatprep.subr.mxu0 0.0
    %588 = vmatpush1.msra.mxu0 %v100
    %589 = vmatprep.subr.mxu0 0.0
    %590 = vmatpush1.msra.mxu0 %v101
    %591 = vmatprep.subr.mxu0 0.0
    %592 = vmatpush1.msra.mxu0 %v102
    %593 = vmatprep.subr.mxu0 0.0
    %594 = vmatpush1.msra.mxu0 %v103
    %595 = vmatprep.subr.mxu0 0.0
    %596 = vmatpush1.msra.mxu0 %v104
    %597 = vmatprep.subr.mxu0 0.0
    %598 = vmatpush1.msra.mxu0 %v105
    %599 = vmatprep.subr.mxu0 0.0
    %600 = vmatpush1.msra.mxu0 %v106
    %601 = vmatprep.subr.mxu0 0.0
    %602 = vmatpush1.msra.mxu0 %v107
    %603 = vmatprep.subr.mxu0 0.0
    %604 = vmatpush1.msra.mxu0 %v108
    %605 = vmatprep.subr.mxu0 0.0
    %606 = vmatpush1.msra.mxu0 %v109
    %607 = vmatprep.subr.mxu0 0.0
    %608 = vmatpush1.msra.mxu0 %v110
    %609 = vmatprep.subr.mxu0 0.0
    %610 = vmatpush1.msra.mxu0 %v111
    %611 = vmatprep.subr.mxu0 0.0
    %612 = vmatpush1.msra.mxu0 %v112
    %613 = vmatprep.subr.mxu0 0.0
    %614 = vmatpush1.msra.mxu0 %v113
    %615 = vmatprep.subr.mxu0 0.0
    %616 = vmatpush1.msra.mxu0 %v114
    %617 = vmatprep.subr.mxu0 0.0
    %618 = vmatpush1.msra.mxu0 %v115
    %619 = vmatprep.subr.mxu0 0.0
    %620 = vmatpush1.msra.mxu0 %v116
    %621 = vmatprep.subr.mxu0 0.0
    %622 = vmatpush1.msra.mxu0 %v117
    %623 = vmatprep.subr.mxu0 0.0
    %624 = vmatpush1.msra.mxu0 %v118
    %625 = vmatprep.subr.mxu0 0.0
    %626 = vmatpush1.msra.mxu0 %v119
    %627 = vmatprep.subr.mxu0 0.0
    %628 = vmatpush1.msra.mxu0 %v120
    %629 = vmatprep.subr.mxu0 0.0
    %630 = vmatpush1.msra.mxu0 %v121
    %631 = vmatprep.subr.mxu0 0.0
    %632 = vmatpush1.msra.mxu0 %v122
    %633 = vmatprep.subr.mxu0 0.0
    %634 = vmatpush1.msra.mxu0 %v123
    %635 = vmatprep.mubr.f32.mxu0 %v495
    %636 = vmatmul.mubr.f32.gmra.mrb[0].mxu0 %v494
    %v637 = vpop.f32.mrb[0].mxu0
    %v638 = vadd.f32 %v568, %v637
    %v639 = vpop.f32.mrb[0].mxu0
    %640 = vdwg.mxu0
    %641 = vmatprep.subr.mxu0 0.0
    %642 = vmatpush1.msra.mxu0 %v124
    %643 = vmatprep.subr.mxu0 0.0
    %644 = vmatpush1.msra.mxu0 %v125
    %645 = vmatprep.subr.mxu0 0.0
    %646 = vmatpush1.msra.mxu0 %v126
    %647 = vmatprep.subr.mxu0 0.0
    %648 = vmatpush1.msra.mxu0 %v127
    %649 = vmatprep.subr.mxu0 0.0
    %650 = vmatpush1.msra.mxu0 %v128
    %651 = vmatprep.subr.mxu0 0.0
    %652 = vmatpush1.msra.mxu0 %v129
    %653 = vmatprep.subr.mxu0 0.0
    %654 = vmatpush1.msra.mxu0 %v130
    %655 = vmatprep.subr.mxu0 0.0
    %656 = vmatpush1.msra.mxu0 %v131
    %657 = vmatprep.subr.mxu0 0.0
    %658 = vmatpush1.msra.mxu0 %v132
    %659 = vmatprep.subr.mxu0 0.0
    %660 = vmatpush1.msra.mxu0 %v133
    %661 = vmatprep.subr.mxu0 0.0
    %662 = vmatpush1.msra.mxu0 %v134
    %663 = vmatprep.subr.mxu0 0.0
    %664 = vmatpush1.msra.mxu0 %v135
    %665 = vmatprep.subr.mxu0 0.0
    %666 = vmatpush1.msra.mxu0 %v136
    %667 = vmatprep.subr.mxu0 0.0
    %668 = vmatpush1.msra.mxu0 %v137
    %669 = vmatprep.subr.mxu0 0.0
    %670 = vmatpush1.msra.mxu0 %v138
    %671 = vmatprep.subr.mxu0 0.0
    %672 = vmatpush1.msra.mxu0 %v139
    %673 = vmatprep.subr.mxu0 0.0
    %674 = vmatpush1.msra.mxu0 %v140
    %675 = vmatprep.subr.mxu0 0.0
    %676 = vmatpush1.msra.mxu0 %v141
    %677 = vmatprep.subr.mxu0 0.0
    %678 = vmatpush1.msra.mxu0 %v142
    %679 = vmatprep.subr.mxu0 0.0
    %680 = vmatpush1.msra.mxu0 %v143
    %681 = vmatprep.subr.mxu0 0.0
    %682 = vmatpush1.msra.mxu0 %v144
    %683 = vmatprep.subr.mxu0 0.0
    %684 = vmatpush1.msra.mxu0 %v145
    %685 = vmatprep.subr.mxu0 0.0
    %686 = vmatpush1.msra.mxu0 %v146
    %687 = vmatprep.subr.mxu0 0.0
    %688 = vmatpush1.msra.mxu0 %v147
    %689 = vmatprep.subr.mxu0 0.0
    %690 = vmatpush1.msra.mxu0 %v148
    %691 = vmatprep.subr.mxu0 0.0
    %692 = vmatpush1.msra.mxu0 %v149
    %693 = vmatprep.subr.mxu0 0.0
    %694 = vmatpush1.msra.mxu0 %v150
    %695 = vmatprep.subr.mxu0 0.0
    %696 = vmatpush1.msra.mxu0 %v151
    %697 = vmatprep.subr.mxu0 0.0
    %698 = vmatpush1.msra.mxu0 %v152
    %699 = vmatprep.subr.mxu0 0.0
    %700 = vmatpush1.msra.mxu0 %v153
    %701 = vmatprep.subr.mxu0 0.0
    %702 = vmatpush1.msra.mxu0 %v154
    %703 = vmatprep.subr.mxu0 0.0
    %704 = vmatpush1.msra.mxu0 %v155
    %705 = vmatprep.mubr.f32.mxu0 %v497
    %706 = vmatmul.mubr.f32.gmra.mrb[0].mxu0 %v496
    %v707 = vpop.f32.mrb[0].mxu0
    %v708 = vadd.f32 %v638, %v707
    %v709 = vpop.f32.mrb[0].mxu0
    %710 = vdwg.mxu0
    %711 = vmatprep.subr.mxu0 0.0
    %712 = vmatpush1.msra.mxu0 %v156
    %713 = vmatprep.subr.mxu0 0.0
    %714 = vmatpush1.msra.mxu0 %v157
    %715 = vmatprep.subr.mxu0 0.0
    %716 = vmatpush1.msra.mxu0 %v158
    %717 = vmatprep.subr.mxu0 0.0
    %718 = vmatpush1.msra.mxu0 %v159
    %719 = vmatprep.subr.mxu0 0.0
    %720 = vmatpush1.msra.mxu0 %v160
    %721 = vmatprep.subr.mxu0 0.0
    %722 = vmatpush1.msra.mxu0 %v161
    %723 = vmatprep.subr.mxu0 0.0
    %724 = vmatpush1.msra.mxu0 %v162
    %725 = vmatprep.subr.mxu0 0.0
    %726 = vmatpush1.msra.mxu0 %v163
    %727 = vmatprep.subr.mxu0 0.0
    %728 = vmatpush1.msra.mxu0 %v164
    %729 = vmatprep.subr.mxu0 0.0
    %730 = vmatpush1.msra.mxu0 %v165
    %731 = vmatprep.subr.mxu0 0.0
    %732 = vmatpush1.msra.mxu0 %v166
    %733 = vmatprep.subr.mxu0 0.0
    %734 = vmatpush1.msra.mxu0 %v167
    %735 = vmatprep.subr.mxu0 0.0
    %736 = vmatpush1.msra.mxu0 %v168
    %737 = vmatprep.subr.mxu0 0.0
    %738 = vmatpush1.msra.mxu0 %v169
    %739 = vmatprep.subr.mxu0 0.0
    %740 = vmatpush1.msra.mxu0 %v170
    %741 = vmatprep.subr.mxu0 0.0
    %742 = vmatpush1.msra.mxu0 %v171
    %743 = vmatprep.subr.mxu0 0.0
    %744 = vmatpush1.msra.mxu0 %v172
    %745 = vmatprep.subr.mxu0 0.0
    %746 = vmatpush1.msra.mxu0 %v173
    %747 = vmatprep.subr.mxu0 0.0
    %748 = vmatpush1.msra.mxu0 %v174
    %749 = vmatprep.subr.mxu0 0.0
    %750 = vmatpush1.msra.mxu0 %v175
    %751 = vmatprep.subr.mxu0 0.0
    %752 = vmatpush1.msra.mxu0 %v176
    %753 = vmatprep.subr.mxu0 0.0
    %754 = vmatpush1.msra.mxu0 %v177
    %755 = vmatprep.subr.mxu0 0.0
    %756 = vmatpush1.msra.mxu0 %v178
    %757 = vmatprep.subr.mxu0 0.0
    %758 = vmatpush1.msra.mxu0 %v179
    %759 = vmatprep.subr.mxu0 0.0
    %760 = vmatpush1.msra.mxu0 %v180
    %761 = vmatprep.subr.mxu0 0.0
    %762 = vmatpush1.msra.mxu0 %v181
    %763 = vmatprep.subr.mxu0 0.0
    %764 = vmatpush1.msra.mxu0 %v182
    %765 = vmatprep.subr.mxu0 0.0
    %766 = vmatpush1.msra.mxu0 %v183
    %767 = vmatprep.subr.mxu0 0.0
    %768 = vmatpush1.msra.mxu0 %v184
    %769 = vmatprep.subr.mxu0 0.0
    %770 = vmatpush1.msra.mxu0 %v185
    %771 = vmatprep.subr.mxu0 0.0
    %772 = vmatpush1.msra.mxu0 %v186
    %773 = vmatprep.subr.mxu0 0.0
    %774 = vmatpush1.msra.mxu0 %v187
    %775 = vmatprep.mubr.f32.mxu0 %v499
    %776 = vmatmul.mubr.f32.gmra.mrb[0].mxu0 %v498
    %v777 = vpop.f32.mrb[0].mxu0
    %v778 = vadd.f32 %v708, %v777
    %v779 = vpop.f32.mrb[0].mxu0
    %780 = vdwg.mxu0
    %v781 = vmul.f32 %v188, 0.8
    %v782 = vmul.f32 %v778, 0.2
    %v783 = vadd.f32 %v781, %v782
    %v784 = vld [vmem:[%s1] sm:$0x3]
    %v785 = vmul.f32 %v784, 0.05
    %v786 = vadd.f32 %v783, %v785
    %vm787 = vcmask 254976
    %788 = vst.msk [vmem:[#allocation3] sm:$0x3] %vm787, %v786
    %v789 = vtanh.pop %v786
    %v791 = vsel %vm190, %v789, 0
    %793 = vmatprep.subr.mxu0 %v29
    %794 = vmatpush1.msra.mxu0 %v28
    %795 = vmatprep.subr.mxu0 %v37
    %796 = vmatpush1.msra.mxu0 %v36
    %797 = vmatprep.subr.mxu0 %v45
    %798 = vmatpush1.msra.mxu0 %v44
    %799 = vmatprep.subr.mxu0 %v53
    %800 = vmatpush1.msra.mxu0 %v52
    %801 = vmatprep.subr.mxu0 0.0
    %802 = vmatpush1.msra.mxu0 0.0
    %803 = vmatprep.subr.mxu0 0.0
    %804 = vmatpush1.msra.mxu0 0.0
    %805 = vmatprep.subr.mxu0 0.0
    %806 = vmatpush1.msra.mxu0 0.0
    %807 = vmatprep.subr.mxu0 0.0
    %808 = vmatpush1.msra.mxu0 0.0
    %809 = vmatprep.subr.mxu0 0.0
    %810 = vmatpush1.msra.mxu0 0.0
    %811 = vmatprep.subr.mxu0 0.0
    %812 = vmatpush1.msra.mxu0 0.0
    %813 = vmatprep.subr.mxu0 0.0
    %814 = vmatpush1.msra.mxu0 0.0
    %815 = vmatprep.subr.mxu0 0.0
    %816 = vmatpush1.msra.mxu0 0.0
    %817 = vmatprep.subr.mxu0 0.0
    %818 = vmatpush1.msra.mxu0 0.0
    %819 = vmatprep.subr.mxu0 0.0
    %820 = vmatpush1.msra.mxu0 0.0
    %821 = vmatprep.subr.mxu0 0.0
    %822 = vmatpush1.msra.mxu0 0.0
    %823 = vmatprep.subr.mxu0 0.0
    %824 = vmatpush1.msra.mxu0 0.0
    %825 = vmatprep.subr.mxu0 0.0
    %826 = vmatpush1.msra.mxu0 0.0
    %827 = vmatprep.subr.mxu0 0.0
    %828 = vmatpush1.msra.mxu0 0.0
    %829 = vmatprep.subr.mxu0 0.0
    %830 = vmatpush1.msra.mxu0 0.0
    %831 = vmatprep.subr.mxu0 0.0
    %832 = vmatpush1.msra.mxu0 0.0
    %833 = vmatprep.subr.mxu0 0.0
    %834 = vmatpush1.msra.mxu0 0.0
    %835 = vmatprep.subr.mxu0 0.0
    %836 = vmatpush1.msra.mxu0 0.0
    %837 = vmatprep.subr.mxu0 0.0
    %838 = vmatpush1.msra.mxu0 0.0
    %839 = vmatprep.subr.mxu0 0.0
    %840 = vmatpush1.msra.mxu0 0.0
    %841 = vmatprep.subr.mxu0 0.0
    %842 = vmatpush1.msra.mxu0 0.0
    %843 = vmatprep.subr.mxu0 0.0
    %844 = vmatpush1.msra.mxu0 0.0
    %845 = vmatprep.subr.mxu0 0.0
    %846 = vmatpush1.msra.mxu0 0.0
    %847 = vmatprep.subr.mxu0 0.0
    %848 = vmatpush1.msra.mxu0 0.0
    %849 = vmatprep.subr.mxu0 0.0
    %850 = vmatpush1.msra.mxu0 0.0
    %851 = vmatprep.subr.mxu0 0.0
    %852 = vmatpush1.msra.mxu0 0.0
    %853 = vmatprep.subr.mxu0 0.0
    %854 = vmatpush1.msra.mxu0 0.0
    %855 = vmatprep.subr.mxu0 0.0
    %856 = vmatpush1.msra.mxu0 0.0
    %857 = vmatprep.mubr.f32.mxu0 0.0
    %858 = vmatmul.mubr.f32.gmra.mrb[0].mxu0 %v791
    %v859 = vpop.f32.mrb[0].mxu0
    %v860 = vadd.f32 0.0, %v859
    %v861 = vpop.f32.mrb[0].mxu0
    %v862 = vadd.f32 0.0, %v861
    %863 = vdwg.mxu0
    %864 = vmatprep.subr.mxu0 %v31
    %865 = vmatpush1.msra.mxu0 %v30
    %866 = vmatprep.subr.mxu0 %v39
    %867 = vmatpush1.msra.mxu0 %v38
    %868 = vmatprep.subr.mxu0 %v47
    %869 = vmatpush1.msra.mxu0 %v46
    %870 = vmatprep.subr.mxu0 %v55
    %871 = vmatpush1.msra.mxu0 %v54
    %872 = vmatprep.subr.mxu0 0.0
    %873 = vmatpush1.msra.mxu0 0.0
    %874 = vmatprep.subr.mxu0 0.0
    %875 = vmatpush1.msra.mxu0 0.0
    %876 = vmatprep.subr.mxu0 0.0
    %877 = vmatpush1.msra.mxu0 0.0
    %878 = vmatprep.subr.mxu0 0.0
    %879 = vmatpush1.msra.mxu0 0.0
    %880 = vmatprep.subr.mxu0 0.0
    %881 = vmatpush1.msra.mxu0 0.0
    %882 = vmatprep.subr.mxu0 0.0
    %883 = vmatpush1.msra.mxu0 0.0
    %884 = vmatprep.subr.mxu0 0.0
    %885 = vmatpush1.msra.mxu0 0.0
    %886 = vmatprep.subr.mxu0 0.0
    %887 = vmatpush1.msra.mxu0 0.0
    %888 = vmatprep.subr.mxu0 0.0
    %889 = vmatpush1.msra.mxu0 0.0
    %890 = vmatprep.subr.mxu0 0.0
    %891 = vmatpush1.msra.mxu0 0.0
    %892 = vmatprep.subr.mxu0 0.0
    %893 = vmatpush1.msra.mxu0 0.0
    %894 = vmatprep.subr.mxu0 0.0
    %895 = vmatpush1.msra.mxu0 0.0
    %896 = vmatprep.subr.mxu0 0.0
    %897 = vmatpush1.msra.mxu0 0.0
    %898 = vmatprep.subr.mxu0 0.0
    %899 = vmatpush1.msra.mxu0 0.0
    %900 = vmatprep.subr.mxu0 0.0
    %901 = vmatpush1.msra.mxu0 0.0
    %902 = vmatprep.subr.mxu0 0.0
    %903 = vmatpush1.msra.mxu0 0.0
    %904 = vmatprep.subr.mxu0 0.0
    %905 = vmatpush1.msra.mxu0 0.0
    %906 = vmatprep.subr.mxu0 0.0
    %907 = vmatpush1.msra.mxu0 0.0
    %908 = vmatprep.subr.mxu0 0.0
    %909 = vmatpush1.msra.mxu0 0.0
    %910 = vmatprep.subr.mxu0 0.0
    %911 = vmatpush1.msra.mxu0 0.0
    %912 = vmatprep.subr.mxu0 0.0
    %913 = vmatpush1.msra.mxu0 0.0
    %914 = vmatprep.subr.mxu0 0.0
    %915 = vmatpush1.msra.mxu0 0.0
    %916 = vmatprep.subr.mxu0 0.0
    %917 = vmatpush1.msra.mxu0 0.0
    %918 = vmatprep.subr.mxu0 0.0
    %919 = vmatpush1.msra.mxu0 0.0
    %920 = vmatprep.subr.mxu0 0.0
    %921 = vmatpush1.msra.mxu0 0.0
    %922 = vmatprep.subr.mxu0 0.0
    %923 = vmatpush1.msra.mxu0 0.0
    %924 = vmatprep.subr.mxu0 0.0
    %925 = vmatpush1.msra.mxu0 0.0
    %926 = vmatprep.subr.mxu0 0.0
    %927 = vmatpush1.msra.mxu0 0.0
    %928 = vmatprep.mubr.f32.mxu0 0.0
    %929 = vmatmul.mubr.f32.gmra.mrb[0].mxu0 %v791
    %v930 = vpop.f32.mrb[0].mxu0
    %v931 = vadd.f32 0.0, %v930
    %v932 = vpop.f32.mrb[0].mxu0
    %v933 = vadd.f32 0.0, %v932
    %934 = vdwg.mxu0
    %935 = vmatprep.subr.mxu0 %v33
    %936 = vmatpush1.msra.mxu0 %v32
    %937 = vmatprep.subr.mxu0 %v41
    %938 = vmatpush1.msra.mxu0 %v40
    %939 = vmatprep.subr.mxu0 %v49
    %940 = vmatpush1.msra.mxu0 %v48
    %941 = vmatprep.subr.mxu0 %v57
    %942 = vmatpush1.msra.mxu0 %v56
    %943 = vmatprep.subr.mxu0 0.0
    %944 = vmatpush1.msra.mxu0 0.0
    %945 = vmatprep.subr.mxu0 0.0
    %946 = vmatpush1.msra.mxu0 0.0
    %947 = vmatprep.subr.mxu0 0.0
    %948 = vmatpush1.msra.mxu0 0.0
    %949 = vmatprep.subr.mxu0 0.0
    %950 = vmatpush1.msra.mxu0 0.0
    %951 = vmatprep.subr.mxu0 0.0
    %952 = vmatpush1.msra.mxu0 0.0
    %953 = vmatprep.subr.mxu0 0.0
    %954 = vmatpush1.msra.mxu0 0.0
    %955 = vmatprep.subr.mxu0 0.0
    %956 = vmatpush1.msra.mxu0 0.0
    %957 = vmatprep.subr.mxu0 0.0
    %958 = vmatpush1.msra.mxu0 0.0
    %959 = vmatprep.subr.mxu0 0.0
    %960 = vmatpush1.msra.mxu0 0.0
    %961 = vmatprep.subr.mxu0 0.0
    %962 = vmatpush1.msra.mxu0 0.0
    %963 = vmatprep.subr.mxu0 0.0
    %964 = vmatpush1.msra.mxu0 0.0
    %965 = vmatprep.subr.mxu0 0.0
    %966 = vmatpush1.msra.mxu0 0.0
    %967 = vmatprep.subr.mxu0 0.0
    %968 = vmatpush1.msra.mxu0 0.0
    %969 = vmatprep.subr.mxu0 0.0
    %970 = vmatpush1.msra.mxu0 0.0
    %971 = vmatprep.subr.mxu0 0.0
    %972 = vmatpush1.msra.mxu0 0.0
    %973 = vmatprep.subr.mxu0 0.0
    %974 = vmatpush1.msra.mxu0 0.0
    %975 = vmatprep.subr.mxu0 0.0
    %976 = vmatpush1.msra.mxu0 0.0
    %977 = vmatprep.subr.mxu0 0.0
    %978 = vmatpush1.msra.mxu0 0.0
    %979 = vmatprep.subr.mxu0 0.0
    %980 = vmatpush1.msra.mxu0 0.0
    %981 = vmatprep.subr.mxu0 0.0
    %982 = vmatpush1.msra.mxu0 0.0
    %983 = vmatprep.subr.mxu0 0.0
    %984 = vmatpush1.msra.mxu0 0.0
    %985 = vmatprep.subr.mxu0 0.0
    %986 = vmatpush1.msra.mxu0 0.0
    %987 = vmatprep.subr.mxu0 0.0
    %988 = vmatpush1.msra.mxu0 0.0
    %989 = vmatprep.subr.mxu0 0.0
    %990 = vmatpush1.msra.mxu0 0.0
    %991 = vmatprep.subr.mxu0 0.0
    %992 = vmatpush1.msra.mxu0 0.0
    %993 = vmatprep.subr.mxu0 0.0
    %994 = vmatpush1.msra.mxu0 0.0
    %995 = vmatprep.subr.mxu0 0.0
    %996 = vmatpush1.msra.mxu0 0.0
    %997 = vmatprep.subr.mxu0 0.0
    %998 = vmatpush1.msra.mxu0 0.0
    %999 = vmatprep.mubr.f32.mxu0 0.0
    %1000 = vmatmul.mubr.f32.gmra.mrb[0].mxu0 %v791
    %v1001 = vpop.f32.mrb[0].mxu0
    %v1002 = vadd.f32 0.0, %v1001
    %v1003 = vpop.f32.mrb[0].mxu0
    %v1004 = vadd.f32 0.0, %v1003
    %1005 = vdwg.mxu0
    %1006 = vmatprep.subr.mxu0 %v35
    %1007 = vmatpush1.msra.mxu0 %v34
    %1008 = vmatprep.subr.mxu0 %v43
    %1009 = vmatpush1.msra.mxu0 %v42
    %1010 = vmatprep.subr.mxu0 %v51
    %1011 = vmatpush1.msra.mxu0 %v50
    %1012 = vmatprep.subr.mxu0 %v59
    %1013 = vmatpush1.msra.mxu0 %v58
    %1014 = vmatprep.subr.mxu0 0.0
    %1015 = vmatpush1.msra.mxu0 0.0
    %1016 = vmatprep.subr.mxu0 0.0
    %1017 = vmatpush1.msra.mxu0 0.0
    %1018 = vmatprep.subr.mxu0 0.0
    %1019 = vmatpush1.msra.mxu0 0.0
    %1020 = vmatprep.subr.mxu0 0.0
    %1021 = vmatpush1.msra.mxu0 0.0
    %1022 = vmatprep.subr.mxu0 0.0
    %1023 = vmatpush1.msra.mxu0 0.0
    %1024 = vmatprep.subr.mxu0 0.0
    %1025 = vmatpush1.msra.mxu0 0.0
    %1026 = vmatprep.subr.mxu0 0.0
    %1027 = vmatpush1.msra.mxu0 0.0
    %1028 = vmatprep.subr.mxu0 0.0
    %1029 = vmatpush1.msra.mxu0 0.0
    %1030 = vmatprep.subr.mxu0 0.0
    %1031 = vmatpush1.msra.mxu0 0.0
    %1032 = vmatprep.subr.mxu0 0.0
    %1033 = vmatpush1.msra.mxu0 0.0
    %1034 = vmatprep.subr.mxu0 0.0
    %1035 = vmatpush1.msra.mxu0 0.0
    %1036 = vmatprep.subr.mxu0 0.0
    %1037 = vmatpush1.msra.mxu0 0.0
    %1038 = vmatprep.subr.mxu0 0.0
    %1039 = vmatpush1.msra.mxu0 0.0
    %1040 = vmatprep.subr.mxu0 0.0
    %1041 = vmatpush1.msra.mxu0 0.0
    %1042 = vmatprep.subr.mxu0 0.0
    %1043 = vmatpush1.msra.mxu0 0.0
    %1044 = vmatprep.subr.mxu0 0.0
    %1045 = vmatpush1.msra.mxu0 0.0
    %1046 = vmatprep.subr.mxu0 0.0
    %1047 = vmatpush1.msra.mxu0 0.0
    %1048 = vmatprep.subr.mxu0 0.0
    %1049 = vmatpush1.msra.mxu0 0.0
    %1050 = vmatprep.subr.mxu0 0.0
    %1051 = vmatpush1.msra.mxu0 0.0
    %1052 = vmatprep.subr.mxu0 0.0
    %1053 = vmatpush1.msra.mxu0 0.0
    %1054 = vmatprep.subr.mxu0 0.0
    %1055 = vmatpush1.msra.mxu0 0.0
    %1056 = vmatprep.subr.mxu0 0.0
    %1057 = vmatpush1.msra.mxu0 0.0
    %1058 = vmatprep.subr.mxu0 0.0
    %1059 = vmatpush1.msra.mxu0 0.0
    %1060 = vmatprep.subr.mxu0 0.0
    %1061 = vmatpush1.msra.mxu0 0.0
    %1062 = vmatprep.subr.mxu0 0.0
    %1063 = vmatpush1.msra.mxu0 0.0
    %1064 = vmatprep.subr.mxu0 0.0
    %1065 = vmatpush1.msra.mxu0 0.0
    %1066 = vmatprep.subr.mxu0 0.0
    %1067 = vmatpush1.msra.mxu0 0.0
    %1068 = vmatprep.subr.mxu0 0.0
    %1069 = vmatpush1.msra.mxu0 0.0
    %1070 = vmatprep.mubr.f32.mxu0 0.0
    %1071 = vmatmul.mubr.f32.gmra.mrb[0].mxu0 %v791
    %v1072 = vpop.f32.mrb[0].mxu0
    %v1073 = vadd.f32 0.0, %v1072
    %v1074 = vpop.f32.mrb[0].mxu0
    %v1075 = vadd.f32 0.0, %v1074
    %1076 = vdwg.mxu0
    %1077 = vrot.lane.b32.xlu0 %v789, 32
    %v1078 = vpop.permute.xlu0 %1077
    %1080 = vrot.lane.b32.xlu0 %v789, 64
    %v1081 = vpop.permute.xlu0 %1080
    %1083 = vrot.lane.b32.xlu0 %v789, 96
    %v1084 = vpop.permute.xlu0 %1083
    %v1086 = vsel %vm190, %v789, %v1078
    %v1087 = vsel %vm488, %v1086, %v1081
    %v1088 = vsel %vm490, %v1087, %v1084
    %v1089 = vmul.f32 %v860, %v1088
    %v1090 = vmul.f32 %v862, %v1088
    %v1091 = vmul.f32 %v931, %v1088
    %v1092 = vmul.f32 %v933, %v1088
    %v1093 = vmul.f32 %v1002, %v1088
    %v1094 = vmul.f32 %v1004, %v1088
    %v1095 = vmul.f32 %v1073, %v1088
    %v1096 = vmul.f32 %v1075, %v1088
    %s1097 = scalar_lea.vmem %s0, 2
    %v1098 = vld [vmem:[%s1097] sm:$0x3]
    %1099 = vmatprep.subr.mxu0 0.0
    %1100 = vmatpush1.msra.mxu0 %v60
    %1101 = vmatprep.subr.mxu0 0.0
    %1102 = vmatpush1.msra.mxu0 %v61
    %1103 = vmatprep.subr.mxu0 0.0
    %1104 = vmatpush1.msra.mxu0 %v62
    %1105 = vmatprep.subr.mxu0 0.0
    %1106 = vmatpush1.msra.mxu0 %v63
    %1107 = vmatprep.subr.mxu0 0.0
    %1108 = vmatpush1.msra.mxu0 %v64
    %1109 = vmatprep.subr.mxu0 0.0
    %1110 = vmatpush1.msra.mxu0 %v65
    %1111 = vmatprep.subr.mxu0 0.0
    %1112 = vmatpush1.msra.mxu0 %v66
    %1113 = vmatprep.subr.mxu0 0.0
    %1114 = vmatpush1.msra.mxu0 %v67
    %1115 = vmatprep.subr.mxu0 0.0
    %1116 = vmatpush1.msra.mxu0 %v68
    %1117 = vmatprep.subr.mxu0 0.0
    %1118 = vmatpush1.msra.mxu0 %v69
    %1119 = vmatprep.subr.mxu0 0.0
    %1120 = vmatpush1.msra.mxu0 %v70
    %1121 = vmatprep.subr.mxu0 0.0
    %1122 = vmatpush1.msra.mxu0 %v71
    %1123 = vmatprep.subr.mxu0 0.0
    %1124 = vmatpush1.msra.mxu0 %v72
    %1125 = vmatprep.subr.mxu0 0.0
    %1126 = vmatpush1.msra.mxu0 %v73
    %1127 = vmatprep.subr.mxu0 0.0
    %1128 = vmatpush1.msra.mxu0 %v74
    %1129 = vmatprep.subr.mxu0 0.0
    %1130 = vmatpush1.msra.mxu0 %v75
    %1131 = vmatprep.subr.mxu0 0.0
    %1132 = vmatpush1.msra.mxu0 %v76
    %1133 = vmatprep.subr.mxu0 0.0
    %1134 = vmatpush1.msra.mxu0 %v77
    %1135 = vmatprep.subr.mxu0 0.0
    %1136 = vmatpush1.msra.mxu0 %v78
    %1137 = vmatprep.subr.mxu0 0.0
    %1138 = vmatpush1.msra.mxu0 %v79
    %1139 = vmatprep.subr.mxu0 0.0
    %1140 = vmatpush1.msra.mxu0 %v80
    %1141 = vmatprep.subr.mxu0 0.0
    %1142 = vmatpush1.msra.mxu0 %v81
    %1143 = vmatprep.subr.mxu0 0.0
    %1144 = vmatpush1.msra.mxu0 %v82
    %1145 = vmatprep.subr.mxu0 0.0
    %1146 = vmatpush1.msra.mxu0 %v83
    %1147 = vmatprep.subr.mxu0 0.0
    %1148 = vmatpush1.msra.mxu0 %v84
    %1149 = vmatprep.subr.mxu0 0.0
    %1150 = vmatpush1.msra.mxu0 %v85
    %1151 = vmatprep.subr.mxu0 0.0
    %1152 = vmatpush1.msra.mxu0 %v86
    %1153 = vmatprep.subr.mxu0 0.0
    %1154 = vmatpush1.msra.mxu0 %v87
    %1155 = vmatprep.subr.mxu0 0.0
    %1156 = vmatpush1.msra.mxu0 %v88
    %1157 = vmatprep.subr.mxu0 0.0
    %1158 = vmatpush1.msra.mxu0 %v89
    %1159 = vmatprep.subr.mxu0 0.0
    %1160 = vmatpush1.msra.mxu0 %v90
    %1161 = vmatprep.subr.mxu0 0.0
    %1162 = vmatpush1.msra.mxu0 %v91
    %1163 = vmatprep.mubr.f32.mxu0 %v1090
    %1164 = vmatmul.mubr.f32.gmra.mrb[0].mxu0 %v1089
    %v1165 = vpop.f32.mrb[0].mxu0
    %v1166 = vadd.f32 %v1098, %v1165
    %v1167 = vpop.f32.mrb[0].mxu0
    %1168 = vdwg.mxu0
    %1169 = vmatprep.subr.mxu0 0.0
    %1170 = vmatpush1.msra.mxu0 %v92
    %1171 = vmatprep.subr.mxu0 0.0
    %1172 = vmatpush1.msra.mxu0 %v93
    %1173 = vmatprep.subr.mxu0 0.0
    %1174 = vmatpush1.msra.mxu0 %v94
    %1175 = vmatprep.subr.mxu0 0.0
    %1176 = vmatpush1.msra.mxu0 %v95
    %1177 = vmatprep.subr.mxu0 0.0
    %1178 = vmatpush1.msra.mxu0 %v96
    %1179 = vmatprep.subr.mxu0 0.0
    %1180 = vmatpush1.msra.mxu0 %v97
    %1181 = vmatprep.subr.mxu0 0.0
    %1182 = vmatpush1.msra.mxu0 %v98
    %1183 = vmatprep.subr.mxu0 0.0
    %1184 = vmatpush1.msra.mxu0 %v99
    %1185 = vmatprep.subr.mxu0 0.0
    %1186 = vmatpush1.msra.mxu0 %v100
    %1187 = vmatprep.subr.mxu0 0.0
    %1188 = vmatpush1.msra.mxu0 %v101
    %1189 = vmatprep.subr.mxu0 0.0
    %1190 = vmatpush1.msra.mxu0 %v102
    %1191 = vmatprep.subr.mxu0 0.0
    %1192 = vmatpush1.msra.mxu0 %v103
    %1193 = vmatprep.subr.mxu0 0.0
    %1194 = vmatpush1.msra.mxu0 %v104
    %1195 = vmatprep.subr.mxu0 0.0
    %1196 = vmatpush1.msra.mxu0 %v105
    %1197 = vmatprep.subr.mxu0 0.0
    %1198 = vmatpush1.msra.mxu0 %v106
    %1199 = vmatprep.subr.mxu0 0.0
    %1200 = vmatpush1.msra.mxu0 %v107
    %1201 = vmatprep.subr.mxu0 0.0
    %1202 = vmatpush1.msra.mxu0 %v108
    %1203 = vmatprep.subr.mxu0 0.0
    %1204 = vmatpush1.msra.mxu0 %v109
    %1205 = vmatprep.subr.mxu0 0.0
    %1206 = vmatpush1.msra.mxu0 %v110
    %1207 = vmatprep.subr.mxu0 0.0
    %1208 = vmatpush1.msra.mxu0 %v111
    %1209 = vmatprep.subr.mxu0 0.0
    %1210 = vmatpush1.msra.mxu0 %v112
    %1211 = vmatprep.subr.mxu0 0.0
    %1212 = vmatpush1.msra.mxu0 %v113
    %1213 = vmatprep.subr.mxu0 0.0
    %1214 = vmatpush1.msra.mxu0 %v114
    %1215 = vmatprep.subr.mxu0 0.0
    %1216 = vmatpush1.msra.mxu0 %v115
    %1217 = vmatprep.subr.mxu0 0.0
    %1218 = vmatpush1.msra.mxu0 %v116
    %1219 = vmatprep.subr.mxu0 0.0
    %1220 = vmatpush1.msra.mxu0 %v117
    %1221 = vmatprep.subr.mxu0 0.0
    %1222 = vmatpush1.msra.mxu0 %v118
    %1223 = vmatprep.subr.mxu0 0.0
    %1224 = vmatpush1.msra.mxu0 %v119
    %1225 = vmatprep.subr.mxu0 0.0
    %1226 = vmatpush1.msra.mxu0 %v120
    %1227 = vmatprep.subr.mxu0 0.0
    %1228 = vmatpush1.msra.mxu0 %v121
    %1229 = vmatprep.subr.mxu0 0.0
    %1230 = vmatpush1.msra.mxu0 %v122
    %1231 = vmatprep.subr.mxu0 0.0
    %1232 = vmatpush1.msra.mxu0 %v123
    %1233 = vmatprep.mubr.f32.mxu0 %v1092
    %1234 = vmatmul.mubr.f32.gmra.mrb[0].mxu0 %v1091
    %v1235 = vpop.f32.mrb[0].mxu0
    %v1236 = vadd.f32 %v1166, %v1235
    %v1237 = vpop.f32.mrb[0].mxu0
    %1238 = vdwg.mxu0
    %1239 = vmatprep.subr.mxu0 0.0
    %1240 = vmatpush1.msra.mxu0 %v124
    %1241 = vmatprep.subr.mxu0 0.0
    %1242 = vmatpush1.msra.mxu0 %v125
    %1243 = vmatprep.subr.mxu0 0.0
    %1244 = vmatpush1.msra.mxu0 %v126
    %1245 = vmatprep.subr.mxu0 0.0
    %1246 = vmatpush1.msra.mxu0 %v127
    %1247 = vmatprep.subr.mxu0 0.0
    %1248 = vmatpush1.msra.mxu0 %v128
    %1249 = vmatprep.subr.mxu0 0.0
    %1250 = vmatpush1.msra.mxu0 %v129
    %1251 = vmatprep.subr.mxu0 0.0
    %1252 = vmatpush1.msra.mxu0 %v130
    %1253 = vmatprep.subr.mxu0 0.0
    %1254 = vmatpush1.msra.mxu0 %v131
    %1255 = vmatprep.subr.mxu0 0.0
    %1256 = vmatpush1.msra.mxu0 %v132
    %1257 = vmatprep.subr.mxu0 0.0
    %1258 = vmatpush1.msra.mxu0 %v133
    %1259 = vmatprep.subr.mxu0 0.0
    %1260 = vmatpush1.msra.mxu0 %v134
    %1261 = vmatprep.subr.mxu0 0.0
    %1262 = vmatpush1.msra.mxu0 %v135
    %1263 = vmatprep.subr.mxu0 0.0
    %1264 = vmatpush1.msra.mxu0 %v136
    %1265 = vmatprep.subr.mxu0 0.0
    %1266 = vmatpush1.msra.mxu0 %v137
    %1267 = vmatprep.subr.mxu0 0.0
    %1268 = vmatpush1.msra.mxu0 %v138
    %1269 = vmatprep.subr.mxu0 0.0
    %1270 = vmatpush1.msra.mxu0 %v139
    %1271 = vmatprep.subr.mxu0 0.0
    %1272 = vmatpush1.msra.mxu0 %v140
    %1273 = vmatprep.subr.mxu0 0.0
    %1274 = vmatpush1.msra.mxu0 %v141
    %1275 = vmatprep.subr.mxu0 0.0
    %1276 = vmatpush1.msra.mxu0 %v142
    %1277 = vmatprep.subr.mxu0 0.0
    %1278 = vmatpush1.msra.mxu0 %v143
    %1279 = vmatprep.subr.mxu0 0.0
    %1280 = vmatpush1.msra.mxu0 %v144
    %1281 = vmatprep.subr.mxu0 0.0
    %1282 = vmatpush1.msra.mxu0 %v145
    %1283 = vmatprep.subr.mxu0 0.0
    %1284 = vmatpush1.msra.mxu0 %v146
    %1285 = vmatprep.subr.mxu0 0.0
    %1286 = vmatpush1.msra.mxu0 %v147
    %1287 = vmatprep.subr.mxu0 0.0
    %1288 = vmatpush1.msra.mxu0 %v148
    %1289 = vmatprep.subr.mxu0 0.0
    %1290 = vmatpush1.msra.mxu0 %v149
    %1291 = vmatprep.subr.mxu0 0.0
    %1292 = vmatpush1.msra.mxu0 %v150
    %1293 = vmatprep.subr.mxu0 0.0
    %1294 = vmatpush1.msra.mxu0 %v151
    %1295 = vmatprep.subr.mxu0 0.0
    %1296 = vmatpush1.msra.mxu0 %v152
    %1297 = vmatprep.subr.mxu0 0.0
    %1298 = vmatpush1.msra.mxu0 %v153
    %1299 = vmatprep.subr.mxu0 0.0
    %1300 = vmatpush1.msra.mxu0 %v154
    %1301 = vmatprep.subr.mxu0 0.0
    %1302 = vmatpush1.msra.mxu0 %v155
    %1303 = vmatprep.mubr.f32.mxu0 %v1094
    %1304 = vmatmul.mubr.f32.gmra.mrb[0].mxu0 %v1093
    %v1305 = vpop.f32.mrb[0].mxu0
    %v1306 = vadd.f32 %v1236, %v1305
    %v1307 = vpop.f32.mrb[0].mxu0
    %1308 = vdwg.mxu0
    %1309 = vmatprep.subr.mxu0 0.0
    %1310 = vmatpush1.msra.mxu0 %v156
    %1311 = vmatprep.subr.mxu0 0.0
    %1312 = vmatpush1.msra.mxu0 %v157
    %1313 = vmatprep.subr.mxu0 0.0
    %1314 = vmatpush1.msra.mxu0 %v158
    %1315 = vmatprep.subr.mxu0 0.0
    %1316 = vmatpush1.msra.mxu0 %v159
    %1317 = vmatprep.subr.mxu0 0.0
    %1318 = vmatpush1.msra.mxu0 %v160
    %1319 = vmatprep.subr.mxu0 0.0
    %1320 = vmatpush1.msra.mxu0 %v161
    %1321 = vmatprep.subr.mxu0 0.0
    %1322 = vmatpush1.msra.mxu0 %v162
    %1323 = vmatprep.subr.mxu0 0.0
    %1324 = vmatpush1.msra.mxu0 %v163
    %1325 = vmatprep.subr.mxu0 0.0
    %1326 = vmatpush1.msra.mxu0 %v164
    %1327 = vmatprep.subr.mxu0 0.0
    %1328 = vmatpush1.msra.mxu0 %v165
    %1329 = vmatprep.subr.mxu0 0.0
    %1330 = vmatpush1.msra.mxu0 %v166
    %1331 = vmatprep.subr.mxu0 0.0
    %1332 = vmatpush1.msra.mxu0 %v167
    %1333 = vmatprep.subr.mxu0 0.0
    %1334 = vmatpush1.msra.mxu0 %v168
    %1335 = vmatprep.subr.mxu0 0.0
    %1336 = vmatpush1.msra.mxu0 %v169
    %1337 = vmatprep.subr.mxu0 0.0
    %1338 = vmatpush1.msra.mxu0 %v170
    %1339 = vmatprep.subr.mxu0 0.0
    %1340 = vmatpush1.msra.mxu0 %v171
    %1341 = vmatprep.subr.mxu0 0.0
    %1342 = vmatpush1.msra.mxu0 %v172
    %1343 = vmatprep.subr.mxu0 0.0
    %1344 = vmatpush1.msra.mxu0 %v173
    %1345 = vmatprep.subr.mxu0 0.0
    %1346 = vmatpush1.msra.mxu0 %v174
    %1347 = vmatprep.subr.mxu0 0.0
    %1348 = vmatpush1.msra.mxu0 %v175
    %1349 = vmatprep.subr.mxu0 0.0
    %1350 = vmatpush1.msra.mxu0 %v176
    %1351 = vmatprep.subr.mxu0 0.0
    %1352 = vmatpush1.msra.mxu0 %v177
    %1353 = vmatprep.subr.mxu0 0.0
    %1354 = vmatpush1.msra.mxu0 %v178
    %1355 = vmatprep.subr.mxu0 0.0
    %1356 = vmatpush1.msra.mxu0 %v179
    %1357 = vmatprep.subr.mxu0 0.0
    %1358 = vmatpush1.msra.mxu0 %v180
    %1359 = vmatprep.subr.mxu0 0.0
    %1360 = vmatpush1.msra.mxu0 %v181
    %1361 = vmatprep.subr.mxu0 0.0
    %1362 = vmatpush1.msra.mxu0 %v182
    %1363 = vmatprep.subr.mxu0 0.0
    %1364 = vmatpush1.msra.mxu0 %v183
    %1365 = vmatprep.subr.mxu0 0.0
    %1366 = vmatpush1.msra.mxu0 %v184
    %1367 = vmatprep.subr.mxu0 0.0
    %1368 = vmatpush1.msra.mxu0 %v185
    %1369 = vmatprep.subr.mxu0 0.0
    %1370 = vmatpush1.msra.mxu0 %v186
    %1371 = vmatprep.subr.mxu0 0.0
    %1372 = vmatpush1.msra.mxu0 %v187
    %1373 = vmatprep.mubr.f32.mxu0 %v1096
    %1374 = vmatmul.mubr.f32.gmra.mrb[0].mxu0 %v1095
    %v1375 = vpop.f32.mrb[0].mxu0
    %v1376 = vadd.f32 %v1306, %v1375
    %v1377 = vpop.f32.mrb[0].mxu0
    %1378 = vdwg.mxu0
    %v1379 = vmul.f32 %v786, 0.8
    %v1380 = vmul.f32 %v1376, 0.2
    %v1381 = vadd.f32 %v1379, %v1380
    %s1382 = scalar_lea.vmem %s1, 2
    %v1383 = vld [vmem:[%s1382] sm:$0x3]
    %v1384 = vmul.f32 %v1383, 0.05
    %v1385 = vadd.f32 %v1381, %v1384
    %s1386 = scalar_lea.vmem [#allocation3], 2
    %1387 = vst.msk [vmem:[%s1386] sm:$0x3] %vm787, %v1385
    %v1388 = vtanh.pop %v1385
    %v1390 = vsel %vm190, %v1388, 0
    %1392 = vmatprep.subr.mxu0 %v29
    %1393 = vmatpush1.msra.mxu0 %v28
    %1394 = vmatprep.subr.mxu0 %v37
    %1395 = vmatpush1.msra.mxu0 %v36
    %1396 = vmatprep.subr.mxu0 %v45
    %1397 = vmatpush1.msra.mxu0 %v44
    %1398 = vmatprep.subr.mxu0 %v53
    %1399 = vmatpush1.msra.mxu0 %v52
    %1400 = vmatprep.subr.mxu0 0.0
    %1401 = vmatpush1.msra.mxu0 0.0
    %1402 = vmatprep.subr.mxu0 0.0
    %1403 = vmatpush1.msra.mxu0 0.0
    %1404 = vmatprep.subr.mxu0 0.0
    %1405 = vmatpush1.msra.mxu0 0.0
    %1406 = vmatprep.subr.mxu0 0.0
    %1407 = vmatpush1.msra.mxu0 0.0
    %1408 = vmatprep.subr.mxu0 0.0
    %1409 = vmatpush1.msra.mxu0 0.0
    %1410 = vmatprep.subr.mxu0 0.0
    %1411 = vmatpush1.msra.mxu0 0.0
    %1412 = vmatprep.subr.mxu0 0.0
    %1413 = vmatpush1.msra.mxu0 0.0
    %1414 = vmatprep.subr.mxu0 0.0
    %1415 = vmatpush1.msra.mxu0 0.0
    %1416 = vmatprep.subr.mxu0 0.0
    %1417 = vmatpush1.msra.mxu0 0.0
    %1418 = vmatprep.subr.mxu0 0.0
    %1419 = vmatpush1.msra.mxu0 0.0
    %1420 = vmatprep.subr.mxu0 0.0
    %1421 = vmatpush1.msra.mxu0 0.0
    %1422 = vmatprep.subr.mxu0 0.0
    %1423 = vmatpush1.msra.mxu0 0.0
    %1424 = vmatprep.subr.mxu0 0.0
    %1425 = vmatpush1.msra.mxu0 0.0
    %1426 = vmatprep.subr.mxu0 0.0
    %1427 = vmatpush1.msra.mxu0 0.0
    %1428 = vmatprep.subr.mxu0 0.0
    %1429 = vmatpush1.msra.mxu0 0.0
    %1430 = vmatprep.subr.mxu0 0.0
    %1431 = vmatpush1.msra.mxu0 0.0
    %1432 = vmatprep.subr.mxu0 0.0
    %1433 = vmatpush1.msra.mxu0 0.0
    %1434 = vmatprep.subr.mxu0 0.0
    %1435 = vmatpush1.msra.mxu0 0.0
    %1436 = vmatprep.subr.mxu0 0.0
    %1437 = vmatpush1.msra.mxu0 0.0
    %1438 = vmatprep.subr.mxu0 0.0
    %1439 = vmatpush1.msra.mxu0 0.0
    %1440 = vmatprep.subr.mxu0 0.0
    %1441 = vmatpush1.msra.mxu0 0.0
    %1442 = vmatprep.subr.mxu0 0.0
    %1443 = vmatpush1.msra.mxu0 0.0
    %1444 = vmatprep.subr.mxu0 0.0
    %1445 = vmatpush1.msra.mxu0 0.0
    %1446 = vmatprep.subr.mxu0 0.0
    %1447 = vmatpush1.msra.mxu0 0.0
    %1448 = vmatprep.subr.mxu0 0.0
    %1449 = vmatpush1.msra.mxu0 0.0
    %1450 = vmatprep.subr.mxu0 0.0
    %1451 = vmatpush1.msra.mxu0 0.0
    %1452 = vmatprep.subr.mxu0 0.0
    %1453 = vmatpush1.msra.mxu0 0.0
    %1454 = vmatprep.subr.mxu0 0.0
    %1455 = vmatpush1.msra.mxu0 0.0
    %1456 = vmatprep.mubr.f32.mxu0 0.0
    %1457 = vmatmul.mubr.f32.gmra.mrb[0].mxu0 %v1390
    %v1458 = vpop.f32.mrb[0].mxu0
    %v1459 = vadd.f32 0.0, %v1458
    %v1460 = vpop.f32.mrb[0].mxu0
    %v1461 = vadd.f32 0.0, %v1460
    %1462 = vdwg.mxu0
    %1463 = vmatprep.subr.mxu0 %v31
    %1464 = vmatpush1.msra.mxu0 %v30
    %1465 = vmatprep.subr.mxu0 %v39
    %1466 = vmatpush1.msra.mxu0 %v38
    %1467 = vmatprep.subr.mxu0 %v47
    %1468 = vmatpush1.msra.mxu0 %v46
    %1469 = vmatprep.subr.mxu0 %v55
    %1470 = vmatpush1.msra.mxu0 %v54
    %1471 = vmatprep.subr.mxu0 0.0
    %1472 = vmatpush1.msra.mxu0 0.0
    %1473 = vmatprep.subr.mxu0 0.0
    %1474 = vmatpush1.msra.mxu0 0.0
    %1475 = vmatprep.subr.mxu0 0.0
    %1476 = vmatpush1.msra.mxu0 0.0
    %1477 = vmatprep.subr.mxu0 0.0
    %1478 = vmatpush1.msra.mxu0 0.0
    %1479 = vmatprep.subr.mxu0 0.0
    %1480 = vmatpush1.msra.mxu0 0.0
    %1481 = vmatprep.subr.mxu0 0.0
    %1482 = vmatpush1.msra.mxu0 0.0
    %1483 = vmatprep.subr.mxu0 0.0
    %1484 = vmatpush1.msra.mxu0 0.0
    %1485 = vmatprep.subr.mxu0 0.0
    %1486 = vmatpush1.msra.mxu0 0.0
    %1487 = vmatprep.subr.mxu0 0.0
    %1488 = vmatpush1.msra.mxu0 0.0
    %1489 = vmatprep.subr.mxu0 0.0
    %1490 = vmatpush1.msra.mxu0 0.0
    %1491 = vmatprep.subr.mxu0 0.0
    %1492 = vmatpush1.msra.mxu0 0.0
    %1493 = vmatprep.subr.mxu0 0.0
    %1494 = vmatpush1.msra.mxu0 0.0
    %1495 = vmatprep.subr.mxu0 0.0
    %1496 = vmatpush1.msra.mxu0 0.0
    %1497 = vmatprep.subr.mxu0 0.0
    %1498 = vmatpush1.msra.mxu0 0.0
    %1499 = vmatprep.subr.mxu0 0.0
    %1500 = vmatpush1.msra.mxu0 0.0
    %1501 = vmatprep.subr.mxu0 0.0
    %1502 = vmatpush1.msra.mxu0 0.0
    %1503 = vmatprep.subr.mxu0 0.0
    %1504 = vmatpush1.msra.mxu0 0.0
    %1505 = vmatprep.subr.mxu0 0.0
    %1506 = vmatpush1.msra.mxu0 0.0
    %1507 = vmatprep.subr.mxu0 0.0
    %1508 = vmatpush1.msra.mxu0 0.0
    %1509 = vmatprep.subr.mxu0 0.0
    %1510 = vmatpush1.msra.mxu0 0.0
    %1511 = vmatprep.subr.mxu0 0.0
    %1512 = vmatpush1.msra.mxu0 0.0
    %1513 = vmatprep.subr.mxu0 0.0
    %1514 = vmatpush1.msra.mxu0 0.0
    %1515 = vmatprep.subr.mxu0 0.0
    %1516 = vmatpush1.msra.mxu0 0.0
    %1517 = vmatprep.subr.mxu0 0.0
    %1518 = vmatpush1.msra.mxu0 0.0
    %1519 = vmatprep.subr.mxu0 0.0
    %1520 = vmatpush1.msra.mxu0 0.0
    %1521 = vmatprep.subr.mxu0 0.0
    %1522 = vmatpush1.msra.mxu0 0.0
    %1523 = vmatprep.subr.mxu0 0.0
    %1524 = vmatpush1.msra.mxu0 0.0
    %1525 = vmatprep.subr.mxu0 0.0
    %1526 = vmatpush1.msra.mxu0 0.0
    %1527 = vmatprep.mubr.f32.mxu0 0.0
    %1528 = vmatmul.mubr.f32.gmra.mrb[0].mxu0 %v1390
    %v1529 = vpop.f32.mrb[0].mxu0
    %v1530 = vadd.f32 0.0, %v1529
    %v1531 = vpop.f32.mrb[0].mxu0
    %v1532 = vadd.f32 0.0, %v1531
    %1533 = vdwg.mxu0
    %1534 = vmatprep.subr.mxu0 %v33
    %1535 = vmatpush1.msra.mxu0 %v32
    %1536 = vmatprep.subr.mxu0 %v41
    %1537 = vmatpush1.msra.mxu0 %v40
    %1538 = vmatprep.subr.mxu0 %v49
    %1539 = vmatpush1.msra.mxu0 %v48
    %1540 = vmatprep.subr.mxu0 %v57
    %1541 = vmatpush1.msra.mxu0 %v56
    %1542 = vmatprep.subr.mxu0 0.0
    %1543 = vmatpush1.msra.mxu0 0.0
    %1544 = vmatprep.subr.mxu0 0.0
    %1545 = vmatpush1.msra.mxu0 0.0
    %1546 = vmatprep.subr.mxu0 0.0
    %1547 = vmatpush1.msra.mxu0 0.0
    %1548 = vmatprep.subr.mxu0 0.0
    %1549 = vmatpush1.msra.mxu0 0.0
    %1550 = vmatprep.subr.mxu0 0.0
    %1551 = vmatpush1.msra.mxu0 0.0
    %1552 = vmatprep.subr.mxu0 0.0
    %1553 = vmatpush1.msra.mxu0 0.0
    %1554 = vmatprep.subr.mxu0 0.0
    %1555 = vmatpush1.msra.mxu0 0.0
    %1556 = vmatprep.subr.mxu0 0.0
    %1557 = vmatpush1.msra.mxu0 0.0
    %1558 = vmatprep.subr.mxu0 0.0
    %1559 = vmatpush1.msra.mxu0 0.0
    %1560 = vmatprep.subr.mxu0 0.0
    %1561 = vmatpush1.msra.mxu0 0.0
    %1562 = vmatprep.subr.mxu0 0.0
    %1563 = vmatpush1.msra.mxu0 0.0
    %1564 = vmatprep.subr.mxu0 0.0
    %1565 = vmatpush1.msra.mxu0 0.0
    %1566 = vmatprep.subr.mxu0 0.0
    %1567 = vmatpush1.msra.mxu0 0.0
    %1568 = vmatprep.subr.mxu0 0.0
    %1569 = vmatpush1.msra.mxu0 0.0
    %1570 = vmatprep.subr.mxu0 0.0
    %1571 = vmatpush1.msra.mxu0 0.0
    %1572 = vmatprep.subr.mxu0 0.0
    %1573 = vmatpush1.msra.mxu0 0.0
    %1574 = vmatprep.subr.mxu0 0.0
    %1575 = vmatpush1.msra.mxu0 0.0
    %1576 = vmatprep.subr.mxu0 0.0
    %1577 = vmatpush1.msra.mxu0 0.0
    %1578 = vmatprep.subr.mxu0 0.0
    %1579 = vmatpush1.msra.mxu0 0.0
    %1580 = vmatprep.subr.mxu0 0.0
    %1581 = vmatpush1.msra.mxu0 0.0
    %1582 = vmatprep.subr.mxu0 0.0
    %1583 = vmatpush1.msra.mxu0 0.0
    %1584 = vmatprep.subr.mxu0 0.0
    %1585 = vmatpush1.msra.mxu0 0.0
    %1586 = vmatprep.subr.mxu0 0.0
    %1587 = vmatpush1.msra.mxu0 0.0
    %1588 = vmatprep.subr.mxu0 0.0
    %1589 = vmatpush1.msra.mxu0 0.0
    %1590 = vmatprep.subr.mxu0 0.0
    %1591 = vmatpush1.msra.mxu0 0.0
    %1592 = vmatprep.subr.mxu0 0.0
    %1593 = vmatpush1.msra.mxu0 0.0
    %1594 = vmatprep.subr.mxu0 0.0
    %1595 = vmatpush1.msra.mxu0 0.0
    %1596 = vmatprep.subr.mxu0 0.0
    %1597 = vmatpush1.msra.mxu0 0.0
    %1598 = vmatprep.mubr.f32.mxu0 0.0
    %1599 = vmatmul.mubr.f32.gmra.mrb[0].mxu0 %v1390
    %v1600 = vpop.f32.mrb[0].mxu0
    %v1601 = vadd.f32 0.0, %v1600
    %v1602 = vpop.f32.mrb[0].mxu0
    %v1603 = vadd.f32 0.0, %v1602
    %1604 = vdwg.mxu0
    %1605 = vmatprep.subr.mxu0 %v35
    %1606 = vmatpush1.msra.mxu0 %v34
    %1607 = vmatprep.subr.mxu0 %v43
    %1608 = vmatpush1.msra.mxu0 %v42
    %1609 = vmatprep.subr.mxu0 %v51
    %1610 = vmatpush1.msra.mxu0 %v50
    %1611 = vmatprep.subr.mxu0 %v59
    %1612 = vmatpush1.msra.mxu0 %v58
    %1613 = vmatprep.subr.mxu0 0.0
    %1614 = vmatpush1.msra.mxu0 0.0
    %1615 = vmatprep.subr.mxu0 0.0
    %1616 = vmatpush1.msra.mxu0 0.0
    %1617 = vmatprep.subr.mxu0 0.0
    %1618 = vmatpush1.msra.mxu0 0.0
    %1619 = vmatprep.subr.mxu0 0.0
    %1620 = vmatpush1.msra.mxu0 0.0
    %1621 = vmatprep.subr.mxu0 0.0
    %1622 = vmatpush1.msra.mxu0 0.0
    %1623 = vmatprep.subr.mxu0 0.0
    %1624 = vmatpush1.msra.mxu0 0.0
    %1625 = vmatprep.subr.mxu0 0.0
    %1626 = vmatpush1.msra.mxu0 0.0
    %1627 = vmatprep.subr.mxu0 0.0
    %1628 = vmatpush1.msra.mxu0 0.0
    %1629 = vmatprep.subr.mxu0 0.0
    %1630 = vmatpush1.msra.mxu0 0.0
    %1631 = vmatprep.subr.mxu0 0.0
    %1632 = vmatpush1.msra.mxu0 0.0
    %1633 = vmatprep.subr.mxu0 0.0
    %1634 = vmatpush1.msra.mxu0 0.0
    %1635 = vmatprep.subr.mxu0 0.0
    %1636 = vmatpush1.msra.mxu0 0.0
    %1637 = vmatprep.subr.mxu0 0.0
    %1638 = vmatpush1.msra.mxu0 0.0
    %1639 = vmatprep.subr.mxu0 0.0
    %1640 = vmatpush1.msra.mxu0 0.0
    %1641 = vmatprep.subr.mxu0 0.0
    %1642 = vmatpush1.msra.mxu0 0.0
    %1643 = vmatprep.subr.mxu0 0.0
    %1644 = vmatpush1.msra.mxu0 0.0
    %1645 = vmatprep.subr.mxu0 0.0
    %1646 = vmatpush1.msra.mxu0 0.0
    %1647 = vmatprep.subr.mxu0 0.0
    %1648 = vmatpush1.msra.mxu0 0.0
    %1649 = vmatprep.subr.mxu0 0.0
    %1650 = vmatpush1.msra.mxu0 0.0
    %1651 = vmatprep.subr.mxu0 0.0
    %1652 = vmatpush1.msra.mxu0 0.0
    %1653 = vmatprep.subr.mxu0 0.0
    %1654 = vmatpush1.msra.mxu0 0.0
    %1655 = vmatprep.subr.mxu0 0.0
    %1656 = vmatpush1.msra.mxu0 0.0
    %1657 = vmatprep.subr.mxu0 0.0
    %1658 = vmatpush1.msra.mxu0 0.0
    %1659 = vmatprep.subr.mxu0 0.0
    %1660 = vmatpush1.msra.mxu0 0.0
    %1661 = vmatprep.subr.mxu0 0.0
    %1662 = vmatpush1.msra.mxu0 0.0
    %1663 = vmatprep.subr.mxu0 0.0
    %1664 = vmatpush1.msra.mxu0 0.0
    %1665 = vmatprep.subr.mxu0 0.0
    %1666 = vmatpush1.msra.mxu0 0.0
    %1667 = vmatprep.subr.mxu0 0.0
    %1668 = vmatpush1.msra.mxu0 0.0
    %1669 = vmatprep.mubr.f32.mxu0 0.0
    %1670 = vmatmul.mubr.f32.gmra.mrb[0].mxu0 %v1390
    %v1671 = vpop.f32.mrb[0].mxu0
    %v1672 = vadd.f32 0.0, %v1671
    %v1673 = vpop.f32.mrb[0].mxu0
    %v1674 = vadd.f32 0.0, %v1673
    %1675 = vdwg.mxu0
    %1676 = vrot.lane.b32.xlu0 %v1388, 32
    %v1677 = vpop.permute.xlu0 %1676
    %1679 = vrot.lane.b32.xlu0 %v1388, 64
    %v1680 = vpop.permute.xlu0 %1679
    %1682 = vrot.lane.b32.xlu0 %v1388, 96
    %v1683 = vpop.permute.xlu0 %1682
    %v1685 = vsel %vm190, %v1388, %v1677
    %v1686 = vsel %vm488, %v1685, %v1680
    %v1687 = vsel %vm490, %v1686, %v1683
    %v1688 = vmul.f32 %v1459, %v1687
    %v1689 = vmul.f32 %v1461, %v1687
    %v1690 = vmul.f32 %v1530, %v1687
    %v1691 = vmul.f32 %v1532, %v1687
    %v1692 = vmul.f32 %v1601, %v1687
    %v1693 = vmul.f32 %v1603, %v1687
    %v1694 = vmul.f32 %v1672, %v1687
    %v1695 = vmul.f32 %v1674, %v1687
    %s1696 = scalar_lea.vmem %s0, 4
    %v1697 = vld [vmem:[%s1696] sm:$0x3]
    %1698 = vmatprep.subr.mxu0 0.0
    %1699 = vmatpush1.msra.mxu0 %v60
    %1700 = vmatprep.subr.mxu0 0.0
    %1701 = vmatpush1.msra.mxu0 %v61
    %1702 = vmatprep.subr.mxu0 0.0
    %1703 = vmatpush1.msra.mxu0 %v62
    %1704 = vmatprep.subr.mxu0 0.0
    %1705 = vmatpush1.msra.mxu0 %v63
    %1706 = vmatprep.subr.mxu0 0.0
    %1707 = vmatpush1.msra.mxu0 %v64
    %1708 = vmatprep.subr.mxu0 0.0
    %1709 = vmatpush1.msra.mxu0 %v65
    %1710 = vmatprep.subr.mxu0 0.0
    %1711 = vmatpush1.msra.mxu0 %v66
    %1712 = vmatprep.subr.mxu0 0.0
    %1713 = vmatpush1.msra.mxu0 %v67
    %1714 = vmatprep.subr.mxu0 0.0
    %1715 = vmatpush1.msra.mxu0 %v68
    %1716 = vmatprep.subr.mxu0 0.0
    %1717 = vmatpush1.msra.mxu0 %v69
    %1718 = vmatprep.subr.mxu0 0.0
    %1719 = vmatpush1.msra.mxu0 %v70
    %1720 = vmatprep.subr.mxu0 0.0
    %1721 = vmatpush1.msra.mxu0 %v71
    %1722 = vmatprep.subr.mxu0 0.0
    %1723 = vmatpush1.msra.mxu0 %v72
    %1724 = vmatprep.subr.mxu0 0.0
    %1725 = vmatpush1.msra.mxu0 %v73
    %1726 = vmatprep.subr.mxu0 0.0
    %1727 = vmatpush1.msra.mxu0 %v74
    %1728 = vmatprep.subr.mxu0 0.0
    %1729 = vmatpush1.msra.mxu0 %v75
    %1730 = vmatprep.subr.mxu0 0.0
    %1731 = vmatpush1.msra.mxu0 %v76
    %1732 = vmatprep.subr.mxu0 0.0
    %1733 = vmatpush1.msra.mxu0 %v77
    %1734 = vmatprep.subr.mxu0 0.0
    %1735 = vmatpush1.msra.mxu0 %v78
    %1736 = vmatprep.subr.mxu0 0.0
    %1737 = vmatpush1.msra.mxu0 %v79
    %1738 = vmatprep.subr.mxu0 0.0
    %1739 = vmatpush1.msra.mxu0 %v80
    %1740 = vmatprep.subr.mxu0 0.0
    %1741 = vmatpush1.msra.mxu0 %v81
    %1742 = vmatprep.subr.mxu0 0.0
    %1743 = vmatpush1.msra.mxu0 %v82
    %1744 = vmatprep.subr.mxu0 0.0
    %1745 = vmatpush1.msra.mxu0 %v83
    %1746 = vmatprep.subr.mxu0 0.0
    %1747 = vmatpush1.msra.mxu0 %v84
    %1748 = vmatprep.subr.mxu0 0.0
    %1749 = vmatpush1.msra.mxu0 %v85
    %1750 = vmatprep.subr.mxu0 0.0
    %1751 = vmatpush1.msra.mxu0 %v86
    %1752 = vmatprep.subr.mxu0 0.0
    %1753 = vmatpush1.msra.mxu0 %v87
    %1754 = vmatprep.subr.mxu0 0.0
    %1755 = vmatpush1.msra.mxu0 %v88
    %1756 = vmatprep.subr.mxu0 0.0
    %1757 = vmatpush1.msra.mxu0 %v89
    %1758 = vmatprep.subr.mxu0 0.0
    %1759 = vmatpush1.msra.mxu0 %v90
    %1760 = vmatprep.subr.mxu0 0.0
    %1761 = vmatpush1.msra.mxu0 %v91
    %1762 = vmatprep.mubr.f32.mxu0 %v1689
    %1763 = vmatmul.mubr.f32.gmra.mrb[0].mxu0 %v1688
    %v1764 = vpop.f32.mrb[0].mxu0
    %v1765 = vadd.f32 %v1697, %v1764
    %v1766 = vpop.f32.mrb[0].mxu0
    %1767 = vdwg.mxu0
    %1768 = vmatprep.subr.mxu0 0.0
    %1769 = vmatpush1.msra.mxu0 %v92
    %1770 = vmatprep.subr.mxu0 0.0
    %1771 = vmatpush1.msra.mxu0 %v93
    %1772 = vmatprep.subr.mxu0 0.0
    %1773 = vmatpush1.msra.mxu0 %v94
    %1774 = vmatprep.subr.mxu0 0.0
    %1775 = vmatpush1.msra.mxu0 %v95
    %1776 = vmatprep.subr.mxu0 0.0
    %1777 = vmatpush1.msra.mxu0 %v96
    %1778 = vmatprep.subr.mxu0 0.0
    %1779 = vmatpush1.msra.mxu0 %v97
    %1780 = vmatprep.subr.mxu0 0.0
    %1781 = vmatpush1.msra.mxu0 %v98
    %1782 = vmatprep.subr.mxu0 0.0
    %1783 = vmatpush1.msra.mxu0 %v99
    %1784 = vmatprep.subr.mxu0 0.0
    %1785 = vmatpush1.msra.mxu0 %v100
    %1786 = vmatprep.subr.mxu0 0.0
    %1787 = vmatpush1.msra.mxu0 %v101
    %1788 = vmatprep.subr.mxu0 0.0
    %1789 = vmatpush1.msra.mxu0 %v102
    %1790 = vmatprep.subr.mxu0 0.0
    %1791 = vmatpush1.msra.mxu0 %v103
    %1792 = vmatprep.subr.mxu0 0.0
    %1793 = vmatpush1.msra.mxu0 %v104
    %1794 = vmatprep.subr.mxu0 0.0
    %1795 = vmatpush1.msra.mxu0 %v105
    %1796 = vmatprep.subr.mxu0 0.0
    %1797 = vmatpush1.msra.mxu0 %v106
    %1798 = vmatprep.subr.mxu0 0.0
    %1799 = vmatpush1.msra.mxu0 %v107
    %1800 = vmatprep.subr.mxu0 0.0
    %1801 = vmatpush1.msra.mxu0 %v108
    %1802 = vmatprep.subr.mxu0 0.0
    %1803 = vmatpush1.msra.mxu0 %v109
    %1804 = vmatprep.subr.mxu0 0.0
    %1805 = vmatpush1.msra.mxu0 %v110
    %1806 = vmatprep.subr.mxu0 0.0
    %1807 = vmatpush1.msra.mxu0 %v111
    %1808 = vmatprep.subr.mxu0 0.0
    %1809 = vmatpush1.msra.mxu0 %v112
    %1810 = vmatprep.subr.mxu0 0.0
    %1811 = vmatpush1.msra.mxu0 %v113
    %1812 = vmatprep.subr.mxu0 0.0
    %1813 = vmatpush1.msra.mxu0 %v114
    %1814 = vmatprep.subr.mxu0 0.0
    %1815 = vmatpush1.msra.mxu0 %v115
    %1816 = vmatprep.subr.mxu0 0.0
    %1817 = vmatpush1.msra.mxu0 %v116
    %1818 = vmatprep.subr.mxu0 0.0
    %1819 = vmatpush1.msra.mxu0 %v117
    %1820 = vmatprep.subr.mxu0 0.0
    %1821 = vmatpush1.msra.mxu0 %v118
    %1822 = vmatprep.subr.mxu0 0.0
    %1823 = vmatpush1.msra.mxu0 %v119
    %1824 = vmatprep.subr.mxu0 0.0
    %1825 = vmatpush1.msra.mxu0 %v120
    %1826 = vmatprep.subr.mxu0 0.0
    %1827 = vmatpush1.msra.mxu0 %v121
    %1828 = vmatprep.subr.mxu0 0.0
    %1829 = vmatpush1.msra.mxu0 %v122
    %1830 = vmatprep.subr.mxu0 0.0
    %1831 = vmatpush1.msra.mxu0 %v123
    %1832 = vmatprep.mubr.f32.mxu0 %v1691
    %1833 = vmatmul.mubr.f32.gmra.mrb[0].mxu0 %v1690
    %v1834 = vpop.f32.mrb[0].mxu0
    %v1835 = vadd.f32 %v1765, %v1834
    %v1836 = vpop.f32.mrb[0].mxu0
    %1837 = vdwg.mxu0
    %1838 = vmatprep.subr.mxu0 0.0
    %1839 = vmatpush1.msra.mxu0 %v124
    %1840 = vmatprep.subr.mxu0 0.0
    %1841 = vmatpush1.msra.mxu0 %v125
    %1842 = vmatprep.subr.mxu0 0.0
    %1843 = vmatpush1.msra.mxu0 %v126
    %1844 = vmatprep.subr.mxu0 0.0
    %1845 = vmatpush1.msra.mxu0 %v127
    %1846 = vmatprep.subr.mxu0 0.0
    %1847 = vmatpush1.msra.mxu0 %v128
    %1848 = vmatprep.subr.mxu0 0.0
    %1849 = vmatpush1.msra.mxu0 %v129
    %1850 = vmatprep.subr.mxu0 0.0
    %1851 = vmatpush1.msra.mxu0 %v130
    %1852 = vmatprep.subr.mxu0 0.0
    %1853 = vmatpush1.msra.mxu0 %v131
    %1854 = vmatprep.subr.mxu0 0.0
    %1855 = vmatpush1.msra.mxu0 %v132
    %1856 = vmatprep.subr.mxu0 0.0
    %1857 = vmatpush1.msra.mxu0 %v133
    %1858 = vmatprep.subr.mxu0 0.0
    %1859 = vmatpush1.msra.mxu0 %v134
    %1860 = vmatprep.subr.mxu0 0.0
    %1861 = vmatpush1.msra.mxu0 %v135
    %1862 = vmatprep.subr.mxu0 0.0
    %1863 = vmatpush1.msra.mxu0 %v136
    %1864 = vmatprep.subr.mxu0 0.0
    %1865 = vmatpush1.msra.mxu0 %v137
    %1866 = vmatprep.subr.mxu0 0.0
    %1867 = vmatpush1.msra.mxu0 %v138
    %1868 = vmatprep.subr.mxu0 0.0
    %1869 = vmatpush1.msra.mxu0 %v139
    %1870 = vmatprep.subr.mxu0 0.0
    %1871 = vmatpush1.msra.mxu0 %v140
    %1872 = vmatprep.subr.mxu0 0.0
    %1873 = vmatpush1.msra.mxu0 %v141
    %1874 = vmatprep.subr.mxu0 0.0
    %1875 = vmatpush1.msra.mxu0 %v142
    %1876 = vmatprep.subr.mxu0 0.0
    %1877 = vmatpush1.msra.mxu0 %v143
    %1878 = vmatprep.subr.mxu0 0.0
    %1879 = vmatpush1.msra.mxu0 %v144
    %1880 = vmatprep.subr.mxu0 0.0
    %1881 = vmatpush1.msra.mxu0 %v145
    %1882 = vmatprep.subr.mxu0 0.0
    %1883 = vmatpush1.msra.mxu0 %v146
    %1884 = vmatprep.subr.mxu0 0.0
    %1885 = vmatpush1.msra.mxu0 %v147
    %1886 = vmatprep.subr.mxu0 0.0
    %1887 = vmatpush1.msra.mxu0 %v148
    %1888 = vmatprep.subr.mxu0 0.0
    %1889 = vmatpush1.msra.mxu0 %v149
    %1890 = vmatprep.subr.mxu0 0.0
    %1891 = vmatpush1.msra.mxu0 %v150
    %1892 = vmatprep.subr.mxu0 0.0
    %1893 = vmatpush1.msra.mxu0 %v151
    %1894 = vmatprep.subr.mxu0 0.0
    %1895 = vmatpush1.msra.mxu0 %v152
    %1896 = vmatprep.subr.mxu0 0.0
    %1897 = vmatpush1.msra.mxu0 %v153
    %1898 = vmatprep.subr.mxu0 0.0
    %1899 = vmatpush1.msra.mxu0 %v154
    %1900 = vmatprep.subr.mxu0 0.0
    %1901 = vmatpush1.msra.mxu0 %v155
    %1902 = vmatprep.mubr.f32.mxu0 %v1693
    %1903 = vmatmul.mubr.f32.gmra.mrb[0].mxu0 %v1692
    %v1904 = vpop.f32.mrb[0].mxu0
    %v1905 = vadd.f32 %v1835, %v1904
    %v1906 = vpop.f32.mrb[0].mxu0
    %1907 = vdwg.mxu0
    %1908 = vmatprep.subr.mxu0 0.0
    %1909 = vmatpush1.msra.mxu0 %v156
    %1910 = vmatprep.subr.mxu0 0.0
    %1911 = vmatpush1.msra.mxu0 %v157
    %1912 = vmatprep.subr.mxu0 0.0
    %1913 = vmatpush1.msra.mxu0 %v158
    %1914 = vmatprep.subr.mxu0 0.0
    %1915 = vmatpush1.msra.mxu0 %v159
    %1916 = vmatprep.subr.mxu0 0.0
    %1917 = vmatpush1.msra.mxu0 %v160
    %1918 = vmatprep.subr.mxu0 0.0
    %1919 = vmatpush1.msra.mxu0 %v161
    %1920 = vmatprep.subr.mxu0 0.0
    %1921 = vmatpush1.msra.mxu0 %v162
    %1922 = vmatprep.subr.mxu0 0.0
    %1923 = vmatpush1.msra.mxu0 %v163
    %1924 = vmatprep.subr.mxu0 0.0
    %1925 = vmatpush1.msra.mxu0 %v164
    %1926 = vmatprep.subr.mxu0 0.0
    %1927 = vmatpush1.msra.mxu0 %v165
    %1928 = vmatprep.subr.mxu0 0.0
    %1929 = vmatpush1.msra.mxu0 %v166
    %1930 = vmatprep.subr.mxu0 0.0
    %1931 = vmatpush1.msra.mxu0 %v167
    %1932 = vmatprep.subr.mxu0 0.0
    %1933 = vmatpush1.msra.mxu0 %v168
    %1934 = vmatprep.subr.mxu0 0.0
    %1935 = vmatpush1.msra.mxu0 %v169
    %1936 = vmatprep.subr.mxu0 0.0
    %1937 = vmatpush1.msra.mxu0 %v170
    %1938 = vmatprep.subr.mxu0 0.0
    %1939 = vmatpush1.msra.mxu0 %v171
    %1940 = vmatprep.subr.mxu0 0.0
    %1941 = vmatpush1.msra.mxu0 %v172
    %1942 = vmatprep.subr.mxu0 0.0
    %1943 = vmatpush1.msra.mxu0 %v173
    %1944 = vmatprep.subr.mxu0 0.0
    %1945 = vmatpush1.msra.mxu0 %v174
    %1946 = vmatprep.subr.mxu0 0.0
    %1947 = vmatpush1.msra.mxu0 %v175
    %1948 = vmatprep.subr.mxu0 0.0
    %1949 = vmatpush1.msra.mxu0 %v176
    %1950 = vmatprep.subr.mxu0 0.0
    %1951 = vmatpush1.msra.mxu0 %v177
    %1952 = vmatprep.subr.mxu0 0.0
    %1953 = vmatpush1.msra.mxu0 %v178
    %1954 = vmatprep.subr.mxu0 0.0
    %1955 = vmatpush1.msra.mxu0 %v179
    %1956 = vmatprep.subr.mxu0 0.0
    %1957 = vmatpush1.msra.mxu0 %v180
    %1958 = vmatprep.subr.mxu0 0.0
    %1959 = vmatpush1.msra.mxu0 %v181
    %1960 = vmatprep.subr.mxu0 0.0
    %1961 = vmatpush1.msra.mxu0 %v182
    %1962 = vmatprep.subr.mxu0 0.0
    %1963 = vmatpush1.msra.mxu0 %v183
    %1964 = vmatprep.subr.mxu0 0.0
    %1965 = vmatpush1.msra.mxu0 %v184
    %1966 = vmatprep.subr.mxu0 0.0
    %1967 = vmatpush1.msra.mxu0 %v185
    %1968 = vmatprep.subr.mxu0 0.0
    %1969 = vmatpush1.msra.mxu0 %v186
    %1970 = vmatprep.subr.mxu0 0.0
    %1971 = vmatpush1.msra.mxu0 %v187
    %1972 = vmatprep.mubr.f32.mxu0 %v1695
    %1973 = vmatmul.mubr.f32.gmra.mrb[0].mxu0 %v1694
    %v1974 = vpop.f32.mrb[0].mxu0
    %v1975 = vadd.f32 %v1905, %v1974
    %v1976 = vpop.f32.mrb[0].mxu0
    %1977 = vdwg.mxu0
    %v1978 = vmul.f32 %v1385, 0.8
    %v1979 = vmul.f32 %v1975, 0.2
    %v1980 = vadd.f32 %v1978, %v1979
    %s1981 = scalar_lea.vmem %s1, 4
    %v1982 = vld [vmem:[%s1981] sm:$0x3]
    %v1983 = vmul.f32 %v1982, 0.05
    %v1984 = vadd.f32 %v1980, %v1983
    %s1985 = scalar_lea.vmem [#allocation3], 4
    %1986 = vst.msk [vmem:[%s1985] sm:$0x3] %vm787, %v1984
    %v1987 = vtanh.pop %v1984
    %v1989 = vsel %vm190, %v1987, 0
    %1991 = vmatprep.subr.mxu0 %v29
    %1992 = vmatpush1.msra.mxu0 %v28
    %1993 = vmatprep.subr.mxu0 %v37
    %1994 = vmatpush1.msra.mxu0 %v36
    %1995 = vmatprep.subr.mxu0 %v45
    %1996 = vmatpush1.msra.mxu0 %v44
    %1997 = vmatprep.subr.mxu0 %v53
    %1998 = vmatpush1.msra.mxu0 %v52
    %1999 = vmatprep.subr.mxu0 0.0
    %2000 = vmatpush1.msra.mxu0 0.0
    %2001 = vmatprep.subr.mxu0 0.0
    %2002 = vmatpush1.msra.mxu0 0.0
    %2003 = vmatprep.subr.mxu0 0.0
    %2004 = vmatpush1.msra.mxu0 0.0
    %2005 = vmatprep.subr.mxu0 0.0
    %2006 = vmatpush1.msra.mxu0 0.0
    %2007 = vmatprep.subr.mxu0 0.0
    %2008 = vmatpush1.msra.mxu0 0.0
    %2009 = vmatprep.subr.mxu0 0.0
    %2010 = vmatpush1.msra.mxu0 0.0
    %2011 = vmatprep.subr.mxu0 0.0
    %2012 = vmatpush1.msra.mxu0 0.0
    %2013 = vmatprep.subr.mxu0 0.0
    %2014 = vmatpush1.msra.mxu0 0.0
    %2015 = vmatprep.subr.mxu0 0.0
    %2016 = vmatpush1.msra.mxu0 0.0
    %2017 = vmatprep.subr.mxu0 0.0
    %2018 = vmatpush1.msra.mxu0 0.0
    %2019 = vmatprep.subr.mxu0 0.0
    %2020 = vmatpush1.msra.mxu0 0.0
    %2021 = vmatprep.subr.mxu0 0.0
    %2022 = vmatpush1.msra.mxu0 0.0
    %2023 = vmatprep.subr.mxu0 0.0
    %2024 = vmatpush1.msra.mxu0 0.0
    %2025 = vmatprep.subr.mxu0 0.0
    %2026 = vmatpush1.msra.mxu0 0.0
    %2027 = vmatprep.subr.mxu0 0.0
    %2028 = vmatpush1.msra.mxu0 0.0
    %2029 = vmatprep.subr.mxu0 0.0
    %2030 = vmatpush1.msra.mxu0 0.0
    %2031 = vmatprep.subr.mxu0 0.0
    %2032 = vmatpush1.msra.mxu0 0.0
    %2033 = vmatprep.subr.mxu0 0.0
    %2034 = vmatpush1.msra.mxu0 0.0
    %2035 = vmatprep.subr.mxu0 0.0
    %2036 = vmatpush1.msra.mxu0 0.0
    %2037 = vmatprep.subr.mxu0 0.0
    %2038 = vmatpush1.msra.mxu0 0.0
    %2039 = vmatprep.subr.mxu0 0.0
    %2040 = vmatpush1.msra.mxu0 0.0
    %2041 = vmatprep.subr.mxu0 0.0
    %2042 = vmatpush1.msra.mxu0 0.0
    %2043 = vmatprep.subr.mxu0 0.0
    %2044 = vmatpush1.msra.mxu0 0.0
    %2045 = vmatprep.subr.mxu0 0.0
    %2046 = vmatpush1.msra.mxu0 0.0
    %2047 = vmatprep.subr.mxu0 0.0
    %2048 = vmatpush1.msra.mxu0 0.0
    %2049 = vmatprep.subr.mxu0 0.0
    %2050 = vmatpush1.msra.mxu0 0.0
    %2051 = vmatprep.subr.mxu0 0.0
    %2052 = vmatpush1.msra.mxu0 0.0
    %2053 = vmatprep.subr.mxu0 0.0
    %2054 = vmatpush1.msra.mxu0 0.0
    %2055 = vmatprep.mubr.f32.mxu0 0.0
    %2056 = vmatmul.mubr.f32.gmra.mrb[0].mxu0 %v1989
    %v2057 = vpop.f32.mrb[0].mxu0
    %v2058 = vadd.f32 0.0, %v2057
    %v2059 = vpop.f32.mrb[0].mxu0
    %v2060 = vadd.f32 0.0, %v2059
    %2061 = vdwg.mxu0
    %2062 = vmatprep.subr.mxu0 %v31
    %2063 = vmatpush1.msra.mxu0 %v30
    %2064 = vmatprep.subr.mxu0 %v39
    %2065 = vmatpush1.msra.mxu0 %v38
    %2066 = vmatprep.subr.mxu0 %v47
    %2067 = vmatpush1.msra.mxu0 %v46
    %2068 = vmatprep.subr.mxu0 %v55
    %2069 = vmatpush1.msra.mxu0 %v54
    %2070 = vmatprep.subr.mxu0 0.0
    %2071 = vmatpush1.msra.mxu0 0.0
    %2072 = vmatprep.subr.mxu0 0.0
    %2073 = vmatpush1.msra.mxu0 0.0
    %2074 = vmatprep.subr.mxu0 0.0
    %2075 = vmatpush1.msra.mxu0 0.0
    %2076 = vmatprep.subr.mxu0 0.0
    %2077 = vmatpush1.msra.mxu0 0.0
    %2078 = vmatprep.subr.mxu0 0.0
    %2079 = vmatpush1.msra.mxu0 0.0
    %2080 = vmatprep.subr.mxu0 0.0
    %2081 = vmatpush1.msra.mxu0 0.0
    %2082 = vmatprep.subr.mxu0 0.0
    %2083 = vmatpush1.msra.mxu0 0.0
    %2084 = vmatprep.subr.mxu0 0.0
    %2085 = vmatpush1.msra.mxu0 0.0
    %2086 = vmatprep.subr.mxu0 0.0
    %2087 = vmatpush1.msra.mxu0 0.0
    %2088 = vmatprep.subr.mxu0 0.0
    %2089 = vmatpush1.msra.mxu0 0.0
    %2090 = vmatprep.subr.mxu0 0.0
    %2091 = vmatpush1.msra.mxu0 0.0
    %2092 = vmatprep.subr.mxu0 0.0
    %2093 = vmatpush1.msra.mxu0 0.0
    %2094 = vmatprep.subr.mxu0 0.0
    %2095 = vmatpush1.msra.mxu0 0.0
    %2096 = vmatprep.subr.mxu0 0.0
    %2097 = vmatpush1.msra.mxu0 0.0
    %2098 = vmatprep.subr.mxu0 0.0
    %2099 = vmatpush1.msra.mxu0 0.0
    %2100 = vmatprep.subr.mxu0 0.0
    %2101 = vmatpush1.msra.mxu0 0.0
    %2102 = vmatprep.subr.mxu0 0.0
    %2103 = vmatpush1.msra.mxu0 0.0
    %2104 = vmatprep.subr.mxu0 0.0
    %2105 = vmatpush1.msra.mxu0 0.0
    %2106 = vmatprep.subr.mxu0 0.0
    %2107 = vmatpush1.msra.mxu0 0.0
    %2108 = vmatprep.subr.mxu0 0.0
    %2109 = vmatpush1.msra.mxu0 0.0
    %2110 = vmatprep.subr.mxu0 0.0
    %2111 = vmatpush1.msra.mxu0 0.0
    %2112 = vmatprep.subr.mxu0 0.0
    %2113 = vmatpush1.msra.mxu0 0.0
    %2114 = vmatprep.subr.mxu0 0.0
    %2115 = vmatpush1.msra.mxu0 0.0
    %2116 = vmatprep.subr.mxu0 0.0
    %2117 = vmatpush1.msra.mxu0 0.0
    %2118 = vmatprep.subr.mxu0 0.0
    %2119 = vmatpush1.msra.mxu0 0.0
    %2120 = vmatprep.subr.mxu0 0.0
    %2121 = vmatpush1.msra.mxu0 0.0
    %2122 = vmatprep.subr.mxu0 0.0
    %2123 = vmatpush1.msra.mxu0 0.0
    %2124 = vmatprep.subr.mxu0 0.0
    %2125 = vmatpush1.msra.mxu0 0.0
    %2126 = vmatprep.mubr.f32.mxu0 0.0
    %2127 = vmatmul.mubr.f32.gmra.mrb[0].mxu0 %v1989
    %v2128 = vpop.f32.mrb[0].mxu0
    %v2129 = vadd.f32 0.0, %v2128
    %v2130 = vpop.f32.mrb[0].mxu0
    %v2131 = vadd.f32 0.0, %v2130
    %2132 = vdwg.mxu0
    %2133 = vmatprep.subr.mxu0 %v33
    %2134 = vmatpush1.msra.mxu0 %v32
    %2135 = vmatprep.subr.mxu0 %v41
    %2136 = vmatpush1.msra.mxu0 %v40
    %2137 = vmatprep.subr.mxu0 %v49
    %2138 = vmatpush1.msra.mxu0 %v48
    %2139 = vmatprep.subr.mxu0 %v57
    %2140 = vmatpush1.msra.mxu0 %v56
    %2141 = vmatprep.subr.mxu0 0.0
    %2142 = vmatpush1.msra.mxu0 0.0
    %2143 = vmatprep.subr.mxu0 0.0
    %2144 = vmatpush1.msra.mxu0 0.0
    %2145 = vmatprep.subr.mxu0 0.0
    %2146 = vmatpush1.msra.mxu0 0.0
    %2147 = vmatprep.subr.mxu0 0.0
    %2148 = vmatpush1.msra.mxu0 0.0
    %2149 = vmatprep.subr.mxu0 0.0
    %2150 = vmatpush1.msra.mxu0 0.0
    %2151 = vmatprep.subr.mxu0 0.0
    %2152 = vmatpush1.msra.mxu0 0.0
    %2153 = vmatprep.subr.mxu0 0.0
    %2154 = vmatpush1.msra.mxu0 0.0
    %2155 = vmatprep.subr.mxu0 0.0
    %2156 = vmatpush1.msra.mxu0 0.0
    %2157 = vmatprep.subr.mxu0 0.0
    %2158 = vmatpush1.msra.mxu0 0.0
    %2159 = vmatprep.subr.mxu0 0.0
    %2160 = vmatpush1.msra.mxu0 0.0
    %2161 = vmatprep.subr.mxu0 0.0
    %2162 = vmatpush1.msra.mxu0 0.0
    %2163 = vmatprep.subr.mxu0 0.0
    %2164 = vmatpush1.msra.mxu0 0.0
    %2165 = vmatprep.subr.mxu0 0.0
    %2166 = vmatpush1.msra.mxu0 0.0
    %2167 = vmatprep.subr.mxu0 0.0
    %2168 = vmatpush1.msra.mxu0 0.0
    %2169 = vmatprep.subr.mxu0 0.0
    %2170 = vmatpush1.msra.mxu0 0.0
    %2171 = vmatprep.subr.mxu0 0.0
    %2172 = vmatpush1.msra.mxu0 0.0
    %2173 = vmatprep.subr.mxu0 0.0
    %2174 = vmatpush1.msra.mxu0 0.0
    %2175 = vmatprep.subr.mxu0 0.0
    %2176 = vmatpush1.msra.mxu0 0.0
    %2177 = vmatprep.subr.mxu0 0.0
    %2178 = vmatpush1.msra.mxu0 0.0
    %2179 = vmatprep.subr.mxu0 0.0
    %2180 = vmatpush1.msra.mxu0 0.0
    %2181 = vmatprep.subr.mxu0 0.0
    %2182 = vmatpush1.msra.mxu0 0.0
    %2183 = vmatprep.subr.mxu0 0.0
    %2184 = vmatpush1.msra.mxu0 0.0
    %2185 = vmatprep.subr.mxu0 0.0
    %2186 = vmatpush1.msra.mxu0 0.0
    %2187 = vmatprep.subr.mxu0 0.0
    %2188 = vmatpush1.msra.mxu0 0.0
    %2189 = vmatprep.subr.mxu0 0.0
    %2190 = vmatpush1.msra.mxu0 0.0
    %2191 = vmatprep.subr.mxu0 0.0
    %2192 = vmatpush1.msra.mxu0 0.0
    %2193 = vmatprep.subr.mxu0 0.0
    %2194 = vmatpush1.msra.mxu0 0.0
    %2195 = vmatprep.subr.mxu0 0.0
    %2196 = vmatpush1.msra.mxu0 0.0
    %2197 = vmatprep.mubr.f32.mxu0 0.0
    %2198 = vmatmul.mubr.f32.gmra.mrb[0].mxu0 %v1989
    %v2199 = vpop.f32.mrb[0].mxu0
    %v2200 = vadd.f32 0.0, %v2199
    %v2201 = vpop.f32.mrb[0].mxu0
    %v2202 = vadd.f32 0.0, %v2201
    %2203 = vdwg.mxu0
    %2204 = vmatprep.subr.mxu0 %v35
    %2205 = vmatpush1.msra.mxu0 %v34
    %2206 = vmatprep.subr.mxu0 %v43
    %2207 = vmatpush1.msra.mxu0 %v42
    %2208 = vmatprep.subr.mxu0 %v51
    %2209 = vmatpush1.msra.mxu0 %v50
    %2210 = vmatprep.subr.mxu0 %v59
    %2211 = vmatpush1.msra.mxu0 %v58
    %2212 = vmatprep.subr.mxu0 0.0
    %2213 = vmatpush1.msra.mxu0 0.0
    %2214 = vmatprep.subr.mxu0 0.0
    %2215 = vmatpush1.msra.mxu0 0.0
    %2216 = vmatprep.subr.mxu0 0.0
    %2217 = vmatpush1.msra.mxu0 0.0
    %2218 = vmatprep.subr.mxu0 0.0
    %2219 = vmatpush1.msra.mxu0 0.0
    %2220 = vmatprep.subr.mxu0 0.0
    %2221 = vmatpush1.msra.mxu0 0.0
    %2222 = vmatprep.subr.mxu0 0.0
    %2223 = vmatpush1.msra.mxu0 0.0
    %2224 = vmatprep.subr.mxu0 0.0
    %2225 = vmatpush1.msra.mxu0 0.0
    %2226 = vmatprep.subr.mxu0 0.0
    %2227 = vmatpush1.msra.mxu0 0.0
    %2228 = vmatprep.subr.mxu0 0.0
    %2229 = vmatpush1.msra.mxu0 0.0
    %2230 = vmatprep.subr.mxu0 0.0
    %2231 = vmatpush1.msra.mxu0 0.0
    %2232 = vmatprep.subr.mxu0 0.0
    %2233 = vmatpush1.msra.mxu0 0.0
    %2234 = vmatprep.subr.mxu0 0.0
    %2235 = vmatpush1.msra.mxu0 0.0
    %2236 = vmatprep.subr.mxu0 0.0
    %2237 = vmatpush1.msra.mxu0 0.0
    %2238 = vmatprep.subr.mxu0 0.0
    %2239 = vmatpush1.msra.mxu0 0.0
    %2240 = vmatprep.subr.mxu0 0.0
    %2241 = vmatpush1.msra.mxu0 0.0
    %2242 = vmatprep.subr.mxu0 0.0
    %2243 = vmatpush1.msra.mxu0 0.0
    %2244 = vmatprep.subr.mxu0 0.0
    %2245 = vmatpush1.msra.mxu0 0.0
    %2246 = vmatprep.subr.mxu0 0.0
    %2247 = vmatpush1.msra.mxu0 0.0
    %2248 = vmatprep.subr.mxu0 0.0
    %2249 = vmatpush1.msra.mxu0 0.0
    %2250 = vmatprep.subr.mxu0 0.0
    %2251 = vmatpush1.msra.mxu0 0.0
    %2252 = vmatprep.subr.mxu0 0.0
    %2253 = vmatpush1.msra.mxu0 0.0
    %2254 = vmatprep.subr.mxu0 0.0
    %2255 = vmatpush1.msra.mxu0 0.0
    %2256 = vmatprep.subr.mxu0 0.0
    %2257 = vmatpush1.msra.mxu0 0.0
    %2258 = vmatprep.subr.mxu0 0.0
    %2259 = vmatpush1.msra.mxu0 0.0
    %2260 = vmatprep.subr.mxu0 0.0
    %2261 = vmatpush1.msra.mxu0 0.0
    %2262 = vmatprep.subr.mxu0 0.0
    %2263 = vmatpush1.msra.mxu0 0.0
    %2264 = vmatprep.subr.mxu0 0.0
    %2265 = vmatpush1.msra.mxu0 0.0
    %2266 = vmatprep.subr.mxu0 0.0
    %2267 = vmatpush1.msra.mxu0 0.0
    %2268 = vmatprep.mubr.f32.mxu0 0.0
    %2269 = vmatmul.mubr.f32.gmra.mrb[0].mxu0 %v1989
    %v2270 = vpop.f32.mrb[0].mxu0
    %v2271 = vadd.f32 0.0, %v2270
    %v2272 = vpop.f32.mrb[0].mxu0
    %v2273 = vadd.f32 0.0, %v2272
    %2274 = vdwg.mxu0
    %2275 = vrot.lane.b32.xlu0 %v1987, 32
    %v2276 = vpop.permute.xlu0 %2275
    %2278 = vrot.lane.b32.xlu0 %v1987, 64
    %v2279 = vpop.permute.xlu0 %2278
    %2281 = vrot.lane.b32.xlu0 %v1987, 96
    %v2282 = vpop.permute.xlu0 %2281
    %v2284 = vsel %vm190, %v1987, %v2276
    %v2285 = vsel %vm488, %v2284, %v2279
    %v2286 = vsel %vm490, %v2285, %v2282
    %v2287 = vmul.f32 %v2058, %v2286
    %v2288 = vmul.f32 %v2060, %v2286
    %v2289 = vmul.f32 %v2129, %v2286
    %v2290 = vmul.f32 %v2131, %v2286
    %v2291 = vmul.f32 %v2200, %v2286
    %v2292 = vmul.f32 %v2202, %v2286
    %v2293 = vmul.f32 %v2271, %v2286
    %v2294 = vmul.f32 %v2273, %v2286
    %s2295 = scalar_lea.vmem %s0, 6
    %v2296 = vld [vmem:[%s2295] sm:$0x3]
    %2297 = vmatprep.subr.mxu0 0.0
    %2298 = vmatpush1.msra.mxu0 %v60
    %2299 = vmatprep.subr.mxu0 0.0
    %2300 = vmatpush1.msra.mxu0 %v61
    %2301 = vmatprep.subr.mxu0 0.0
    %2302 = vmatpush1.msra.mxu0 %v62
    %2303 = vmatprep.subr.mxu0 0.0
    %2304 = vmatpush1.msra.mxu0 %v63
    %2305 = vmatprep.subr.mxu0 0.0
    %2306 = vmatpush1.msra.mxu0 %v64
    %2307 = vmatprep.subr.mxu0 0.0
    %2308 = vmatpush1.msra.mxu0 %v65
    %2309 = vmatprep.subr.mxu0 0.0
    %2310 = vmatpush1.msra.mxu0 %v66
    %2311 = vmatprep.subr.mxu0 0.0
    %2312 = vmatpush1.msra.mxu0 %v67
    %2313 = vmatprep.subr.mxu0 0.0
    %2314 = vmatpush1.msra.mxu0 %v68
    %2315 = vmatprep.subr.mxu0 0.0
    %2316 = vmatpush1.msra.mxu0 %v69
    %2317 = vmatprep.subr.mxu0 0.0
    %2318 = vmatpush1.msra.mxu0 %v70
    %2319 = vmatprep.subr.mxu0 0.0
    %2320 = vmatpush1.msra.mxu0 %v71
    %2321 = vmatprep.subr.mxu0 0.0
    %2322 = vmatpush1.msra.mxu0 %v72
    %2323 = vmatprep.subr.mxu0 0.0
    %2324 = vmatpush1.msra.mxu0 %v73
    %2325 = vmatprep.subr.mxu0 0.0
    %2326 = vmatpush1.msra.mxu0 %v74
    %2327 = vmatprep.subr.mxu0 0.0
    %2328 = vmatpush1.msra.mxu0 %v75
    %2329 = vmatprep.subr.mxu0 0.0
    %2330 = vmatpush1.msra.mxu0 %v76
    %2331 = vmatprep.subr.mxu0 0.0
    %2332 = vmatpush1.msra.mxu0 %v77
    %2333 = vmatprep.subr.mxu0 0.0
    %2334 = vmatpush1.msra.mxu0 %v78
    %2335 = vmatprep.subr.mxu0 0.0
    %2336 = vmatpush1.msra.mxu0 %v79
    %2337 = vmatprep.subr.mxu0 0.0
    %2338 = vmatpush1.msra.mxu0 %v80
    %2339 = vmatprep.subr.mxu0 0.0
    %2340 = vmatpush1.msra.mxu0 %v81
    %2341 = vmatprep.subr.mxu0 0.0
    %2342 = vmatpush1.msra.mxu0 %v82
    %2343 = vmatprep.subr.mxu0 0.0
    %2344 = vmatpush1.msra.mxu0 %v83
    %2345 = vmatprep.subr.mxu0 0.0
    %2346 = vmatpush1.msra.mxu0 %v84
    %2347 = vmatprep.subr.mxu0 0.0
    %2348 = vmatpush1.msra.mxu0 %v85
    %2349 = vmatprep.subr.mxu0 0.0
    %2350 = vmatpush1.msra.mxu0 %v86
    %2351 = vmatprep.subr.mxu0 0.0
    %2352 = vmatpush1.msra.mxu0 %v87
    %2353 = vmatprep.subr.mxu0 0.0
    %2354 = vmatpush1.msra.mxu0 %v88
    %2355 = vmatprep.subr.mxu0 0.0
    %2356 = vmatpush1.msra.mxu0 %v89
    %2357 = vmatprep.subr.mxu0 0.0
    %2358 = vmatpush1.msra.mxu0 %v90
    %2359 = vmatprep.subr.mxu0 0.0
    %2360 = vmatpush1.msra.mxu0 %v91
    %2361 = vmatprep.mubr.f32.mxu0 %v2288
    %2362 = vmatmul.mubr.f32.gmra.mrb[0].mxu0 %v2287
    %v2363 = vpop.f32.mrb[0].mxu0
    %v2364 = vadd.f32 %v2296, %v2363
    %v2365 = vpop.f32.mrb[0].mxu0
    %2366 = vdwg.mxu0
    %2367 = vmatprep.subr.mxu0 0.0
    %2368 = vmatpush1.msra.mxu0 %v92
    %2369 = vmatprep.subr.mxu0 0.0
    %2370 = vmatpush1.msra.mxu0 %v93
    %2371 = vmatprep.subr.mxu0 0.0
    %2372 = vmatpush1.msra.mxu0 %v94
    %2373 = vmatprep.subr.mxu0 0.0
    %2374 = vmatpush1.msra.mxu0 %v95
    %2375 = vmatprep.subr.mxu0 0.0
    %2376 = vmatpush1.msra.mxu0 %v96
    %2377 = vmatprep.subr.mxu0 0.0
    %2378 = vmatpush1.msra.mxu0 %v97
    %2379 = vmatprep.subr.mxu0 0.0
    %2380 = vmatpush1.msra.mxu0 %v98
    %2381 = vmatprep.subr.mxu0 0.0
    %2382 = vmatpush1.msra.mxu0 %v99
    %2383 = vmatprep.subr.mxu0 0.0
    %2384 = vmatpush1.msra.mxu0 %v100
    %2385 = vmatprep.subr.mxu0 0.0
    %2386 = vmatpush1.msra.mxu0 %v101
    %2387 = vmatprep.subr.mxu0 0.0
    %2388 = vmatpush1.msra.mxu0 %v102
    %2389 = vmatprep.subr.mxu0 0.0
    %2390 = vmatpush1.msra.mxu0 %v103
    %2391 = vmatprep.subr.mxu0 0.0
    %2392 = vmatpush1.msra.mxu0 %v104
    %2393 = vmatprep.subr.mxu0 0.0
    %2394 = vmatpush1.msra.mxu0 %v105
    %2395 = vmatprep.subr.mxu0 0.0
    %2396 = vmatpush1.msra.mxu0 %v106
    %2397 = vmatprep.subr.mxu0 0.0
    %2398 = vmatpush1.msra.mxu0 %v107
    %2399 = vmatprep.subr.mxu0 0.0
    %2400 = vmatpush1.msra.mxu0 %v108
    %2401 = vmatprep.subr.mxu0 0.0
    %2402 = vmatpush1.msra.mxu0 %v109
    %2403 = vmatprep.subr.mxu0 0.0
    %2404 = vmatpush1.msra.mxu0 %v110
    %2405 = vmatprep.subr.mxu0 0.0
    %2406 = vmatpush1.msra.mxu0 %v111
    %2407 = vmatprep.subr.mxu0 0.0
    %2408 = vmatpush1.msra.mxu0 %v112
    %2409 = vmatprep.subr.mxu0 0.0
    %2410 = vmatpush1.msra.mxu0 %v113
    %2411 = vmatprep.subr.mxu0 0.0
    %2412 = vmatpush1.msra.mxu0 %v114
    %2413 = vmatprep.subr.mxu0 0.0
    %2414 = vmatpush1.msra.mxu0 %v115
    %2415 = vmatprep.subr.mxu0 0.0
    %2416 = vmatpush1.msra.mxu0 %v116
    %2417 = vmatprep.subr.mxu0 0.0
    %2418 = vmatpush1.msra.mxu0 %v117
    %2419 = vmatprep.subr.mxu0 0.0
    %2420 = vmatpush1.msra.mxu0 %v118
    %2421 = vmatprep.subr.mxu0 0.0
    %2422 = vmatpush1.msra.mxu0 %v119
    %2423 = vmatprep.subr.mxu0 0.0
    %2424 = vmatpush1.msra.mxu0 %v120
    %2425 = vmatprep.subr.mxu0 0.0
    %2426 = vmatpush1.msra.mxu0 %v121
    %2427 = vmatprep.subr.mxu0 0.0
    %2428 = vmatpush1.msra.mxu0 %v122
    %2429 = vmatprep.subr.mxu0 0.0
    %2430 = vmatpush1.msra.mxu0 %v123
    %2431 = vmatprep.mubr.f32.mxu0 %v2290
    %2432 = vmatmul.mubr.f32.gmra.mrb[0].mxu0 %v2289
    %v2433 = vpop.f32.mrb[0].mxu0
    %v2434 = vadd.f32 %v2364, %v2433
    %v2435 = vpop.f32.mrb[0].mxu0
    %2436 = vdwg.mxu0
    %2437 = vmatprep.subr.mxu0 0.0
    %2438 = vmatpush1.msra.mxu0 %v124
    %2439 = vmatprep.subr.mxu0 0.0
    %2440 = vmatpush1.msra.mxu0 %v125
    %2441 = vmatprep.subr.mxu0 0.0
    %2442 = vmatpush1.msra.mxu0 %v126
    %2443 = vmatprep.subr.mxu0 0.0
    %2444 = vmatpush1.msra.mxu0 %v127
    %2445 = vmatprep.subr.mxu0 0.0
    %2446 = vmatpush1.msra.mxu0 %v128
    %2447 = vmatprep.subr.mxu0 0.0
    %2448 = vmatpush1.msra.mxu0 %v129
    %2449 = vmatprep.subr.mxu0 0.0
    %2450 = vmatpush1.msra.mxu0 %v130
    %2451 = vmatprep.subr.mxu0 0.0
    %2452 = vmatpush1.msra.mxu0 %v131
    %2453 = vmatprep.subr.mxu0 0.0
    %2454 = vmatpush1.msra.mxu0 %v132
    %2455 = vmatprep.subr.mxu0 0.0
    %2456 = vmatpush1.msra.mxu0 %v133
    %2457 = vmatprep.subr.mxu0 0.0
    %2458 = vmatpush1.msra.mxu0 %v134
    %2459 = vmatprep.subr.mxu0 0.0
    %2460 = vmatpush1.msra.mxu0 %v135
    %2461 = vmatprep.subr.mxu0 0.0
    %2462 = vmatpush1.msra.mxu0 %v136
    %2463 = vmatprep.subr.mxu0 0.0
    %2464 = vmatpush1.msra.mxu0 %v137
    %2465 = vmatprep.subr.mxu0 0.0
    %2466 = vmatpush1.msra.mxu0 %v138
    %2467 = vmatprep.subr.mxu0 0.0
    %2468 = vmatpush1.msra.mxu0 %v139
    %2469 = vmatprep.subr.mxu0 0.0
    %2470 = vmatpush1.msra.mxu0 %v140
    %2471 = vmatprep.subr.mxu0 0.0
    %2472 = vmatpush1.msra.mxu0 %v141
    %2473 = vmatprep.subr.mxu0 0.0
    %2474 = vmatpush1.msra.mxu0 %v142
    %2475 = vmatprep.subr.mxu0 0.0
    %2476 = vmatpush1.msra.mxu0 %v143
    %2477 = vmatprep.subr.mxu0 0.0
    %2478 = vmatpush1.msra.mxu0 %v144
    %2479 = vmatprep.subr.mxu0 0.0
    %2480 = vmatpush1.msra.mxu0 %v145
    %2481 = vmatprep.subr.mxu0 0.0
    %2482 = vmatpush1.msra.mxu0 %v146
    %2483 = vmatprep.subr.mxu0 0.0
    %2484 = vmatpush1.msra.mxu0 %v147
    %2485 = vmatprep.subr.mxu0 0.0
    %2486 = vmatpush1.msra.mxu0 %v148
    %2487 = vmatprep.subr.mxu0 0.0
    %2488 = vmatpush1.msra.mxu0 %v149
    %2489 = vmatprep.subr.mxu0 0.0
    %2490 = vmatpush1.msra.mxu0 %v150
    %2491 = vmatprep.subr.mxu0 0.0
    %2492 = vmatpush1.msra.mxu0 %v151
    %2493 = vmatprep.subr.mxu0 0.0
    %2494 = vmatpush1.msra.mxu0 %v152
    %2495 = vmatprep.subr.mxu0 0.0
    %2496 = vmatpush1.msra.mxu0 %v153
    %2497 = vmatprep.subr.mxu0 0.0
    %2498 = vmatpush1.msra.mxu0 %v154
    %2499 = vmatprep.subr.mxu0 0.0
    %2500 = vmatpush1.msra.mxu0 %v155
    %2501 = vmatprep.mubr.f32.mxu0 %v2292
    %2502 = vmatmul.mubr.f32.gmra.mrb[0].mxu0 %v2291
    %v2503 = vpop.f32.mrb[0].mxu0
    %v2504 = vadd.f32 %v2434, %v2503
    %v2505 = vpop.f32.mrb[0].mxu0
    %2506 = vdwg.mxu0
    %2507 = vmatprep.subr.mxu0 0.0
    %2508 = vmatpush1.msra.mxu0 %v156
    %2509 = vmatprep.subr.mxu0 0.0
    %2510 = vmatpush1.msra.mxu0 %v157
    %2511 = vmatprep.subr.mxu0 0.0
    %2512 = vmatpush1.msra.mxu0 %v158
    %2513 = vmatprep.subr.mxu0 0.0
    %2514 = vmatpush1.msra.mxu0 %v159
    %2515 = vmatprep.subr.mxu0 0.0
    %2516 = vmatpush1.msra.mxu0 %v160
    %2517 = vmatprep.subr.mxu0 0.0
    %2518 = vmatpush1.msra.mxu0 %v161
    %2519 = vmatprep.subr.mxu0 0.0
    %2520 = vmatpush1.msra.mxu0 %v162
    %2521 = vmatprep.subr.mxu0 0.0
    %2522 = vmatpush1.msra.mxu0 %v163
    %2523 = vmatprep.subr.mxu0 0.0
    %2524 = vmatpush1.msra.mxu0 %v164
    %2525 = vmatprep.subr.mxu0 0.0
    %2526 = vmatpush1.msra.mxu0 %v165
    %2527 = vmatprep.subr.mxu0 0.0
    %2528 = vmatpush1.msra.mxu0 %v166
    %2529 = vmatprep.subr.mxu0 0.0
    %2530 = vmatpush1.msra.mxu0 %v167
    %2531 = vmatprep.subr.mxu0 0.0
    %2532 = vmatpush1.msra.mxu0 %v168
    %2533 = vmatprep.subr.mxu0 0.0
    %2534 = vmatpush1.msra.mxu0 %v169
    %2535 = vmatprep.subr.mxu0 0.0
    %2536 = vmatpush1.msra.mxu0 %v170
    %2537 = vmatprep.subr.mxu0 0.0
    %2538 = vmatpush1.msra.mxu0 %v171
    %2539 = vmatprep.subr.mxu0 0.0
    %2540 = vmatpush1.msra.mxu0 %v172
    %2541 = vmatprep.subr.mxu0 0.0
    %2542 = vmatpush1.msra.mxu0 %v173
    %2543 = vmatprep.subr.mxu0 0.0
    %2544 = vmatpush1.msra.mxu0 %v174
    %2545 = vmatprep.subr.mxu0 0.0
    %2546 = vmatpush1.msra.mxu0 %v175
    %2547 = vmatprep.subr.mxu0 0.0
    %2548 = vmatpush1.msra.mxu0 %v176
    %2549 = vmatprep.subr.mxu0 0.0
    %2550 = vmatpush1.msra.mxu0 %v177
    %2551 = vmatprep.subr.mxu0 0.0
    %2552 = vmatpush1.msra.mxu0 %v178
    %2553 = vmatprep.subr.mxu0 0.0
    %2554 = vmatpush1.msra.mxu0 %v179
    %2555 = vmatprep.subr.mxu0 0.0
    %2556 = vmatpush1.msra.mxu0 %v180
    %2557 = vmatprep.subr.mxu0 0.0
    %2558 = vmatpush1.msra.mxu0 %v181
    %2559 = vmatprep.subr.mxu0 0.0
    %2560 = vmatpush1.msra.mxu0 %v182
    %2561 = vmatprep.subr.mxu0 0.0
    %2562 = vmatpush1.msra.mxu0 %v183
    %2563 = vmatprep.subr.mxu0 0.0
    %2564 = vmatpush1.msra.mxu0 %v184
    %2565 = vmatprep.subr.mxu0 0.0
    %2566 = vmatpush1.msra.mxu0 %v185
    %2567 = vmatprep.subr.mxu0 0.0
    %2568 = vmatpush1.msra.mxu0 %v186
    %2569 = vmatprep.subr.mxu0 0.0
    %2570 = vmatpush1.msra.mxu0 %v187
    %2571 = vmatprep.mubr.f32.mxu0 %v2294
    %2572 = vmatmul.mubr.f32.gmra.mrb[0].mxu0 %v2293
    %v2573 = vpop.f32.mrb[0].mxu0
    %v2574 = vadd.f32 %v2504, %v2573
    %v2575 = vpop.f32.mrb[0].mxu0
    %2576 = vdwg.mxu0
    %v2577 = vmul.f32 %v1984, 0.8
    %v2578 = vmul.f32 %v2574, 0.2
    %v2579 = vadd.f32 %v2577, %v2578
    %s2580 = scalar_lea.vmem %s1, 6
    %v2581 = vld [vmem:[%s2580] sm:$0x3]
    %v2582 = vmul.f32 %v2581, 0.05
    %v2583 = vadd.f32 %v2579, %v2582
    %s2584 = scalar_lea.vmem [#allocation3], 6
    %2585 = vst.msk [vmem:[%s2584] sm:$0x3] %vm787, %v2583
    %v2586 = vtanh.pop %v2583
    %v2588 = vsel %vm190, %v2586, 0
    %2590 = vmatprep.subr.mxu0 %v29
    %2591 = vmatpush1.msra.mxu0 %v28
    %2592 = vmatprep.subr.mxu0 %v37
    %2593 = vmatpush1.msra.mxu0 %v36
    %2594 = vmatprep.subr.mxu0 %v45
    %2595 = vmatpush1.msra.mxu0 %v44
    %2596 = vmatprep.subr.mxu0 %v53
    %2597 = vmatpush1.msra.mxu0 %v52
    %2598 = vmatprep.subr.mxu0 0.0
    %2599 = vmatpush1.msra.mxu0 0.0
    %2600 = vmatprep.subr.mxu0 0.0
    %2601 = vmatpush1.msra.mxu0 0.0
    %2602 = vmatprep.subr.mxu0 0.0
    %2603 = vmatpush1.msra.mxu0 0.0
    %2604 = vmatprep.subr.mxu0 0.0
    %2605 = vmatpush1.msra.mxu0 0.0
    %2606 = vmatprep.subr.mxu0 0.0
    %2607 = vmatpush1.msra.mxu0 0.0
    %2608 = vmatprep.subr.mxu0 0.0
    %2609 = vmatpush1.msra.mxu0 0.0
    %2610 = vmatprep.subr.mxu0 0.0
    %2611 = vmatpush1.msra.mxu0 0.0
    %2612 = vmatprep.subr.mxu0 0.0
    %2613 = vmatpush1.msra.mxu0 0.0
    %2614 = vmatprep.subr.mxu0 0.0
    %2615 = vmatpush1.msra.mxu0 0.0
    %2616 = vmatprep.subr.mxu0 0.0
    %2617 = vmatpush1.msra.mxu0 0.0
    %2618 = vmatprep.subr.mxu0 0.0
    %2619 = vmatpush1.msra.mxu0 0.0
    %2620 = vmatprep.subr.mxu0 0.0
    %2621 = vmatpush1.msra.mxu0 0.0
    %2622 = vmatprep.subr.mxu0 0.0
    %2623 = vmatpush1.msra.mxu0 0.0
    %2624 = vmatprep.subr.mxu0 0.0
    %2625 = vmatpush1.msra.mxu0 0.0
    %2626 = vmatprep.subr.mxu0 0.0
    %2627 = vmatpush1.msra.mxu0 0.0
    %2628 = vmatprep.subr.mxu0 0.0
    %2629 = vmatpush1.msra.mxu0 0.0
    %2630 = vmatprep.subr.mxu0 0.0
    %2631 = vmatpush1.msra.mxu0 0.0
    %2632 = vmatprep.subr.mxu0 0.0
    %2633 = vmatpush1.msra.mxu0 0.0
    %2634 = vmatprep.subr.mxu0 0.0
    %2635 = vmatpush1.msra.mxu0 0.0
    %2636 = vmatprep.subr.mxu0 0.0
    %2637 = vmatpush1.msra.mxu0 0.0
    %2638 = vmatprep.subr.mxu0 0.0
    %2639 = vmatpush1.msra.mxu0 0.0
    %2640 = vmatprep.subr.mxu0 0.0
    %2641 = vmatpush1.msra.mxu0 0.0
    %2642 = vmatprep.subr.mxu0 0.0
    %2643 = vmatpush1.msra.mxu0 0.0
    %2644 = vmatprep.subr.mxu0 0.0
    %2645 = vmatpush1.msra.mxu0 0.0
    %2646 = vmatprep.subr.mxu0 0.0
    %2647 = vmatpush1.msra.mxu0 0.0
    %2648 = vmatprep.subr.mxu0 0.0
    %2649 = vmatpush1.msra.mxu0 0.0
    %2650 = vmatprep.subr.mxu0 0.0
    %2651 = vmatpush1.msra.mxu0 0.0
    %2652 = vmatprep.subr.mxu0 0.0
    %2653 = vmatpush1.msra.mxu0 0.0
    %2654 = vmatprep.mubr.f32.mxu0 0.0
    %2655 = vmatmul.mubr.f32.gmra.mrb[0].mxu0 %v2588
    %v2656 = vpop.f32.mrb[0].mxu0
    %v2657 = vadd.f32 0.0, %v2656
    %v2658 = vpop.f32.mrb[0].mxu0
    %v2659 = vadd.f32 0.0, %v2658
    %2660 = vdwg.mxu0
    %2661 = vmatprep.subr.mxu0 %v31
    %2662 = vmatpush1.msra.mxu0 %v30
    %2663 = vmatprep.subr.mxu0 %v39
    %2664 = vmatpush1.msra.mxu0 %v38
    %2665 = vmatprep.subr.mxu0 %v47
    %2666 = vmatpush1.msra.mxu0 %v46
    %2667 = vmatprep.subr.mxu0 %v55
    %2668 = vmatpush1.msra.mxu0 %v54
    %2669 = vmatprep.subr.mxu0 0.0
    %2670 = vmatpush1.msra.mxu0 0.0
    %2671 = vmatprep.subr.mxu0 0.0
    %2672 = vmatpush1.msra.mxu0 0.0
    %2673 = vmatprep.subr.mxu0 0.0
    %2674 = vmatpush1.msra.mxu0 0.0
    %2675 = vmatprep.subr.mxu0 0.0
    %2676 = vmatpush1.msra.mxu0 0.0
    %2677 = vmatprep.subr.mxu0 0.0
    %2678 = vmatpush1.msra.mxu0 0.0
    %2679 = vmatprep.subr.mxu0 0.0
    %2680 = vmatpush1.msra.mxu0 0.0
    %2681 = vmatprep.subr.mxu0 0.0
    %2682 = vmatpush1.msra.mxu0 0.0
    %2683 = vmatprep.subr.mxu0 0.0
    %2684 = vmatpush1.msra.mxu0 0.0
    %2685 = vmatprep.subr.mxu0 0.0
    %2686 = vmatpush1.msra.mxu0 0.0
    %2687 = vmatprep.subr.mxu0 0.0
    %2688 = vmatpush1.msra.mxu0 0.0
    %2689 = vmatprep.subr.mxu0 0.0
    %2690 = vmatpush1.msra.mxu0 0.0
    %2691 = vmatprep.subr.mxu0 0.0
    %2692 = vmatpush1.msra.mxu0 0.0
    %2693 = vmatprep.subr.mxu0 0.0
    %2694 = vmatpush1.msra.mxu0 0.0
    %2695 = vmatprep.subr.mxu0 0.0
    %2696 = vmatpush1.msra.mxu0 0.0
    %2697 = vmatprep.subr.mxu0 0.0
    %2698 = vmatpush1.msra.mxu0 0.0
    %2699 = vmatprep.subr.mxu0 0.0
    %2700 = vmatpush1.msra.mxu0 0.0
    %2701 = vmatprep.subr.mxu0 0.0
    %2702 = vmatpush1.msra.mxu0 0.0
    %2703 = vmatprep.subr.mxu0 0.0
    %2704 = vmatpush1.msra.mxu0 0.0
    %2705 = vmatprep.subr.mxu0 0.0
    %2706 = vmatpush1.msra.mxu0 0.0
    %2707 = vmatprep.subr.mxu0 0.0
    %2708 = vmatpush1.msra.mxu0 0.0
    %2709 = vmatprep.subr.mxu0 0.0
    %2710 = vmatpush1.msra.mxu0 0.0
    %2711 = vmatprep.subr.mxu0 0.0
    %2712 = vmatpush1.msra.mxu0 0.0
    %2713 = vmatprep.subr.mxu0 0.0
    %2714 = vmatpush1.msra.mxu0 0.0
    %2715 = vmatprep.subr.mxu0 0.0
    %2716 = vmatpush1.msra.mxu0 0.0
    %2717 = vmatprep.subr.mxu0 0.0
    %2718 = vmatpush1.msra.mxu0 0.0
    %2719 = vmatprep.subr.mxu0 0.0
    %2720 = vmatpush1.msra.mxu0 0.0
    %2721 = vmatprep.subr.mxu0 0.0
    %2722 = vmatpush1.msra.mxu0 0.0
    %2723 = vmatprep.subr.mxu0 0.0
    %2724 = vmatpush1.msra.mxu0 0.0
    %2725 = vmatprep.mubr.f32.mxu0 0.0
    %2726 = vmatmul.mubr.f32.gmra.mrb[0].mxu0 %v2588
    %v2727 = vpop.f32.mrb[0].mxu0
    %v2728 = vadd.f32 0.0, %v2727
    %v2729 = vpop.f32.mrb[0].mxu0
    %v2730 = vadd.f32 0.0, %v2729
    %2731 = vdwg.mxu0
    %2732 = vmatprep.subr.mxu0 %v33
    %2733 = vmatpush1.msra.mxu0 %v32
    %2734 = vmatprep.subr.mxu0 %v41
    %2735 = vmatpush1.msra.mxu0 %v40
    %2736 = vmatprep.subr.mxu0 %v49
    %2737 = vmatpush1.msra.mxu0 %v48
    %2738 = vmatprep.subr.mxu0 %v57
    %2739 = vmatpush1.msra.mxu0 %v56
    %2740 = vmatprep.subr.mxu0 0.0
    %2741 = vmatpush1.msra.mxu0 0.0
    %2742 = vmatprep.subr.mxu0 0.0
    %2743 = vmatpush1.msra.mxu0 0.0
    %2744 = vmatprep.subr.mxu0 0.0
    %2745 = vmatpush1.msra.mxu0 0.0
    %2746 = vmatprep.subr.mxu0 0.0
    %2747 = vmatpush1.msra.mxu0 0.0
    %2748 = vmatprep.subr.mxu0 0.0
    %2749 = vmatpush1.msra.mxu0 0.0
    %2750 = vmatprep.subr.mxu0 0.0
    %2751 = vmatpush1.msra.mxu0 0.0
    %2752 = vmatprep.subr.mxu0 0.0
    %2753 = vmatpush1.msra.mxu0 0.0
    %2754 = vmatprep.subr.mxu0 0.0
    %2755 = vmatpush1.msra.mxu0 0.0
    %2756 = vmatprep.subr.mxu0 0.0
    %2757 = vmatpush1.msra.mxu0 0.0
    %2758 = vmatprep.subr.mxu0 0.0
    %2759 = vmatpush1.msra.mxu0 0.0
    %2760 = vmatprep.subr.mxu0 0.0
    %2761 = vmatpush1.msra.mxu0 0.0
    %2762 = vmatprep.subr.mxu0 0.0
    %2763 = vmatpush1.msra.mxu0 0.0
    %2764 = vmatprep.subr.mxu0 0.0
    %2765 = vmatpush1.msra.mxu0 0.0
    %2766 = vmatprep.subr.mxu0 0.0
    %2767 = vmatpush1.msra.mxu0 0.0
    %2768 = vmatprep.subr.mxu0 0.0
    %2769 = vmatpush1.msra.mxu0 0.0
    %2770 = vmatprep.subr.mxu0 0.0
    %2771 = vmatpush1.msra.mxu0 0.0
    %2772 = vmatprep.subr.mxu0 0.0
    %2773 = vmatpush1.msra.mxu0 0.0
    %2774 = vmatprep.subr.mxu0 0.0
    %2775 = vmatpush1.msra.mxu0 0.0
    %2776 = vmatprep.subr.mxu0 0.0
    %2777 = vmatpush1.msra.mxu0 0.0
    %2778 = vmatprep.subr.mxu0 0.0
    %2779 = vmatpush1.msra.mxu0 0.0
    %2780 = vmatprep.subr.mxu0 0.0
    %2781 = vmatpush1.msra.mxu0 0.0
    %2782 = vmatprep.subr.mxu0 0.0
    %2783 = vmatpush1.msra.mxu0 0.0
    %2784 = vmatprep.subr.mxu0 0.0
    %2785 = vmatpush1.msra.mxu0 0.0
    %2786 = vmatprep.subr.mxu0 0.0
    %2787 = vmatpush1.msra.mxu0 0.0
    %2788 = vmatprep.subr.mxu0 0.0
    %2789 = vmatpush1.msra.mxu0 0.0
    %2790 = vmatprep.subr.mxu0 0.0
    %2791 = vmatpush1.msra.mxu0 0.0
    %2792 = vmatprep.subr.mxu0 0.0
    %2793 = vmatpush1.msra.mxu0 0.0
    %2794 = vmatprep.subr.mxu0 0.0
    %2795 = vmatpush1.msra.mxu0 0.0
    %2796 = vmatprep.mubr.f32.mxu0 0.0
    %2797 = vmatmul.mubr.f32.gmra.mrb[0].mxu0 %v2588
    %v2798 = vpop.f32.mrb[0].mxu0
    %v2799 = vadd.f32 0.0, %v2798
    %v2800 = vpop.f32.mrb[0].mxu0
    %v2801 = vadd.f32 0.0, %v2800
    %2802 = vdwg.mxu0
    %2803 = vmatprep.subr.mxu0 %v35
    %2804 = vmatpush1.msra.mxu0 %v34
    %2805 = vmatprep.subr.mxu0 %v43
    %2806 = vmatpush1.msra.mxu0 %v42
    %2807 = vmatprep.subr.mxu0 %v51
    %2808 = vmatpush1.msra.mxu0 %v50
    %2809 = vmatprep.subr.mxu0 %v59
    %2810 = vmatpush1.msra.mxu0 %v58
    %2811 = vmatprep.subr.mxu0 0.0
    %2812 = vmatpush1.msra.mxu0 0.0
    %2813 = vmatprep.subr.mxu0 0.0
    %2814 = vmatpush1.msra.mxu0 0.0
    %2815 = vmatprep.subr.mxu0 0.0
    %2816 = vmatpush1.msra.mxu0 0.0
    %2817 = vmatprep.subr.mxu0 0.0
    %2818 = vmatpush1.msra.mxu0 0.0
    %2819 = vmatprep.subr.mxu0 0.0
    %2820 = vmatpush1.msra.mxu0 0.0
    %2821 = vmatprep.subr.mxu0 0.0
    %2822 = vmatpush1.msra.mxu0 0.0
    %2823 = vmatprep.subr.mxu0 0.0
    %2824 = vmatpush1.msra.mxu0 0.0
    %2825 = vmatprep.subr.mxu0 0.0
    %2826 = vmatpush1.msra.mxu0 0.0
    %2827 = vmatprep.subr.mxu0 0.0
    %2828 = vmatpush1.msra.mxu0 0.0
    %2829 = vmatprep.subr.mxu0 0.0
    %2830 = vmatpush1.msra.mxu0 0.0
    %2831 = vmatprep.subr.mxu0 0.0
    %2832 = vmatpush1.msra.mxu0 0.0
    %2833 = vmatprep.subr.mxu0 0.0
    %2834 = vmatpush1.msra.mxu0 0.0
    %2835 = vmatprep.subr.mxu0 0.0
    %2836 = vmatpush1.msra.mxu0 0.0
    %2837 = vmatprep.subr.mxu0 0.0
    %2838 = vmatpush1.msra.mxu0 0.0
    %2839 = vmatprep.subr.mxu0 0.0
    %2840 = vmatpush1.msra.mxu0 0.0
    %2841 = vmatprep.subr.mxu0 0.0
    %2842 = vmatpush1.msra.mxu0 0.0
    %2843 = vmatprep.subr.mxu0 0.0
    %2844 = vmatpush1.msra.mxu0 0.0
    %2845 = vmatprep.subr.mxu0 0.0
    %2846 = vmatpush1.msra.mxu0 0.0
    %2847 = vmatprep.subr.mxu0 0.0
    %2848 = vmatpush1.msra.mxu0 0.0
    %2849 = vmatprep.subr.mxu0 0.0
    %2850 = vmatpush1.msra.mxu0 0.0
    %2851 = vmatprep.subr.mxu0 0.0
    %2852 = vmatpush1.msra.mxu0 0.0
    %2853 = vmatprep.subr.mxu0 0.0
    %2854 = vmatpush1.msra.mxu0 0.0
    %2855 = vmatprep.subr.mxu0 0.0
    %2856 = vmatpush1.msra.mxu0 0.0
    %2857 = vmatprep.subr.mxu0 0.0
    %2858 = vmatpush1.msra.mxu0 0.0
    %2859 = vmatprep.subr.mxu0 0.0
    %2860 = vmatpush1.msra.mxu0 0.0
    %2861 = vmatprep.subr.mxu0 0.0
    %2862 = vmatpush1.msra.mxu0 0.0
    %2863 = vmatprep.subr.mxu0 0.0
    %2864 = vmatpush1.msra.mxu0 0.0
    %2865 = vmatprep.subr.mxu0 0.0
    %2866 = vmatpush1.msra.mxu0 0.0
    %2867 = vmatprep.mubr.f32.mxu0 0.0
    %2868 = vmatmul.mubr.f32.gmra.mrb[0].mxu0 %v2588
    %v2869 = vpop.f32.mrb[0].mxu0
    %v2870 = vadd.f32 0.0, %v2869
    %v2871 = vpop.f32.mrb[0].mxu0
    %v2872 = vadd.f32 0.0, %v2871
    %2873 = vdwg.mxu0
    %2874 = vrot.lane.b32.xlu0 %v2586, 32
    %v2875 = vpop.permute.xlu0 %2874
    %2877 = vrot.lane.b32.xlu0 %v2586, 64
    %v2878 = vpop.permute.xlu0 %2877
    %2880 = vrot.lane.b32.xlu0 %v2586, 96
    %v2881 = vpop.permute.xlu0 %2880
    %v2883 = vsel %vm190, %v2586, %v2875
    %v2884 = vsel %vm488, %v2883, %v2878
    %v2885 = vsel %vm490, %v2884, %v2881
    %v2886 = vmul.f32 %v2657, %v2885
    %v2887 = vmul.f32 %v2659, %v2885
    %v2888 = vmul.f32 %v2728, %v2885
    %v2889 = vmul.f32 %v2730, %v2885
    %v2890 = vmul.f32 %v2799, %v2885
    %v2891 = vmul.f32 %v2801, %v2885
    %v2892 = vmul.f32 %v2870, %v2885
    %v2893 = vmul.f32 %v2872, %v2885
    %s2894 = scalar_lea.vmem %s0, 8
    %v2895 = vld [vmem:[%s2894] sm:$0x3]
    %2896 = vmatprep.subr.mxu0 0.0
    %2897 = vmatpush1.msra.mxu0 %v60
    %2898 = vmatprep.subr.mxu0 0.0
    %2899 = vmatpush1.msra.mxu0 %v61
    %2900 = vmatprep.subr.mxu0 0.0
    %2901 = vmatpush1.msra.mxu0 %v62
    %2902 = vmatprep.subr.mxu0 0.0
    %2903 = vmatpush1.msra.mxu0 %v63
    %2904 = vmatprep.subr.mxu0 0.0
    %2905 = vmatpush1.msra.mxu0 %v64
    %2906 = vmatprep.subr.mxu0 0.0
    %2907 = vmatpush1.msra.mxu0 %v65
    %2908 = vmatprep.subr.mxu0 0.0
    %2909 = vmatpush1.msra.mxu0 %v66
    %2910 = vmatprep.subr.mxu0 0.0
    %2911 = vmatpush1.msra.mxu0 %v67
    %2912 = vmatprep.subr.mxu0 0.0
    %2913 = vmatpush1.msra.mxu0 %v68
    %2914 = vmatprep.subr.mxu0 0.0
    %2915 = vmatpush1.msra.mxu0 %v69
    %2916 = vmatprep.subr.mxu0 0.0
    %2917 = vmatpush1.msra.mxu0 %v70
    %2918 = vmatprep.subr.mxu0 0.0
    %2919 = vmatpush1.msra.mxu0 %v71
    %2920 = vmatprep.subr.mxu0 0.0
    %2921 = vmatpush1.msra.mxu0 %v72
    %2922 = vmatprep.subr.mxu0 0.0
    %2923 = vmatpush1.msra.mxu0 %v73
    %2924 = vmatprep.subr.mxu0 0.0
    %2925 = vmatpush1.msra.mxu0 %v74
    %2926 = vmatprep.subr.mxu0 0.0
    %2927 = vmatpush1.msra.mxu0 %v75
    %2928 = vmatprep.subr.mxu0 0.0
    %2929 = vmatpush1.msra.mxu0 %v76
    %2930 = vmatprep.subr.mxu0 0.0
    %2931 = vmatpush1.msra.mxu0 %v77
    %2932 = vmatprep.subr.mxu0 0.0
    %2933 = vmatpush1.msra.mxu0 %v78
    %2934 = vmatprep.subr.mxu0 0.0
    %2935 = vmatpush1.msra.mxu0 %v79
    %2936 = vmatprep.subr.mxu0 0.0
    %2937 = vmatpush1.msra.mxu0 %v80
    %2938 = vmatprep.subr.mxu0 0.0
    %2939 = vmatpush1.msra.mxu0 %v81
    %2940 = vmatprep.subr.mxu0 0.0
    %2941 = vmatpush1.msra.mxu0 %v82
    %2942 = vmatprep.subr.mxu0 0.0
    %2943 = vmatpush1.msra.mxu0 %v83
    %2944 = vmatprep.subr.mxu0 0.0
    %2945 = vmatpush1.msra.mxu0 %v84
    %2946 = vmatprep.subr.mxu0 0.0
    %2947 = vmatpush1.msra.mxu0 %v85
    %2948 = vmatprep.subr.mxu0 0.0
    %2949 = vmatpush1.msra.mxu0 %v86
    %2950 = vmatprep.subr.mxu0 0.0
    %2951 = vmatpush1.msra.mxu0 %v87
    %2952 = vmatprep.subr.mxu0 0.0
    %2953 = vmatpush1.msra.mxu0 %v88
    %2954 = vmatprep.subr.mxu0 0.0
    %2955 = vmatpush1.msra.mxu0 %v89
    %2956 = vmatprep.subr.mxu0 0.0
    %2957 = vmatpush1.msra.mxu0 %v90
    %2958 = vmatprep.subr.mxu0 0.0
    %2959 = vmatpush1.msra.mxu0 %v91
    %2960 = vmatprep.mubr.f32.mxu0 %v2887
    %2961 = vmatmul.mubr.f32.gmra.mrb[0].mxu0 %v2886
    %v2962 = vpop.f32.mrb[0].mxu0
    %v2963 = vadd.f32 %v2895, %v2962
    %v2964 = vpop.f32.mrb[0].mxu0
    %2965 = vdwg.mxu0
    %2966 = vmatprep.subr.mxu0 0.0
    %2967 = vmatpush1.msra.mxu0 %v92
    %2968 = vmatprep.subr.mxu0 0.0
    %2969 = vmatpush1.msra.mxu0 %v93
    %2970 = vmatprep.subr.mxu0 0.0
    %2971 = vmatpush1.msra.mxu0 %v94
    %2972 = vmatprep.subr.mxu0 0.0
    %2973 = vmatpush1.msra.mxu0 %v95
    %2974 = vmatprep.subr.mxu0 0.0
    %2975 = vmatpush1.msra.mxu0 %v96
    %2976 = vmatprep.subr.mxu0 0.0
    %2977 = vmatpush1.msra.mxu0 %v97
    %2978 = vmatprep.subr.mxu0 0.0
    %2979 = vmatpush1.msra.mxu0 %v98
    %2980 = vmatprep.subr.mxu0 0.0
    %2981 = vmatpush1.msra.mxu0 %v99
    %2982 = vmatprep.subr.mxu0 0.0
    %2983 = vmatpush1.msra.mxu0 %v100
    %2984 = vmatprep.subr.mxu0 0.0
    %2985 = vmatpush1.msra.mxu0 %v101
    %2986 = vmatprep.subr.mxu0 0.0
    %2987 = vmatpush1.msra.mxu0 %v102
    %2988 = vmatprep.subr.mxu0 0.0
    %2989 = vmatpush1.msra.mxu0 %v103
    %2990 = vmatprep.subr.mxu0 0.0
    %2991 = vmatpush1.msra.mxu0 %v104
    %2992 = vmatprep.subr.mxu0 0.0
    %2993 = vmatpush1.msra.mxu0 %v105
    %2994 = vmatprep.subr.mxu0 0.0
    %2995 = vmatpush1.msra.mxu0 %v106
    %2996 = vmatprep.subr.mxu0 0.0
    %2997 = vmatpush1.msra.mxu0 %v107
    %2998 = vmatprep.subr.mxu0 0.0
    %2999 = vmatpush1.msra.mxu0 %v108
    %3000 = vmatprep.subr.mxu0 0.0
    %3001 = vmatpush1.msra.mxu0 %v109
    %3002 = vmatprep.subr.mxu0 0.0
    %3003 = vmatpush1.msra.mxu0 %v110
    %3004 = vmatprep.subr.mxu0 0.0
    %3005 = vmatpush1.msra.mxu0 %v111
    %3006 = vmatprep.subr.mxu0 0.0
    %3007 = vmatpush1.msra.mxu0 %v112
    %3008 = vmatprep.subr.mxu0 0.0
    %3009 = vmatpush1.msra.mxu0 %v113
    %3010 = vmatprep.subr.mxu0 0.0
    %3011 = vmatpush1.msra.mxu0 %v114
    %3012 = vmatprep.subr.mxu0 0.0
    %3013 = vmatpush1.msra.mxu0 %v115
    %3014 = vmatprep.subr.mxu0 0.0
    %3015 = vmatpush1.msra.mxu0 %v116
    %3016 = vmatprep.subr.mxu0 0.0
    %3017 = vmatpush1.msra.mxu0 %v117
    %3018 = vmatprep.subr.mxu0 0.0
    %3019 = vmatpush1.msra.mxu0 %v118
    %3020 = vmatprep.subr.mxu0 0.0
    %3021 = vmatpush1.msra.mxu0 %v119
    %3022 = vmatprep.subr.mxu0 0.0
    %3023 = vmatpush1.msra.mxu0 %v120
    %3024 = vmatprep.subr.mxu0 0.0
    %3025 = vmatpush1.msra.mxu0 %v121
    %3026 = vmatprep.subr.mxu0 0.0
    %3027 = vmatpush1.msra.mxu0 %v122
    %3028 = vmatprep.subr.mxu0 0.0
    %3029 = vmatpush1.msra.mxu0 %v123
    %3030 = vmatprep.mubr.f32.mxu0 %v2889
    %3031 = vmatmul.mubr.f32.gmra.mrb[0].mxu0 %v2888
    %v3032 = vpop.f32.mrb[0].mxu0
    %v3033 = vadd.f32 %v2963, %v3032
    %v3034 = vpop.f32.mrb[0].mxu0
    %3035 = vdwg.mxu0
    %3036 = vmatprep.subr.mxu0 0.0
    %3037 = vmatpush1.msra.mxu0 %v124
    %3038 = vmatprep.subr.mxu0 0.0
    %3039 = vmatpush1.msra.mxu0 %v125
    %3040 = vmatprep.subr.mxu0 0.0
    %3041 = vmatpush1.msra.mxu0 %v126
    %3042 = vmatprep.subr.mxu0 0.0
    %3043 = vmatpush1.msra.mxu0 %v127
    %3044 = vmatprep.subr.mxu0 0.0
    %3045 = vmatpush1.msra.mxu0 %v128
    %3046 = vmatprep.subr.mxu0 0.0
    %3047 = vmatpush1.msra.mxu0 %v129
    %3048 = vmatprep.subr.mxu0 0.0
    %3049 = vmatpush1.msra.mxu0 %v130
    %3050 = vmatprep.subr.mxu0 0.0
    %3051 = vmatpush1.msra.mxu0 %v131
    %3052 = vmatprep.subr.mxu0 0.0
    %3053 = vmatpush1.msra.mxu0 %v132
    %3054 = vmatprep.subr.mxu0 0.0
    %3055 = vmatpush1.msra.mxu0 %v133
    %3056 = vmatprep.subr.mxu0 0.0
    %3057 = vmatpush1.msra.mxu0 %v134
    %3058 = vmatprep.subr.mxu0 0.0
    %3059 = vmatpush1.msra.mxu0 %v135
    %3060 = vmatprep.subr.mxu0 0.0
    %3061 = vmatpush1.msra.mxu0 %v136
    %3062 = vmatprep.subr.mxu0 0.0
    %3063 = vmatpush1.msra.mxu0 %v137
    %3064 = vmatprep.subr.mxu0 0.0
    %3065 = vmatpush1.msra.mxu0 %v138
    %3066 = vmatprep.subr.mxu0 0.0
    %3067 = vmatpush1.msra.mxu0 %v139
    %3068 = vmatprep.subr.mxu0 0.0
    %3069 = vmatpush1.msra.mxu0 %v140
    %3070 = vmatprep.subr.mxu0 0.0
    %3071 = vmatpush1.msra.mxu0 %v141
    %3072 = vmatprep.subr.mxu0 0.0
    %3073 = vmatpush1.msra.mxu0 %v142
    %3074 = vmatprep.subr.mxu0 0.0
    %3075 = vmatpush1.msra.mxu0 %v143
    %3076 = vmatprep.subr.mxu0 0.0
    %3077 = vmatpush1.msra.mxu0 %v144
    %3078 = vmatprep.subr.mxu0 0.0
    %3079 = vmatpush1.msra.mxu0 %v145
    %3080 = vmatprep.subr.mxu0 0.0
    %3081 = vmatpush1.msra.mxu0 %v146
    %3082 = vmatprep.subr.mxu0 0.0
    %3083 = vmatpush1.msra.mxu0 %v147
    %3084 = vmatprep.subr.mxu0 0.0
    %3085 = vmatpush1.msra.mxu0 %v148
    %3086 = vmatprep.subr.mxu0 0.0
    %3087 = vmatpush1.msra.mxu0 %v149
    %3088 = vmatprep.subr.mxu0 0.0
    %3089 = vmatpush1.msra.mxu0 %v150
    %3090 = vmatprep.subr.mxu0 0.0
    %3091 = vmatpush1.msra.mxu0 %v151
    %3092 = vmatprep.subr.mxu0 0.0
    %3093 = vmatpush1.msra.mxu0 %v152
    %3094 = vmatprep.subr.mxu0 0.0
    %3095 = vmatpush1.msra.mxu0 %v153
    %3096 = vmatprep.subr.mxu0 0.0
    %3097 = vmatpush1.msra.mxu0 %v154
    %3098 = vmatprep.subr.mxu0 0.0
    %3099 = vmatpush1.msra.mxu0 %v155
    %3100 = vmatprep.mubr.f32.mxu0 %v2891
    %3101 = vmatmul.mubr.f32.gmra.mrb[0].mxu0 %v2890
    %v3102 = vpop.f32.mrb[0].mxu0
    %v3103 = vadd.f32 %v3033, %v3102
    %v3104 = vpop.f32.mrb[0].mxu0
    %3105 = vdwg.mxu0
    %3106 = vmatprep.subr.mxu0 0.0
    %3107 = vmatpush1.msra.mxu0 %v156
    %3108 = vmatprep.subr.mxu0 0.0
    %3109 = vmatpush1.msra.mxu0 %v157
    %3110 = vmatprep.subr.mxu0 0.0
    %3111 = vmatpush1.msra.mxu0 %v158
    %3112 = vmatprep.subr.mxu0 0.0
    %3113 = vmatpush1.msra.mxu0 %v159
    %3114 = vmatprep.subr.mxu0 0.0
    %3115 = vmatpush1.msra.mxu0 %v160
    %3116 = vmatprep.subr.mxu0 0.0
    %3117 = vmatpush1.msra.mxu0 %v161
    %3118 = vmatprep.subr.mxu0 0.0
    %3119 = vmatpush1.msra.mxu0 %v162
    %3120 = vmatprep.subr.mxu0 0.0
    %3121 = vmatpush1.msra.mxu0 %v163
    %3122 = vmatprep.subr.mxu0 0.0
    %3123 = vmatpush1.msra.mxu0 %v164
    %3124 = vmatprep.subr.mxu0 0.0
    %3125 = vmatpush1.msra.mxu0 %v165
    %3126 = vmatprep.subr.mxu0 0.0
    %3127 = vmatpush1.msra.mxu0 %v166
    %3128 = vmatprep.subr.mxu0 0.0
    %3129 = vmatpush1.msra.mxu0 %v167
    %3130 = vmatprep.subr.mxu0 0.0
    %3131 = vmatpush1.msra.mxu0 %v168
    %3132 = vmatprep.subr.mxu0 0.0
    %3133 = vmatpush1.msra.mxu0 %v169
    %3134 = vmatprep.subr.mxu0 0.0
    %3135 = vmatpush1.msra.mxu0 %v170
    %3136 = vmatprep.subr.mxu0 0.0
    %3137 = vmatpush1.msra.mxu0 %v171
    %3138 = vmatprep.subr.mxu0 0.0
    %3139 = vmatpush1.msra.mxu0 %v172
    %3140 = vmatprep.subr.mxu0 0.0
    %3141 = vmatpush1.msra.mxu0 %v173
    %3142 = vmatprep.subr.mxu0 0.0
    %3143 = vmatpush1.msra.mxu0 %v174
    %3144 = vmatprep.subr.mxu0 0.0
    %3145 = vmatpush1.msra.mxu0 %v175
    %3146 = vmatprep.subr.mxu0 0.0
    %3147 = vmatpush1.msra.mxu0 %v176
    %3148 = vmatprep.subr.mxu0 0.0
    %3149 = vmatpush1.msra.mxu0 %v177
    %3150 = vmatprep.subr.mxu0 0.0
    %3151 = vmatpush1.msra.mxu0 %v178
    %3152 = vmatprep.subr.mxu0 0.0
    %3153 = vmatpush1.msra.mxu0 %v179
    %3154 = vmatprep.subr.mxu0 0.0
    %3155 = vmatpush1.msra.mxu0 %v180
    %3156 = vmatprep.subr.mxu0 0.0
    %3157 = vmatpush1.msra.mxu0 %v181
    %3158 = vmatprep.subr.mxu0 0.0
    %3159 = vmatpush1.msra.mxu0 %v182
    %3160 = vmatprep.subr.mxu0 0.0
    %3161 = vmatpush1.msra.mxu0 %v183
    %3162 = vmatprep.subr.mxu0 0.0
    %3163 = vmatpush1.msra.mxu0 %v184
    %3164 = vmatprep.subr.mxu0 0.0
    %3165 = vmatpush1.msra.mxu0 %v185
    %3166 = vmatprep.subr.mxu0 0.0
    %3167 = vmatpush1.msra.mxu0 %v186
    %3168 = vmatprep.subr.mxu0 0.0
    %3169 = vmatpush1.msra.mxu0 %v187
    %3170 = vmatprep.mubr.f32.mxu0 %v2893
    %3171 = vmatmul.mubr.f32.gmra.mrb[0].mxu0 %v2892
    %v3172 = vpop.f32.mrb[0].mxu0
    %v3173 = vadd.f32 %v3103, %v3172
    %v3174 = vpop.f32.mrb[0].mxu0
    %3175 = vdwg.mxu0
    %v3176 = vmul.f32 %v2583, 0.8
    %v3177 = vmul.f32 %v3173, 0.2
    %v3178 = vadd.f32 %v3176, %v3177
    %s3179 = scalar_lea.vmem %s1, 8
    %v3180 = vld [vmem:[%s3179] sm:$0x3]
    %v3181 = vmul.f32 %v3180, 0.05
    %v3182 = vadd.f32 %v3178, %v3181
    %s3183 = scalar_lea.vmem [#allocation3], 8
    %3184 = vst.msk [vmem:[%s3183] sm:$0x3] %vm787, %v3182
    %v3185 = vtanh.pop %v3182
    %v3187 = vsel %vm190, %v3185, 0
    %3189 = vmatprep.subr.mxu0 %v29
    %3190 = vmatpush1.msra.mxu0 %v28
    %3191 = vmatprep.subr.mxu0 %v37
    %3192 = vmatpush1.msra.mxu0 %v36
    %3193 = vmatprep.subr.mxu0 %v45
    %3194 = vmatpush1.msra.mxu0 %v44
    %3195 = vmatprep.subr.mxu0 %v53
    %3196 = vmatpush1.msra.mxu0 %v52
    %3197 = vmatprep.subr.mxu0 0.0
    %3198 = vmatpush1.msra.mxu0 0.0
    %3199 = vmatprep.subr.mxu0 0.0
    %3200 = vmatpush1.msra.mxu0 0.0
    %3201 = vmatprep.subr.mxu0 0.0
    %3202 = vmatpush1.msra.mxu0 0.0
    %3203 = vmatprep.subr.mxu0 0.0
    %3204 = vmatpush1.msra.mxu0 0.0
    %3205 = vmatprep.subr.mxu0 0.0
    %3206 = vmatpush1.msra.mxu0 0.0
    %3207 = vmatprep.subr.mxu0 0.0
    %3208 = vmatpush1.msra.mxu0 0.0
    %3209 = vmatprep.subr.mxu0 0.0
    %3210 = vmatpush1.msra.mxu0 0.0
    %3211 = vmatprep.subr.mxu0 0.0
    %3212 = vmatpush1.msra.mxu0 0.0
    %3213 = vmatprep.subr.mxu0 0.0
    %3214 = vmatpush1.msra.mxu0 0.0
    %3215 = vmatprep.subr.mxu0 0.0
    %3216 = vmatpush1.msra.mxu0 0.0
    %3217 = vmatprep.subr.mxu0 0.0
    %3218 = vmatpush1.msra.mxu0 0.0
    %3219 = vmatprep.subr.mxu0 0.0
    %3220 = vmatpush1.msra.mxu0 0.0
    %3221 = vmatprep.subr.mxu0 0.0
    %3222 = vmatpush1.msra.mxu0 0.0
    %3223 = vmatprep.subr.mxu0 0.0
    %3224 = vmatpush1.msra.mxu0 0.0
    %3225 = vmatprep.subr.mxu0 0.0
    %3226 = vmatpush1.msra.mxu0 0.0
    %3227 = vmatprep.subr.mxu0 0.0
    %3228 = vmatpush1.msra.mxu0 0.0
    %3229 = vmatprep.subr.mxu0 0.0
    %3230 = vmatpush1.msra.mxu0 0.0
    %3231 = vmatprep.subr.mxu0 0.0
    %3232 = vmatpush1.msra.mxu0 0.0
    %3233 = vmatprep.subr.mxu0 0.0
    %3234 = vmatpush1.msra.mxu0 0.0
    %3235 = vmatprep.subr.mxu0 0.0
    %3236 = vmatpush1.msra.mxu0 0.0
    %3237 = vmatprep.subr.mxu0 0.0
    %3238 = vmatpush1.msra.mxu0 0.0
    %3239 = vmatprep.subr.mxu0 0.0
    %3240 = vmatpush1.msra.mxu0 0.0
    %3241 = vmatprep.subr.mxu0 0.0
    %3242 = vmatpush1.msra.mxu0 0.0
    %3243 = vmatprep.subr.mxu0 0.0
    %3244 = vmatpush1.msra.mxu0 0.0
    %3245 = vmatprep.subr.mxu0 0.0
    %3246 = vmatpush1.msra.mxu0 0.0
    %3247 = vmatprep.subr.mxu0 0.0
    %3248 = vmatpush1.msra.mxu0 0.0
    %3249 = vmatprep.subr.mxu0 0.0
    %3250 = vmatpush1.msra.mxu0 0.0
    %3251 = vmatprep.subr.mxu0 0.0
    %3252 = vmatpush1.msra.mxu0 0.0
    %3253 = vmatprep.mubr.f32.mxu0 0.0
    %3254 = vmatmul.mubr.f32.gmra.mrb[0].mxu0 %v3187
    %v3255 = vpop.f32.mrb[0].mxu0
    %v3256 = vadd.f32 0.0, %v3255
    %v3257 = vpop.f32.mrb[0].mxu0
    %v3258 = vadd.f32 0.0, %v3257
    %3259 = vdwg.mxu0
    %3260 = vmatprep.subr.mxu0 %v31
    %3261 = vmatpush1.msra.mxu0 %v30
    %3262 = vmatprep.subr.mxu0 %v39
    %3263 = vmatpush1.msra.mxu0 %v38
    %3264 = vmatprep.subr.mxu0 %v47
    %3265 = vmatpush1.msra.mxu0 %v46
    %3266 = vmatprep.subr.mxu0 %v55
    %3267 = vmatpush1.msra.mxu0 %v54
    %3268 = vmatprep.subr.mxu0 0.0
    %3269 = vmatpush1.msra.mxu0 0.0
    %3270 = vmatprep.subr.mxu0 0.0
    %3271 = vmatpush1.msra.mxu0 0.0
    %3272 = vmatprep.subr.mxu0 0.0
    %3273 = vmatpush1.msra.mxu0 0.0
    %3274 = vmatprep.subr.mxu0 0.0
    %3275 = vmatpush1.msra.mxu0 0.0
    %3276 = vmatprep.subr.mxu0 0.0
    %3277 = vmatpush1.msra.mxu0 0.0
    %3278 = vmatprep.subr.mxu0 0.0
    %3279 = vmatpush1.msra.mxu0 0.0
    %3280 = vmatprep.subr.mxu0 0.0
    %3281 = vmatpush1.msra.mxu0 0.0
    %3282 = vmatprep.subr.mxu0 0.0
    %3283 = vmatpush1.msra.mxu0 0.0
    %3284 = vmatprep.subr.mxu0 0.0
    %3285 = vmatpush1.msra.mxu0 0.0
    %3286 = vmatprep.subr.mxu0 0.0
    %3287 = vmatpush1.msra.mxu0 0.0
    %3288 = vmatprep.subr.mxu0 0.0
    %3289 = vmatpush1.msra.mxu0 0.0
    %3290 = vmatprep.subr.mxu0 0.0
    %3291 = vmatpush1.msra.mxu0 0.0
    %3292 = vmatprep.subr.mxu0 0.0
    %3293 = vmatpush1.msra.mxu0 0.0
    %3294 = vmatprep.subr.mxu0 0.0
    %3295 = vmatpush1.msra.mxu0 0.0
    %3296 = vmatprep.subr.mxu0 0.0
    %3297 = vmatpush1.msra.mxu0 0.0
    %3298 = vmatprep.subr.mxu0 0.0
    %3299 = vmatpush1.msra.mxu0 0.0
    %3300 = vmatprep.subr.mxu0 0.0
    %3301 = vmatpush1.msra.mxu0 0.0
    %3302 = vmatprep.subr.mxu0 0.0
    %3303 = vmatpush1.msra.mxu0 0.0
    %3304 = vmatprep.subr.mxu0 0.0
    %3305 = vmatpush1.msra.mxu0 0.0
    %3306 = vmatprep.subr.mxu0 0.0
    %3307 = vmatpush1.msra.mxu0 0.0
    %3308 = vmatprep.subr.mxu0 0.0
    %3309 = vmatpush1.msra.mxu0 0.0
    %3310 = vmatprep.subr.mxu0 0.0
    %3311 = vmatpush1.msra.mxu0 0.0
    %3312 = vmatprep.subr.mxu0 0.0
    %3313 = vmatpush1.msra.mxu0 0.0
    %3314 = vmatprep.subr.mxu0 0.0
    %3315 = vmatpush1.msra.mxu0 0.0
    %3316 = vmatprep.subr.mxu0 0.0
    %3317 = vmatpush1.msra.mxu0 0.0
    %3318 = vmatprep.subr.mxu0 0.0
    %3319 = vmatpush1.msra.mxu0 0.0
    %3320 = vmatprep.subr.mxu0 0.0
    %3321 = vmatpush1.msra.mxu0 0.0
    %3322 = vmatprep.subr.mxu0 0.0
    %3323 = vmatpush1.msra.mxu0 0.0
    %3324 = vmatprep.mubr.f32.mxu0 0.0
    %3325 = vmatmul.mubr.f32.gmra.mrb[0].mxu0 %v3187
    %v3326 = vpop.f32.mrb[0].mxu0
    %v3327 = vadd.f32 0.0, %v3326
    %v3328 = vpop.f32.mrb[0].mxu0
    %v3329 = vadd.f32 0.0, %v3328
    %3330 = vdwg.mxu0
    %3331 = vmatprep.subr.mxu0 %v33
    %3332 = vmatpush1.msra.mxu0 %v32
    %3333 = vmatprep.subr.mxu0 %v41
    %3334 = vmatpush1.msra.mxu0 %v40
    %3335 = vmatprep.subr.mxu0 %v49
    %3336 = vmatpush1.msra.mxu0 %v48
    %3337 = vmatprep.subr.mxu0 %v57
    %3338 = vmatpush1.msra.mxu0 %v56
    %3339 = vmatprep.subr.mxu0 0.0
    %3340 = vmatpush1.msra.mxu0 0.0
    %3341 = vmatprep.subr.mxu0 0.0
    %3342 = vmatpush1.msra.mxu0 0.0
    %3343 = vmatprep.subr.mxu0 0.0
    %3344 = vmatpush1.msra.mxu0 0.0
    %3345 = vmatprep.subr.mxu0 0.0
    %3346 = vmatpush1.msra.mxu0 0.0
    %3347 = vmatprep.subr.mxu0 0.0
    %3348 = vmatpush1.msra.mxu0 0.0
    %3349 = vmatprep.subr.mxu0 0.0
    %3350 = vmatpush1.msra.mxu0 0.0
    %3351 = vmatprep.subr.mxu0 0.0
    %3352 = vmatpush1.msra.mxu0 0.0
    %3353 = vmatprep.subr.mxu0 0.0
    %3354 = vmatpush1.msra.mxu0 0.0
    %3355 = vmatprep.subr.mxu0 0.0
    %3356 = vmatpush1.msra.mxu0 0.0
    %3357 = vmatprep.subr.mxu0 0.0
    %3358 = vmatpush1.msra.mxu0 0.0
    %3359 = vmatprep.subr.mxu0 0.0
    %3360 = vmatpush1.msra.mxu0 0.0
    %3361 = vmatprep.subr.mxu0 0.0
    %3362 = vmatpush1.msra.mxu0 0.0
    %3363 = vmatprep.subr.mxu0 0.0
    %3364 = vmatpush1.msra.mxu0 0.0
    %3365 = vmatprep.subr.mxu0 0.0
    %3366 = vmatpush1.msra.mxu0 0.0
    %3367 = vmatprep.subr.mxu0 0.0
    %3368 = vmatpush1.msra.mxu0 0.0
    %3369 = vmatprep.subr.mxu0 0.0
    %3370 = vmatpush1.msra.mxu0 0.0
    %3371 = vmatprep.subr.mxu0 0.0
    %3372 = vmatpush1.msra.mxu0 0.0
    %3373 = vmatprep.subr.mxu0 0.0
    %3374 = vmatpush1.msra.mxu0 0.0
    %3375 = vmatprep.subr.mxu0 0.0
    %3376 = vmatpush1.msra.mxu0 0.0
    %3377 = vmatprep.subr.mxu0 0.0
    %3378 = vmatpush1.msra.mxu0 0.0
    %3379 = vmatprep.subr.mxu0 0.0
    %3380 = vmatpush1.msra.mxu0 0.0
    %3381 = vmatprep.subr.mxu0 0.0
    %3382 = vmatpush1.msra.mxu0 0.0
    %3383 = vmatprep.subr.mxu0 0.0
    %3384 = vmatpush1.msra.mxu0 0.0
    %3385 = vmatprep.subr.mxu0 0.0
    %3386 = vmatpush1.msra.mxu0 0.0
    %3387 = vmatprep.subr.mxu0 0.0
    %3388 = vmatpush1.msra.mxu0 0.0
    %3389 = vmatprep.subr.mxu0 0.0
    %3390 = vmatpush1.msra.mxu0 0.0
    %3391 = vmatprep.subr.mxu0 0.0
    %3392 = vmatpush1.msra.mxu0 0.0
    %3393 = vmatprep.subr.mxu0 0.0
    %3394 = vmatpush1.msra.mxu0 0.0
    %3395 = vmatprep.mubr.f32.mxu0 0.0
    %3396 = vmatmul.mubr.f32.gmra.mrb[0].mxu0 %v3187
    %v3397 = vpop.f32.mrb[0].mxu0
    %v3398 = vadd.f32 0.0, %v3397
    %v3399 = vpop.f32.mrb[0].mxu0
    %v3400 = vadd.f32 0.0, %v3399
    %3401 = vdwg.mxu0
    %3402 = vmatprep.subr.mxu0 %v35
    %3403 = vmatpush1.msra.mxu0 %v34
    %3404 = vmatprep.subr.mxu0 %v43
    %3405 = vmatpush1.msra.mxu0 %v42
    %3406 = vmatprep.subr.mxu0 %v51
    %3407 = vmatpush1.msra.mxu0 %v50
    %3408 = vmatprep.subr.mxu0 %v59
    %3409 = vmatpush1.msra.mxu0 %v58
    %3410 = vmatprep.subr.mxu0 0.0
    %3411 = vmatpush1.msra.mxu0 0.0
    %3412 = vmatprep.subr.mxu0 0.0
    %3413 = vmatpush1.msra.mxu0 0.0
    %3414 = vmatprep.subr.mxu0 0.0
    %3415 = vmatpush1.msra.mxu0 0.0
    %3416 = vmatprep.subr.mxu0 0.0
    %3417 = vmatpush1.msra.mxu0 0.0
    %3418 = vmatprep.subr.mxu0 0.0
    %3419 = vmatpush1.msra.mxu0 0.0
    %3420 = vmatprep.subr.mxu0 0.0
    %3421 = vmatpush1.msra.mxu0 0.0
    %3422 = vmatprep.subr.mxu0 0.0
    %3423 = vmatpush1.msra.mxu0 0.0
    %3424 = vmatprep.subr.mxu0 0.0
    %3425 = vmatpush1.msra.mxu0 0.0
    %3426 = vmatprep.subr.mxu0 0.0
    %3427 = vmatpush1.msra.mxu0 0.0
    %3428 = vmatprep.subr.mxu0 0.0
    %3429 = vmatpush1.msra.mxu0 0.0
    %3430 = vmatprep.subr.mxu0 0.0
    %3431 = vmatpush1.msra.mxu0 0.0
    %3432 = vmatprep.subr.mxu0 0.0
    %3433 = vmatpush1.msra.mxu0 0.0
    %3434 = vmatprep.subr.mxu0 0.0
    %3435 = vmatpush1.msra.mxu0 0.0
    %3436 = vmatprep.subr.mxu0 0.0
    %3437 = vmatpush1.msra.mxu0 0.0
    %3438 = vmatprep.subr.mxu0 0.0
    %3439 = vmatpush1.msra.mxu0 0.0
    %3440 = vmatprep.subr.mxu0 0.0
    %3441 = vmatpush1.msra.mxu0 0.0
    %3442 = vmatprep.subr.mxu0 0.0
    %3443 = vmatpush1.msra.mxu0 0.0
    %3444 = vmatprep.subr.mxu0 0.0
    %3445 = vmatpush1.msra.mxu0 0.0
    %3446 = vmatprep.subr.mxu0 0.0
    %3447 = vmatpush1.msra.mxu0 0.0
    %3448 = vmatprep.subr.mxu0 0.0
    %3449 = vmatpush1.msra.mxu0 0.0
    %3450 = vmatprep.subr.mxu0 0.0
    %3451 = vmatpush1.msra.mxu0 0.0
    %3452 = vmatprep.subr.mxu0 0.0
    %3453 = vmatpush1.msra.mxu0 0.0
    %3454 = vmatprep.subr.mxu0 0.0
    %3455 = vmatpush1.msra.mxu0 0.0
    %3456 = vmatprep.subr.mxu0 0.0
    %3457 = vmatpush1.msra.mxu0 0.0
    %3458 = vmatprep.subr.mxu0 0.0
    %3459 = vmatpush1.msra.mxu0 0.0
    %3460 = vmatprep.subr.mxu0 0.0
    %3461 = vmatpush1.msra.mxu0 0.0
    %3462 = vmatprep.subr.mxu0 0.0
    %3463 = vmatpush1.msra.mxu0 0.0
    %3464 = vmatprep.subr.mxu0 0.0
    %3465 = vmatpush1.msra.mxu0 0.0
    %3466 = vmatprep.mubr.f32.mxu0 0.0
    %3467 = vmatmul.mubr.f32.gmra.mrb[0].mxu0 %v3187
    %v3468 = vpop.f32.mrb[0].mxu0
    %v3469 = vadd.f32 0.0, %v3468
    %v3470 = vpop.f32.mrb[0].mxu0
    %v3471 = vadd.f32 0.0, %v3470
    %3472 = vdwg.mxu0
    %3473 = vrot.lane.b32.xlu0 %v3185, 32
    %v3474 = vpop.permute.xlu0 %3473
    %3476 = vrot.lane.b32.xlu0 %v3185, 64
    %v3477 = vpop.permute.xlu0 %3476
    %3479 = vrot.lane.b32.xlu0 %v3185, 96
    %v3480 = vpop.permute.xlu0 %3479
    %v3482 = vsel %vm190, %v3185, %v3474
    %v3483 = vsel %vm488, %v3482, %v3477
    %v3484 = vsel %vm490, %v3483, %v3480
    %v3485 = vmul.f32 %v3256, %v3484
    %v3486 = vmul.f32 %v3258, %v3484
    %v3487 = vmul.f32 %v3327, %v3484
    %v3488 = vmul.f32 %v3329, %v3484
    %v3489 = vmul.f32 %v3398, %v3484
    %v3490 = vmul.f32 %v3400, %v3484
    %v3491 = vmul.f32 %v3469, %v3484
    %v3492 = vmul.f32 %v3471, %v3484
    %s3493 = scalar_lea.vmem %s0, 10
    %v3494 = vld [vmem:[%s3493] sm:$0x3]
    %3495 = vmatprep.subr.mxu0 0.0
    %3496 = vmatpush1.msra.mxu0 %v60
    %3497 = vmatprep.subr.mxu0 0.0
    %3498 = vmatpush1.msra.mxu0 %v61
    %3499 = vmatprep.subr.mxu0 0.0
    %3500 = vmatpush1.msra.mxu0 %v62
    %3501 = vmatprep.subr.mxu0 0.0
    %3502 = vmatpush1.msra.mxu0 %v63
    %3503 = vmatprep.subr.mxu0 0.0
    %3504 = vmatpush1.msra.mxu0 %v64
    %3505 = vmatprep.subr.mxu0 0.0
    %3506 = vmatpush1.msra.mxu0 %v65
    %3507 = vmatprep.subr.mxu0 0.0
    %3508 = vmatpush1.msra.mxu0 %v66
    %3509 = vmatprep.subr.mxu0 0.0
    %3510 = vmatpush1.msra.mxu0 %v67
    %3511 = vmatprep.subr.mxu0 0.0
    %3512 = vmatpush1.msra.mxu0 %v68
    %3513 = vmatprep.subr.mxu0 0.0
    %3514 = vmatpush1.msra.mxu0 %v69
    %3515 = vmatprep.subr.mxu0 0.0
    %3516 = vmatpush1.msra.mxu0 %v70
    %3517 = vmatprep.subr.mxu0 0.0
    %3518 = vmatpush1.msra.mxu0 %v71
    %3519 = vmatprep.subr.mxu0 0.0
    %3520 = vmatpush1.msra.mxu0 %v72
    %3521 = vmatprep.subr.mxu0 0.0
    %3522 = vmatpush1.msra.mxu0 %v73
    %3523 = vmatprep.subr.mxu0 0.0
    %3524 = vmatpush1.msra.mxu0 %v74
    %3525 = vmatprep.subr.mxu0 0.0
    %3526 = vmatpush1.msra.mxu0 %v75
    %3527 = vmatprep.subr.mxu0 0.0
    %3528 = vmatpush1.msra.mxu0 %v76
    %3529 = vmatprep.subr.mxu0 0.0
    %3530 = vmatpush1.msra.mxu0 %v77
    %3531 = vmatprep.subr.mxu0 0.0
    %3532 = vmatpush1.msra.mxu0 %v78
    %3533 = vmatprep.subr.mxu0 0.0
    %3534 = vmatpush1.msra.mxu0 %v79
    %3535 = vmatprep.subr.mxu0 0.0
    %3536 = vmatpush1.msra.mxu0 %v80
    %3537 = vmatprep.subr.mxu0 0.0
    %3538 = vmatpush1.msra.mxu0 %v81
    %3539 = vmatprep.subr.mxu0 0.0
    %3540 = vmatpush1.msra.mxu0 %v82
    %3541 = vmatprep.subr.mxu0 0.0
    %3542 = vmatpush1.msra.mxu0 %v83
    %3543 = vmatprep.subr.mxu0 0.0
    %3544 = vmatpush1.msra.mxu0 %v84
    %3545 = vmatprep.subr.mxu0 0.0
    %3546 = vmatpush1.msra.mxu0 %v85
    %3547 = vmatprep.subr.mxu0 0.0
    %3548 = vmatpush1.msra.mxu0 %v86
    %3549 = vmatprep.subr.mxu0 0.0
    %3550 = vmatpush1.msra.mxu0 %v87
    %3551 = vmatprep.subr.mxu0 0.0
    %3552 = vmatpush1.msra.mxu0 %v88
    %3553 = vmatprep.subr.mxu0 0.0
    %3554 = vmatpush1.msra.mxu0 %v89
    %3555 = vmatprep.subr.mxu0 0.0
    %3556 = vmatpush1.msra.mxu0 %v90
    %3557 = vmatprep.subr.mxu0 0.0
    %3558 = vmatpush1.msra.mxu0 %v91
    %3559 = vmatprep.mubr.f32.mxu0 %v3486
    %3560 = vmatmul.mubr.f32.gmra.mrb[0].mxu0 %v3485
    %v3561 = vpop.f32.mrb[0].mxu0
    %v3562 = vadd.f32 %v3494, %v3561
    %v3563 = vpop.f32.mrb[0].mxu0
    %3564 = vdwg.mxu0
    %3565 = vmatprep.subr.mxu0 0.0
    %3566 = vmatpush1.msra.mxu0 %v92
    %3567 = vmatprep.subr.mxu0 0.0
    %3568 = vmatpush1.msra.mxu0 %v93
    %3569 = vmatprep.subr.mxu0 0.0
    %3570 = vmatpush1.msra.mxu0 %v94
    %3571 = vmatprep.subr.mxu0 0.0
    %3572 = vmatpush1.msra.mxu0 %v95
    %3573 = vmatprep.subr.mxu0 0.0
    %3574 = vmatpush1.msra.mxu0 %v96
    %3575 = vmatprep.subr.mxu0 0.0
    %3576 = vmatpush1.msra.mxu0 %v97
    %3577 = vmatprep.subr.mxu0 0.0
    %3578 = vmatpush1.msra.mxu0 %v98
    %3579 = vmatprep.subr.mxu0 0.0
    %3580 = vmatpush1.msra.mxu0 %v99
    %3581 = vmatprep.subr.mxu0 0.0
    %3582 = vmatpush1.msra.mxu0 %v100
    %3583 = vmatprep.subr.mxu0 0.0
    %3584 = vmatpush1.msra.mxu0 %v101
    %3585 = vmatprep.subr.mxu0 0.0
    %3586 = vmatpush1.msra.mxu0 %v102
    %3587 = vmatprep.subr.mxu0 0.0
    %3588 = vmatpush1.msra.mxu0 %v103
    %3589 = vmatprep.subr.mxu0 0.0
    %3590 = vmatpush1.msra.mxu0 %v104
    %3591 = vmatprep.subr.mxu0 0.0
    %3592 = vmatpush1.msra.mxu0 %v105
    %3593 = vmatprep.subr.mxu0 0.0
    %3594 = vmatpush1.msra.mxu0 %v106
    %3595 = vmatprep.subr.mxu0 0.0
    %3596 = vmatpush1.msra.mxu0 %v107
    %3597 = vmatprep.subr.mxu0 0.0
    %3598 = vmatpush1.msra.mxu0 %v108
    %3599 = vmatprep.subr.mxu0 0.0
    %3600 = vmatpush1.msra.mxu0 %v109
    %3601 = vmatprep.subr.mxu0 0.0
    %3602 = vmatpush1.msra.mxu0 %v110
    %3603 = vmatprep.subr.mxu0 0.0
    %3604 = vmatpush1.msra.mxu0 %v111
    %3605 = vmatprep.subr.mxu0 0.0
    %3606 = vmatpush1.msra.mxu0 %v112
    %3607 = vmatprep.subr.mxu0 0.0
    %3608 = vmatpush1.msra.mxu0 %v113
    %3609 = vmatprep.subr.mxu0 0.0
    %3610 = vmatpush1.msra.mxu0 %v114
    %3611 = vmatprep.subr.mxu0 0.0
    %3612 = vmatpush1.msra.mxu0 %v115
    %3613 = vmatprep.subr.mxu0 0.0
    %3614 = vmatpush1.msra.mxu0 %v116
    %3615 = vmatprep.subr.mxu0 0.0
    %3616 = vmatpush1.msra.mxu0 %v117
    %3617 = vmatprep.subr.mxu0 0.0
    %3618 = vmatpush1.msra.mxu0 %v118
    %3619 = vmatprep.subr.mxu0 0.0
    %3620 = vmatpush1.msra.mxu0 %v119
    %3621 = vmatprep.subr.mxu0 0.0
    %3622 = vmatpush1.msra.mxu0 %v120
    %3623 = vmatprep.subr.mxu0 0.0
    %3624 = vmatpush1.msra.mxu0 %v121
    %3625 = vmatprep.subr.mxu0 0.0
    %3626 = vmatpush1.msra.mxu0 %v122
    %3627 = vmatprep.subr.mxu0 0.0
    %3628 = vmatpush1.msra.mxu0 %v123
    %3629 = vmatprep.mubr.f32.mxu0 %v3488
    %3630 = vmatmul.mubr.f32.gmra.mrb[0].mxu0 %v3487
    %v3631 = vpop.f32.mrb[0].mxu0
    %v3632 = vadd.f32 %v3562, %v3631
    %v3633 = vpop.f32.mrb[0].mxu0
    %3634 = vdwg.mxu0
    %3635 = vmatprep.subr.mxu0 0.0
    %3636 = vmatpush1.msra.mxu0 %v124
    %3637 = vmatprep.subr.mxu0 0.0
    %3638 = vmatpush1.msra.mxu0 %v125
    %3639 = vmatprep.subr.mxu0 0.0
    %3640 = vmatpush1.msra.mxu0 %v126
    %3641 = vmatprep.subr.mxu0 0.0
    %3642 = vmatpush1.msra.mxu0 %v127
    %3643 = vmatprep.subr.mxu0 0.0
    %3644 = vmatpush1.msra.mxu0 %v128
    %3645 = vmatprep.subr.mxu0 0.0
    %3646 = vmatpush1.msra.mxu0 %v129
    %3647 = vmatprep.subr.mxu0 0.0
    %3648 = vmatpush1.msra.mxu0 %v130
    %3649 = vmatprep.subr.mxu0 0.0
    %3650 = vmatpush1.msra.mxu0 %v131
    %3651 = vmatprep.subr.mxu0 0.0
    %3652 = vmatpush1.msra.mxu0 %v132
    %3653 = vmatprep.subr.mxu0 0.0
    %3654 = vmatpush1.msra.mxu0 %v133
    %3655 = vmatprep.subr.mxu0 0.0
    %3656 = vmatpush1.msra.mxu0 %v134
    %3657 = vmatprep.subr.mxu0 0.0
    %3658 = vmatpush1.msra.mxu0 %v135
    %3659 = vmatprep.subr.mxu0 0.0
    %3660 = vmatpush1.msra.mxu0 %v136
    %3661 = vmatprep.subr.mxu0 0.0
    %3662 = vmatpush1.msra.mxu0 %v137
    %3663 = vmatprep.subr.mxu0 0.0
    %3664 = vmatpush1.msra.mxu0 %v138
    %3665 = vmatprep.subr.mxu0 0.0
    %3666 = vmatpush1.msra.mxu0 %v139
    %3667 = vmatprep.subr.mxu0 0.0
    %3668 = vmatpush1.msra.mxu0 %v140
    %3669 = vmatprep.subr.mxu0 0.0
    %3670 = vmatpush1.msra.mxu0 %v141
    %3671 = vmatprep.subr.mxu0 0.0
    %3672 = vmatpush1.msra.mxu0 %v142
    %3673 = vmatprep.subr.mxu0 0.0
    %3674 = vmatpush1.msra.mxu0 %v143
    %3675 = vmatprep.subr.mxu0 0.0
    %3676 = vmatpush1.msra.mxu0 %v144
    %3677 = vmatprep.subr.mxu0 0.0
    %3678 = vmatpush1.msra.mxu0 %v145
    %3679 = vmatprep.subr.mxu0 0.0
    %3680 = vmatpush1.msra.mxu0 %v146
    %3681 = vmatprep.subr.mxu0 0.0
    %3682 = vmatpush1.msra.mxu0 %v147
    %3683 = vmatprep.subr.mxu0 0.0
    %3684 = vmatpush1.msra.mxu0 %v148
    %3685 = vmatprep.subr.mxu0 0.0
    %3686 = vmatpush1.msra.mxu0 %v149
    %3687 = vmatprep.subr.mxu0 0.0
    %3688 = vmatpush1.msra.mxu0 %v150
    %3689 = vmatprep.subr.mxu0 0.0
    %3690 = vmatpush1.msra.mxu0 %v151
    %3691 = vmatprep.subr.mxu0 0.0
    %3692 = vmatpush1.msra.mxu0 %v152
    %3693 = vmatprep.subr.mxu0 0.0
    %3694 = vmatpush1.msra.mxu0 %v153
    %3695 = vmatprep.subr.mxu0 0.0
    %3696 = vmatpush1.msra.mxu0 %v154
    %3697 = vmatprep.subr.mxu0 0.0
    %3698 = vmatpush1.msra.mxu0 %v155
    %3699 = vmatprep.mubr.f32.mxu0 %v3490
    %3700 = vmatmul.mubr.f32.gmra.mrb[0].mxu0 %v3489
    %v3701 = vpop.f32.mrb[0].mxu0
    %v3702 = vadd.f32 %v3632, %v3701
    %v3703 = vpop.f32.mrb[0].mxu0
    %3704 = vdwg.mxu0
    %3705 = vmatprep.subr.mxu0 0.0
    %3706 = vmatpush1.msra.mxu0 %v156
    %3707 = vmatprep.subr.mxu0 0.0
    %3708 = vmatpush1.msra.mxu0 %v157
    %3709 = vmatprep.subr.mxu0 0.0
    %3710 = vmatpush1.msra.mxu0 %v158
    %3711 = vmatprep.subr.mxu0 0.0
    %3712 = vmatpush1.msra.mxu0 %v159
    %3713 = vmatprep.subr.mxu0 0.0
    %3714 = vmatpush1.msra.mxu0 %v160
    %3715 = vmatprep.subr.mxu0 0.0
    %3716 = vmatpush1.msra.mxu0 %v161
    %3717 = vmatprep.subr.mxu0 0.0
    %3718 = vmatpush1.msra.mxu0 %v162
    %3719 = vmatprep.subr.mxu0 0.0
    %3720 = vmatpush1.msra.mxu0 %v163
    %3721 = vmatprep.subr.mxu0 0.0
    %3722 = vmatpush1.msra.mxu0 %v164
    %3723 = vmatprep.subr.mxu0 0.0
    %3724 = vmatpush1.msra.mxu0 %v165
    %3725 = vmatprep.subr.mxu0 0.0
    %3726 = vmatpush1.msra.mxu0 %v166
    %3727 = vmatprep.subr.mxu0 0.0
    %3728 = vmatpush1.msra.mxu0 %v167
    %3729 = vmatprep.subr.mxu0 0.0
    %3730 = vmatpush1.msra.mxu0 %v168
    %3731 = vmatprep.subr.mxu0 0.0
    %3732 = vmatpush1.msra.mxu0 %v169
    %3733 = vmatprep.subr.mxu0 0.0
    %3734 = vmatpush1.msra.mxu0 %v170
    %3735 = vmatprep.subr.mxu0 0.0
    %3736 = vmatpush1.msra.mxu0 %v171
    %3737 = vmatprep.subr.mxu0 0.0
    %3738 = vmatpush1.msra.mxu0 %v172
    %3739 = vmatprep.subr.mxu0 0.0
    %3740 = vmatpush1.msra.mxu0 %v173
    %3741 = vmatprep.subr.mxu0 0.0
    %3742 = vmatpush1.msra.mxu0 %v174
    %3743 = vmatprep.subr.mxu0 0.0
    %3744 = vmatpush1.msra.mxu0 %v175
    %3745 = vmatprep.subr.mxu0 0.0
    %3746 = vmatpush1.msra.mxu0 %v176
    %3747 = vmatprep.subr.mxu0 0.0
    %3748 = vmatpush1.msra.mxu0 %v177
    %3749 = vmatprep.subr.mxu0 0.0
    %3750 = vmatpush1.msra.mxu0 %v178
    %3751 = vmatprep.subr.mxu0 0.0
    %3752 = vmatpush1.msra.mxu0 %v179
    %3753 = vmatprep.subr.mxu0 0.0
    %3754 = vmatpush1.msra.mxu0 %v180
    %3755 = vmatprep.subr.mxu0 0.0
    %3756 = vmatpush1.msra.mxu0 %v181
    %3757 = vmatprep.subr.mxu0 0.0
    %3758 = vmatpush1.msra.mxu0 %v182
    %3759 = vmatprep.subr.mxu0 0.0
    %3760 = vmatpush1.msra.mxu0 %v183
    %3761 = vmatprep.subr.mxu0 0.0
    %3762 = vmatpush1.msra.mxu0 %v184
    %3763 = vmatprep.subr.mxu0 0.0
    %3764 = vmatpush1.msra.mxu0 %v185
    %3765 = vmatprep.subr.mxu0 0.0
    %3766 = vmatpush1.msra.mxu0 %v186
    %3767 = vmatprep.subr.mxu0 0.0
    %3768 = vmatpush1.msra.mxu0 %v187
    %3769 = vmatprep.mubr.f32.mxu0 %v3492
    %3770 = vmatmul.mubr.f32.gmra.mrb[0].mxu0 %v3491
    %v3771 = vpop.f32.mrb[0].mxu0
    %v3772 = vadd.f32 %v3702, %v3771
    %v3773 = vpop.f32.mrb[0].mxu0
    %3774 = vdwg.mxu0
    %v3775 = vmul.f32 %v3182, 0.8
    %v3776 = vmul.f32 %v3772, 0.2
    %v3777 = vadd.f32 %v3775, %v3776
    %s3778 = scalar_lea.vmem %s1, 10
    %v3779 = vld [vmem:[%s3778] sm:$0x3]
    %v3780 = vmul.f32 %v3779, 0.05
    %v3781 = vadd.f32 %v3777, %v3780
    %s3782 = scalar_lea.vmem [#allocation3], 10
    %3783 = vst.msk [vmem:[%s3782] sm:$0x3] %vm787, %v3781
    %v3784 = vtanh.pop %v3781
    %v3786 = vsel %vm190, %v3784, 0
    %3788 = vmatprep.subr.mxu0 %v29
    %3789 = vmatpush1.msra.mxu0 %v28
    %3790 = vmatprep.subr.mxu0 %v37
    %3791 = vmatpush1.msra.mxu0 %v36
    %3792 = vmatprep.subr.mxu0 %v45
    %3793 = vmatpush1.msra.mxu0 %v44
    %3794 = vmatprep.subr.mxu0 %v53
    %3795 = vmatpush1.msra.mxu0 %v52
    %3796 = vmatprep.subr.mxu0 0.0
    %3797 = vmatpush1.msra.mxu0 0.0
    %3798 = vmatprep.subr.mxu0 0.0
    %3799 = vmatpush1.msra.mxu0 0.0
    %3800 = vmatprep.subr.mxu0 0.0
    %3801 = vmatpush1.msra.mxu0 0.0
    %3802 = vmatprep.subr.mxu0 0.0
    %3803 = vmatpush1.msra.mxu0 0.0
    %3804 = vmatprep.subr.mxu0 0.0
    %3805 = vmatpush1.msra.mxu0 0.0
    %3806 = vmatprep.subr.mxu0 0.0
    %3807 = vmatpush1.msra.mxu0 0.0
    %3808 = vmatprep.subr.mxu0 0.0
    %3809 = vmatpush1.msra.mxu0 0.0
    %3810 = vmatprep.subr.mxu0 0.0
    %3811 = vmatpush1.msra.mxu0 0.0
    %3812 = vmatprep.subr.mxu0 0.0
    %3813 = vmatpush1.msra.mxu0 0.0
    %3814 = vmatprep.subr.mxu0 0.0
    %3815 = vmatpush1.msra.mxu0 0.0
    %3816 = vmatprep.subr.mxu0 0.0
    %3817 = vmatpush1.msra.mxu0 0.0
    %3818 = vmatprep.subr.mxu0 0.0
    %3819 = vmatpush1.msra.mxu0 0.0
    %3820 = vmatprep.subr.mxu0 0.0
    %3821 = vmatpush1.msra.mxu0 0.0
    %3822 = vmatprep.subr.mxu0 0.0
    %3823 = vmatpush1.msra.mxu0 0.0
    %3824 = vmatprep.subr.mxu0 0.0
    %3825 = vmatpush1.msra.mxu0 0.0
    %3826 = vmatprep.subr.mxu0 0.0
    %3827 = vmatpush1.msra.mxu0 0.0
    %3828 = vmatprep.subr.mxu0 0.0
    %3829 = vmatpush1.msra.mxu0 0.0
    %3830 = vmatprep.subr.mxu0 0.0
    %3831 = vmatpush1.msra.mxu0 0.0
    %3832 = vmatprep.subr.mxu0 0.0
    %3833 = vmatpush1.msra.mxu0 0.0
    %3834 = vmatprep.subr.mxu0 0.0
    %3835 = vmatpush1.msra.mxu0 0.0
    %3836 = vmatprep.subr.mxu0 0.0
    %3837 = vmatpush1.msra.mxu0 0.0
    %3838 = vmatprep.subr.mxu0 0.0
    %3839 = vmatpush1.msra.mxu0 0.0
    %3840 = vmatprep.subr.mxu0 0.0
    %3841 = vmatpush1.msra.mxu0 0.0
    %3842 = vmatprep.subr.mxu0 0.0
    %3843 = vmatpush1.msra.mxu0 0.0
    %3844 = vmatprep.subr.mxu0 0.0
    %3845 = vmatpush1.msra.mxu0 0.0
    %3846 = vmatprep.subr.mxu0 0.0
    %3847 = vmatpush1.msra.mxu0 0.0
    %3848 = vmatprep.subr.mxu0 0.0
    %3849 = vmatpush1.msra.mxu0 0.0
    %3850 = vmatprep.subr.mxu0 0.0
    %3851 = vmatpush1.msra.mxu0 0.0
    %3852 = vmatprep.mubr.f32.mxu0 0.0
    %3853 = vmatmul.mubr.f32.gmra.mrb[0].mxu0 %v3786
    %v3854 = vpop.f32.mrb[0].mxu0
    %v3855 = vadd.f32 0.0, %v3854
    %v3856 = vpop.f32.mrb[0].mxu0
    %v3857 = vadd.f32 0.0, %v3856
    %3858 = vdwg.mxu0
    %3859 = vmatprep.subr.mxu0 %v31
    %3860 = vmatpush1.msra.mxu0 %v30
    %3861 = vmatprep.subr.mxu0 %v39
    %3862 = vmatpush1.msra.mxu0 %v38
    %3863 = vmatprep.subr.mxu0 %v47
    %3864 = vmatpush1.msra.mxu0 %v46
    %3865 = vmatprep.subr.mxu0 %v55
    %3866 = vmatpush1.msra.mxu0 %v54
    %3867 = vmatprep.subr.mxu0 0.0
    %3868 = vmatpush1.msra.mxu0 0.0
    %3869 = vmatprep.subr.mxu0 0.0
    %3870 = vmatpush1.msra.mxu0 0.0
    %3871 = vmatprep.subr.mxu0 0.0
    %3872 = vmatpush1.msra.mxu0 0.0
    %3873 = vmatprep.subr.mxu0 0.0
    %3874 = vmatpush1.msra.mxu0 0.0
    %3875 = vmatprep.subr.mxu0 0.0
    %3876 = vmatpush1.msra.mxu0 0.0
    %3877 = vmatprep.subr.mxu0 0.0
    %3878 = vmatpush1.msra.mxu0 0.0
    %3879 = vmatprep.subr.mxu0 0.0
    %3880 = vmatpush1.msra.mxu0 0.0
    %3881 = vmatprep.subr.mxu0 0.0
    %3882 = vmatpush1.msra.mxu0 0.0
    %3883 = vmatprep.subr.mxu0 0.0
    %3884 = vmatpush1.msra.mxu0 0.0
    %3885 = vmatprep.subr.mxu0 0.0
    %3886 = vmatpush1.msra.mxu0 0.0
    %3887 = vmatprep.subr.mxu0 0.0
    %3888 = vmatpush1.msra.mxu0 0.0
    %3889 = vmatprep.subr.mxu0 0.0
    %3890 = vmatpush1.msra.mxu0 0.0
    %3891 = vmatprep.subr.mxu0 0.0
    %3892 = vmatpush1.msra.mxu0 0.0
    %3893 = vmatprep.subr.mxu0 0.0
    %3894 = vmatpush1.msra.mxu0 0.0
    %3895 = vmatprep.subr.mxu0 0.0
    %3896 = vmatpush1.msra.mxu0 0.0
    %3897 = vmatprep.subr.mxu0 0.0
    %3898 = vmatpush1.msra.mxu0 0.0
    %3899 = vmatprep.subr.mxu0 0.0
    %3900 = vmatpush1.msra.mxu0 0.0
    %3901 = vmatprep.subr.mxu0 0.0
    %3902 = vmatpush1.msra.mxu0 0.0
    %3903 = vmatprep.subr.mxu0 0.0
    %3904 = vmatpush1.msra.mxu0 0.0
    %3905 = vmatprep.subr.mxu0 0.0
    %3906 = vmatpush1.msra.mxu0 0.0
    %3907 = vmatprep.subr.mxu0 0.0
    %3908 = vmatpush1.msra.mxu0 0.0
    %3909 = vmatprep.subr.mxu0 0.0
    %3910 = vmatpush1.msra.mxu0 0.0
    %3911 = vmatprep.subr.mxu0 0.0
    %3912 = vmatpush1.msra.mxu0 0.0
    %3913 = vmatprep.subr.mxu0 0.0
    %3914 = vmatpush1.msra.mxu0 0.0
    %3915 = vmatprep.subr.mxu0 0.0
    %3916 = vmatpush1.msra.mxu0 0.0
    %3917 = vmatprep.subr.mxu0 0.0
    %3918 = vmatpush1.msra.mxu0 0.0
    %3919 = vmatprep.subr.mxu0 0.0
    %3920 = vmatpush1.msra.mxu0 0.0
    %3921 = vmatprep.subr.mxu0 0.0
    %3922 = vmatpush1.msra.mxu0 0.0
    %3923 = vmatprep.mubr.f32.mxu0 0.0
    %3924 = vmatmul.mubr.f32.gmra.mrb[0].mxu0 %v3786
    %v3925 = vpop.f32.mrb[0].mxu0
    %v3926 = vadd.f32 0.0, %v3925
    %v3927 = vpop.f32.mrb[0].mxu0
    %v3928 = vadd.f32 0.0, %v3927
    %3929 = vdwg.mxu0
    %3930 = vmatprep.subr.mxu0 %v33
    %3931 = vmatpush1.msra.mxu0 %v32
    %3932 = vmatprep.subr.mxu0 %v41
    %3933 = vmatpush1.msra.mxu0 %v40
    %3934 = vmatprep.subr.mxu0 %v49
    %3935 = vmatpush1.msra.mxu0 %v48
    %3936 = vmatprep.subr.mxu0 %v57
    %3937 = vmatpush1.msra.mxu0 %v56
    %3938 = vmatprep.subr.mxu0 0.0
    %3939 = vmatpush1.msra.mxu0 0.0
    %3940 = vmatprep.subr.mxu0 0.0
    %3941 = vmatpush1.msra.mxu0 0.0
    %3942 = vmatprep.subr.mxu0 0.0
    %3943 = vmatpush1.msra.mxu0 0.0
    %3944 = vmatprep.subr.mxu0 0.0
    %3945 = vmatpush1.msra.mxu0 0.0
    %3946 = vmatprep.subr.mxu0 0.0
    %3947 = vmatpush1.msra.mxu0 0.0
    %3948 = vmatprep.subr.mxu0 0.0
    %3949 = vmatpush1.msra.mxu0 0.0
    %3950 = vmatprep.subr.mxu0 0.0
    %3951 = vmatpush1.msra.mxu0 0.0
    %3952 = vmatprep.subr.mxu0 0.0
    %3953 = vmatpush1.msra.mxu0 0.0
    %3954 = vmatprep.subr.mxu0 0.0
    %3955 = vmatpush1.msra.mxu0 0.0
    %3956 = vmatprep.subr.mxu0 0.0
    %3957 = vmatpush1.msra.mxu0 0.0
    %3958 = vmatprep.subr.mxu0 0.0
    %3959 = vmatpush1.msra.mxu0 0.0
    %3960 = vmatprep.subr.mxu0 0.0
    %3961 = vmatpush1.msra.mxu0 0.0
    %3962 = vmatprep.subr.mxu0 0.0
    %3963 = vmatpush1.msra.mxu0 0.0
    %3964 = vmatprep.subr.mxu0 0.0
    %3965 = vmatpush1.msra.mxu0 0.0
    %3966 = vmatprep.subr.mxu0 0.0
    %3967 = vmatpush1.msra.mxu0 0.0
    %3968 = vmatprep.subr.mxu0 0.0
    %3969 = vmatpush1.msra.mxu0 0.0
    %3970 = vmatprep.subr.mxu0 0.0
    %3971 = vmatpush1.msra.mxu0 0.0
    %3972 = vmatprep.subr.mxu0 0.0
    %3973 = vmatpush1.msra.mxu0 0.0
    %3974 = vmatprep.subr.mxu0 0.0
    %3975 = vmatpush1.msra.mxu0 0.0
    %3976 = vmatprep.subr.mxu0 0.0
    %3977 = vmatpush1.msra.mxu0 0.0
    %3978 = vmatprep.subr.mxu0 0.0
    %3979 = vmatpush1.msra.mxu0 0.0
    %3980 = vmatprep.subr.mxu0 0.0
    %3981 = vmatpush1.msra.mxu0 0.0
    %3982 = vmatprep.subr.mxu0 0.0
    %3983 = vmatpush1.msra.mxu0 0.0
    %3984 = vmatprep.subr.mxu0 0.0
    %3985 = vmatpush1.msra.mxu0 0.0
    %3986 = vmatprep.subr.mxu0 0.0
    %3987 = vmatpush1.msra.mxu0 0.0
    %3988 = vmatprep.subr.mxu0 0.0
    %3989 = vmatpush1.msra.mxu0 0.0
    %3990 = vmatprep.subr.mxu0 0.0
    %3991 = vmatpush1.msra.mxu0 0.0
    %3992 = vmatprep.subr.mxu0 0.0
    %3993 = vmatpush1.msra.mxu0 0.0
    %3994 = vmatprep.mubr.f32.mxu0 0.0
    %3995 = vmatmul.mubr.f32.gmra.mrb[0].mxu0 %v3786
    %v3996 = vpop.f32.mrb[0].mxu0
    %v3997 = vadd.f32 0.0, %v3996
    %v3998 = vpop.f32.mrb[0].mxu0
    %v3999 = vadd.f32 0.0, %v3998
    %4000 = vdwg.mxu0
    %4001 = vmatprep.subr.mxu0 %v35
    %4002 = vmatpush1.msra.mxu0 %v34
    %4003 = vmatprep.subr.mxu0 %v43
    %4004 = vmatpush1.msra.mxu0 %v42
    %4005 = vmatprep.subr.mxu0 %v51
    %4006 = vmatpush1.msra.mxu0 %v50
    %4007 = vmatprep.subr.mxu0 %v59
    %4008 = vmatpush1.msra.mxu0 %v58
    %4009 = vmatprep.subr.mxu0 0.0
    %4010 = vmatpush1.msra.mxu0 0.0
    %4011 = vmatprep.subr.mxu0 0.0
    %4012 = vmatpush1.msra.mxu0 0.0
    %4013 = vmatprep.subr.mxu0 0.0
    %4014 = vmatpush1.msra.mxu0 0.0
    %4015 = vmatprep.subr.mxu0 0.0
    %4016 = vmatpush1.msra.mxu0 0.0
    %4017 = vmatprep.subr.mxu0 0.0
    %4018 = vmatpush1.msra.mxu0 0.0
    %4019 = vmatprep.subr.mxu0 0.0
    %4020 = vmatpush1.msra.mxu0 0.0
    %4021 = vmatprep.subr.mxu0 0.0
    %4022 = vmatpush1.msra.mxu0 0.0
    %4023 = vmatprep.subr.mxu0 0.0
    %4024 = vmatpush1.msra.mxu0 0.0
    %4025 = vmatprep.subr.mxu0 0.0
    %4026 = vmatpush1.msra.mxu0 0.0
    %4027 = vmatprep.subr.mxu0 0.0
    %4028 = vmatpush1.msra.mxu0 0.0
    %4029 = vmatprep.subr.mxu0 0.0
    %4030 = vmatpush1.msra.mxu0 0.0
    %4031 = vmatprep.subr.mxu0 0.0
    %4032 = vmatpush1.msra.mxu0 0.0
    %4033 = vmatprep.subr.mxu0 0.0
    %4034 = vmatpush1.msra.mxu0 0.0
    %4035 = vmatprep.subr.mxu0 0.0
    %4036 = vmatpush1.msra.mxu0 0.0
    %4037 = vmatprep.subr.mxu0 0.0
    %4038 = vmatpush1.msra.mxu0 0.0
    %4039 = vmatprep.subr.mxu0 0.0
    %4040 = vmatpush1.msra.mxu0 0.0
    %4041 = vmatprep.subr.mxu0 0.0
    %4042 = vmatpush1.msra.mxu0 0.0
    %4043 = vmatprep.subr.mxu0 0.0
    %4044 = vmatpush1.msra.mxu0 0.0
    %4045 = vmatprep.subr.mxu0 0.0
    %4046 = vmatpush1.msra.mxu0 0.0
    %4047 = vmatprep.subr.mxu0 0.0
    %4048 = vmatpush1.msra.mxu0 0.0
    %4049 = vmatprep.subr.mxu0 0.0
    %4050 = vmatpush1.msra.mxu0 0.0
    %4051 = vmatprep.subr.mxu0 0.0
    %4052 = vmatpush1.msra.mxu0 0.0
    %4053 = vmatprep.subr.mxu0 0.0
    %4054 = vmatpush1.msra.mxu0 0.0
    %4055 = vmatprep.subr.mxu0 0.0
    %4056 = vmatpush1.msra.mxu0 0.0
    %4057 = vmatprep.subr.mxu0 0.0
    %4058 = vmatpush1.msra.mxu0 0.0
    %4059 = vmatprep.subr.mxu0 0.0
    %4060 = vmatpush1.msra.mxu0 0.0
    %4061 = vmatprep.subr.mxu0 0.0
    %4062 = vmatpush1.msra.mxu0 0.0
    %4063 = vmatprep.subr.mxu0 0.0
    %4064 = vmatpush1.msra.mxu0 0.0
    %4065 = vmatprep.mubr.f32.mxu0 0.0
    %4066 = vmatmul.mubr.f32.gmra.mrb[0].mxu0 %v3786
    %v4067 = vpop.f32.mrb[0].mxu0
    %v4068 = vadd.f32 0.0, %v4067
    %v4069 = vpop.f32.mrb[0].mxu0
    %v4070 = vadd.f32 0.0, %v4069
    %4071 = vdwg.mxu0
    %4072 = vrot.lane.b32.xlu0 %v3784, 32
    %v4073 = vpop.permute.xlu0 %4072
    %4075 = vrot.lane.b32.xlu0 %v3784, 64
    %v4076 = vpop.permute.xlu0 %4075
    %4078 = vrot.lane.b32.xlu0 %v3784, 96
    %v4079 = vpop.permute.xlu0 %4078
    %v4081 = vsel %vm190, %v3784, %v4073
    %v4082 = vsel %vm488, %v4081, %v4076
    %v4083 = vsel %vm490, %v4082, %v4079
    %v4084 = vmul.f32 %v3855, %v4083
    %v4085 = vmul.f32 %v3857, %v4083
    %v4086 = vmul.f32 %v3926, %v4083
    %v4087 = vmul.f32 %v3928, %v4083
    %v4088 = vmul.f32 %v3997, %v4083
    %v4089 = vmul.f32 %v3999, %v4083
    %v4090 = vmul.f32 %v4068, %v4083
    %v4091 = vmul.f32 %v4070, %v4083
    %s4092 = scalar_lea.vmem %s0, 12
    %v4093 = vld [vmem:[%s4092] sm:$0x3]
    %4094 = vmatprep.subr.mxu0 0.0
    %4095 = vmatpush1.msra.mxu0 %v60
    %4096 = vmatprep.subr.mxu0 0.0
    %4097 = vmatpush1.msra.mxu0 %v61
    %4098 = vmatprep.subr.mxu0 0.0
    %4099 = vmatpush1.msra.mxu0 %v62
    %4100 = vmatprep.subr.mxu0 0.0
    %4101 = vmatpush1.msra.mxu0 %v63
    %4102 = vmatprep.subr.mxu0 0.0
    %4103 = vmatpush1.msra.mxu0 %v64
    %4104 = vmatprep.subr.mxu0 0.0
    %4105 = vmatpush1.msra.mxu0 %v65
    %4106 = vmatprep.subr.mxu0 0.0
    %4107 = vmatpush1.msra.mxu0 %v66
    %4108 = vmatprep.subr.mxu0 0.0
    %4109 = vmatpush1.msra.mxu0 %v67
    %4110 = vmatprep.subr.mxu0 0.0
    %4111 = vmatpush1.msra.mxu0 %v68
    %4112 = vmatprep.subr.mxu0 0.0
    %4113 = vmatpush1.msra.mxu0 %v69
    %4114 = vmatprep.subr.mxu0 0.0
    %4115 = vmatpush1.msra.mxu0 %v70
    %4116 = vmatprep.subr.mxu0 0.0
    %4117 = vmatpush1.msra.mxu0 %v71
    %4118 = vmatprep.subr.mxu0 0.0
    %4119 = vmatpush1.msra.mxu0 %v72
    %4120 = vmatprep.subr.mxu0 0.0
    %4121 = vmatpush1.msra.mxu0 %v73
    %4122 = vmatprep.subr.mxu0 0.0
    %4123 = vmatpush1.msra.mxu0 %v74
    %4124 = vmatprep.subr.mxu0 0.0
    %4125 = vmatpush1.msra.mxu0 %v75
    %4126 = vmatprep.subr.mxu0 0.0
    %4127 = vmatpush1.msra.mxu0 %v76
    %4128 = vmatprep.subr.mxu0 0.0
    %4129 = vmatpush1.msra.mxu0 %v77
    %4130 = vmatprep.subr.mxu0 0.0
    %4131 = vmatpush1.msra.mxu0 %v78
    %4132 = vmatprep.subr.mxu0 0.0
    %4133 = vmatpush1.msra.mxu0 %v79
    %4134 = vmatprep.subr.mxu0 0.0
    %4135 = vmatpush1.msra.mxu0 %v80
    %4136 = vmatprep.subr.mxu0 0.0
    %4137 = vmatpush1.msra.mxu0 %v81
    %4138 = vmatprep.subr.mxu0 0.0
    %4139 = vmatpush1.msra.mxu0 %v82
    %4140 = vmatprep.subr.mxu0 0.0
    %4141 = vmatpush1.msra.mxu0 %v83
    %4142 = vmatprep.subr.mxu0 0.0
    %4143 = vmatpush1.msra.mxu0 %v84
    %4144 = vmatprep.subr.mxu0 0.0
    %4145 = vmatpush1.msra.mxu0 %v85
    %4146 = vmatprep.subr.mxu0 0.0
    %4147 = vmatpush1.msra.mxu0 %v86
    %4148 = vmatprep.subr.mxu0 0.0
    %4149 = vmatpush1.msra.mxu0 %v87
    %4150 = vmatprep.subr.mxu0 0.0
    %4151 = vmatpush1.msra.mxu0 %v88
    %4152 = vmatprep.subr.mxu0 0.0
    %4153 = vmatpush1.msra.mxu0 %v89
    %4154 = vmatprep.subr.mxu0 0.0
    %4155 = vmatpush1.msra.mxu0 %v90
    %4156 = vmatprep.subr.mxu0 0.0
    %4157 = vmatpush1.msra.mxu0 %v91
    %4158 = vmatprep.mubr.f32.mxu0 %v4085
    %4159 = vmatmul.mubr.f32.gmra.mrb[0].mxu0 %v4084
    %v4160 = vpop.f32.mrb[0].mxu0
    %v4161 = vadd.f32 %v4093, %v4160
    %v4162 = vpop.f32.mrb[0].mxu0
    %4163 = vdwg.mxu0
    %4164 = vmatprep.subr.mxu0 0.0
    %4165 = vmatpush1.msra.mxu0 %v92
    %4166 = vmatprep.subr.mxu0 0.0
    %4167 = vmatpush1.msra.mxu0 %v93
    %4168 = vmatprep.subr.mxu0 0.0
    %4169 = vmatpush1.msra.mxu0 %v94
    %4170 = vmatprep.subr.mxu0 0.0
    %4171 = vmatpush1.msra.mxu0 %v95
    %4172 = vmatprep.subr.mxu0 0.0
    %4173 = vmatpush1.msra.mxu0 %v96
    %4174 = vmatprep.subr.mxu0 0.0
    %4175 = vmatpush1.msra.mxu0 %v97
    %4176 = vmatprep.subr.mxu0 0.0
    %4177 = vmatpush1.msra.mxu0 %v98
    %4178 = vmatprep.subr.mxu0 0.0
    %4179 = vmatpush1.msra.mxu0 %v99
    %4180 = vmatprep.subr.mxu0 0.0
    %4181 = vmatpush1.msra.mxu0 %v100
    %4182 = vmatprep.subr.mxu0 0.0
    %4183 = vmatpush1.msra.mxu0 %v101
    %4184 = vmatprep.subr.mxu0 0.0
    %4185 = vmatpush1.msra.mxu0 %v102
    %4186 = vmatprep.subr.mxu0 0.0
    %4187 = vmatpush1.msra.mxu0 %v103
    %4188 = vmatprep.subr.mxu0 0.0
    %4189 = vmatpush1.msra.mxu0 %v104
    %4190 = vmatprep.subr.mxu0 0.0
    %4191 = vmatpush1.msra.mxu0 %v105
    %4192 = vmatprep.subr.mxu0 0.0
    %4193 = vmatpush1.msra.mxu0 %v106
    %4194 = vmatprep.subr.mxu0 0.0
    %4195 = vmatpush1.msra.mxu0 %v107
    %4196 = vmatprep.subr.mxu0 0.0
    %4197 = vmatpush1.msra.mxu0 %v108
    %4198 = vmatprep.subr.mxu0 0.0
    %4199 = vmatpush1.msra.mxu0 %v109
    %4200 = vmatprep.subr.mxu0 0.0
    %4201 = vmatpush1.msra.mxu0 %v110
    %4202 = vmatprep.subr.mxu0 0.0
    %4203 = vmatpush1.msra.mxu0 %v111
    %4204 = vmatprep.subr.mxu0 0.0
    %4205 = vmatpush1.msra.mxu0 %v112
    %4206 = vmatprep.subr.mxu0 0.0
    %4207 = vmatpush1.msra.mxu0 %v113
    %4208 = vmatprep.subr.mxu0 0.0
    %4209 = vmatpush1.msra.mxu0 %v114
    %4210 = vmatprep.subr.mxu0 0.0
    %4211 = vmatpush1.msra.mxu0 %v115
    %4212 = vmatprep.subr.mxu0 0.0
    %4213 = vmatpush1.msra.mxu0 %v116
    %4214 = vmatprep.subr.mxu0 0.0
    %4215 = vmatpush1.msra.mxu0 %v117
    %4216 = vmatprep.subr.mxu0 0.0
    %4217 = vmatpush1.msra.mxu0 %v118
    %4218 = vmatprep.subr.mxu0 0.0
    %4219 = vmatpush1.msra.mxu0 %v119
    %4220 = vmatprep.subr.mxu0 0.0
    %4221 = vmatpush1.msra.mxu0 %v120
    %4222 = vmatprep.subr.mxu0 0.0
    %4223 = vmatpush1.msra.mxu0 %v121
    %4224 = vmatprep.subr.mxu0 0.0
    %4225 = vmatpush1.msra.mxu0 %v122
    %4226 = vmatprep.subr.mxu0 0.0
    %4227 = vmatpush1.msra.mxu0 %v123
    %4228 = vmatprep.mubr.f32.mxu0 %v4087
    %4229 = vmatmul.mubr.f32.gmra.mrb[0].mxu0 %v4086
    %v4230 = vpop.f32.mrb[0].mxu0
    %v4231 = vadd.f32 %v4161, %v4230
    %v4232 = vpop.f32.mrb[0].mxu0
    %4233 = vdwg.mxu0
    %4234 = vmatprep.subr.mxu0 0.0
    %4235 = vmatpush1.msra.mxu0 %v124
    %4236 = vmatprep.subr.mxu0 0.0
    %4237 = vmatpush1.msra.mxu0 %v125
    %4238 = vmatprep.subr.mxu0 0.0
    %4239 = vmatpush1.msra.mxu0 %v126
    %4240 = vmatprep.subr.mxu0 0.0
    %4241 = vmatpush1.msra.mxu0 %v127
    %4242 = vmatprep.subr.mxu0 0.0
    %4243 = vmatpush1.msra.mxu0 %v128
    %4244 = vmatprep.subr.mxu0 0.0
    %4245 = vmatpush1.msra.mxu0 %v129
    %4246 = vmatprep.subr.mxu0 0.0
    %4247 = vmatpush1.msra.mxu0 %v130
    %4248 = vmatprep.subr.mxu0 0.0
    %4249 = vmatpush1.msra.mxu0 %v131
    %4250 = vmatprep.subr.mxu0 0.0
    %4251 = vmatpush1.msra.mxu0 %v132
    %4252 = vmatprep.subr.mxu0 0.0
    %4253 = vmatpush1.msra.mxu0 %v133
    %4254 = vmatprep.subr.mxu0 0.0
    %4255 = vmatpush1.msra.mxu0 %v134
    %4256 = vmatprep.subr.mxu0 0.0
    %4257 = vmatpush1.msra.mxu0 %v135
    %4258 = vmatprep.subr.mxu0 0.0
    %4259 = vmatpush1.msra.mxu0 %v136
    %4260 = vmatprep.subr.mxu0 0.0
    %4261 = vmatpush1.msra.mxu0 %v137
    %4262 = vmatprep.subr.mxu0 0.0
    %4263 = vmatpush1.msra.mxu0 %v138
    %4264 = vmatprep.subr.mxu0 0.0
    %4265 = vmatpush1.msra.mxu0 %v139
    %4266 = vmatprep.subr.mxu0 0.0
    %4267 = vmatpush1.msra.mxu0 %v140
    %4268 = vmatprep.subr.mxu0 0.0
    %4269 = vmatpush1.msra.mxu0 %v141
    %4270 = vmatprep.subr.mxu0 0.0
    %4271 = vmatpush1.msra.mxu0 %v142
    %4272 = vmatprep.subr.mxu0 0.0
    %4273 = vmatpush1.msra.mxu0 %v143
    %4274 = vmatprep.subr.mxu0 0.0
    %4275 = vmatpush1.msra.mxu0 %v144
    %4276 = vmatprep.subr.mxu0 0.0
    %4277 = vmatpush1.msra.mxu0 %v145
    %4278 = vmatprep.subr.mxu0 0.0
    %4279 = vmatpush1.msra.mxu0 %v146
    %4280 = vmatprep.subr.mxu0 0.0
    %4281 = vmatpush1.msra.mxu0 %v147
    %4282 = vmatprep.subr.mxu0 0.0
    %4283 = vmatpush1.msra.mxu0 %v148
    %4284 = vmatprep.subr.mxu0 0.0
    %4285 = vmatpush1.msra.mxu0 %v149
    %4286 = vmatprep.subr.mxu0 0.0
    %4287 = vmatpush1.msra.mxu0 %v150
    %4288 = vmatprep.subr.mxu0 0.0
    %4289 = vmatpush1.msra.mxu0 %v151
    %4290 = vmatprep.subr.mxu0 0.0
    %4291 = vmatpush1.msra.mxu0 %v152
    %4292 = vmatprep.subr.mxu0 0.0
    %4293 = vmatpush1.msra.mxu0 %v153
    %4294 = vmatprep.subr.mxu0 0.0
    %4295 = vmatpush1.msra.mxu0 %v154
    %4296 = vmatprep.subr.mxu0 0.0
    %4297 = vmatpush1.msra.mxu0 %v155
    %4298 = vmatprep.mubr.f32.mxu0 %v4089
    %4299 = vmatmul.mubr.f32.gmra.mrb[0].mxu0 %v4088
    %v4300 = vpop.f32.mrb[0].mxu0
    %v4301 = vadd.f32 %v4231, %v4300
    %v4302 = vpop.f32.mrb[0].mxu0
    %4303 = vdwg.mxu0
    %4304 = vmatprep.subr.mxu0 0.0
    %4305 = vmatpush1.msra.mxu0 %v156
    %4306 = vmatprep.subr.mxu0 0.0
    %4307 = vmatpush1.msra.mxu0 %v157
    %4308 = vmatprep.subr.mxu0 0.0
    %4309 = vmatpush1.msra.mxu0 %v158
    %4310 = vmatprep.subr.mxu0 0.0
    %4311 = vmatpush1.msra.mxu0 %v159
    %4312 = vmatprep.subr.mxu0 0.0
    %4313 = vmatpush1.msra.mxu0 %v160
    %4314 = vmatprep.subr.mxu0 0.0
    %4315 = vmatpush1.msra.mxu0 %v161
    %4316 = vmatprep.subr.mxu0 0.0
    %4317 = vmatpush1.msra.mxu0 %v162
    %4318 = vmatprep.subr.mxu0 0.0
    %4319 = vmatpush1.msra.mxu0 %v163
    %4320 = vmatprep.subr.mxu0 0.0
    %4321 = vmatpush1.msra.mxu0 %v164
    %4322 = vmatprep.subr.mxu0 0.0
    %4323 = vmatpush1.msra.mxu0 %v165
    %4324 = vmatprep.subr.mxu0 0.0
    %4325 = vmatpush1.msra.mxu0 %v166
    %4326 = vmatprep.subr.mxu0 0.0
    %4327 = vmatpush1.msra.mxu0 %v167
    %4328 = vmatprep.subr.mxu0 0.0
    %4329 = vmatpush1.msra.mxu0 %v168
    %4330 = vmatprep.subr.mxu0 0.0
    %4331 = vmatpush1.msra.mxu0 %v169
    %4332 = vmatprep.subr.mxu0 0.0
    %4333 = vmatpush1.msra.mxu0 %v170
    %4334 = vmatprep.subr.mxu0 0.0
    %4335 = vmatpush1.msra.mxu0 %v171
    %4336 = vmatprep.subr.mxu0 0.0
    %4337 = vmatpush1.msra.mxu0 %v172
    %4338 = vmatprep.subr.mxu0 0.0
    %4339 = vmatpush1.msra.mxu0 %v173
    %4340 = vmatprep.subr.mxu0 0.0
    %4341 = vmatpush1.msra.mxu0 %v174
    %4342 = vmatprep.subr.mxu0 0.0
    %4343 = vmatpush1.msra.mxu0 %v175
    %4344 = vmatprep.subr.mxu0 0.0
    %4345 = vmatpush1.msra.mxu0 %v176
    %4346 = vmatprep.subr.mxu0 0.0
    %4347 = vmatpush1.msra.mxu0 %v177
    %4348 = vmatprep.subr.mxu0 0.0
    %4349 = vmatpush1.msra.mxu0 %v178
    %4350 = vmatprep.subr.mxu0 0.0
    %4351 = vmatpush1.msra.mxu0 %v179
    %4352 = vmatprep.subr.mxu0 0.0
    %4353 = vmatpush1.msra.mxu0 %v180
    %4354 = vmatprep.subr.mxu0 0.0
    %4355 = vmatpush1.msra.mxu0 %v181
    %4356 = vmatprep.subr.mxu0 0.0
    %4357 = vmatpush1.msra.mxu0 %v182
    %4358 = vmatprep.subr.mxu0 0.0
    %4359 = vmatpush1.msra.mxu0 %v183
    %4360 = vmatprep.subr.mxu0 0.0
    %4361 = vmatpush1.msra.mxu0 %v184
    %4362 = vmatprep.subr.mxu0 0.0
    %4363 = vmatpush1.msra.mxu0 %v185
    %4364 = vmatprep.subr.mxu0 0.0
    %4365 = vmatpush1.msra.mxu0 %v186
    %4366 = vmatprep.subr.mxu0 0.0
    %4367 = vmatpush1.msra.mxu0 %v187
    %4368 = vmatprep.mubr.f32.mxu0 %v4091
    %4369 = vmatmul.mubr.f32.gmra.mrb[0].mxu0 %v4090
    %v4370 = vpop.f32.mrb[0].mxu0
    %v4371 = vadd.f32 %v4301, %v4370
    %v4372 = vpop.f32.mrb[0].mxu0
    %4373 = vdwg.mxu0
    %v4374 = vmul.f32 %v3781, 0.8
    %v4375 = vmul.f32 %v4371, 0.2
    %v4376 = vadd.f32 %v4374, %v4375
    %s4377 = scalar_lea.vmem %s1, 12
    %v4378 = vld [vmem:[%s4377] sm:$0x3]
    %v4379 = vmul.f32 %v4378, 0.05
    %v4380 = vadd.f32 %v4376, %v4379
    %s4381 = scalar_lea.vmem [#allocation3], 12
    %4382 = vst.msk [vmem:[%s4381] sm:$0x3] %vm787, %v4380
    %v4383 = vtanh.pop %v4380
    %v4385 = vsel %vm190, %v4383, 0
    %4387 = vmatprep.subr.mxu0 %v29
    %4388 = vmatpush1.msra.mxu0 %v28
    %4389 = vmatprep.subr.mxu0 %v37
    %4390 = vmatpush1.msra.mxu0 %v36
    %4391 = vmatprep.subr.mxu0 %v45
    %4392 = vmatpush1.msra.mxu0 %v44
    %4393 = vmatprep.subr.mxu0 %v53
    %4394 = vmatpush1.msra.mxu0 %v52
    %4395 = vmatprep.subr.mxu0 0.0
    %4396 = vmatpush1.msra.mxu0 0.0
    %4397 = vmatprep.subr.mxu0 0.0
    %4398 = vmatpush1.msra.mxu0 0.0
    %4399 = vmatprep.subr.mxu0 0.0
    %4400 = vmatpush1.msra.mxu0 0.0
    %4401 = vmatprep.subr.mxu0 0.0
    %4402 = vmatpush1.msra.mxu0 0.0
    %4403 = vmatprep.subr.mxu0 0.0
    %4404 = vmatpush1.msra.mxu0 0.0
    %4405 = vmatprep.subr.mxu0 0.0
    %4406 = vmatpush1.msra.mxu0 0.0
    %4407 = vmatprep.subr.mxu0 0.0
    %4408 = vmatpush1.msra.mxu0 0.0
    %4409 = vmatprep.subr.mxu0 0.0
    %4410 = vmatpush1.msra.mxu0 0.0
    %4411 = vmatprep.subr.mxu0 0.0
    %4412 = vmatpush1.msra.mxu0 0.0
    %4413 = vmatprep.subr.mxu0 0.0
    %4414 = vmatpush1.msra.mxu0 0.0
    %4415 = vmatprep.subr.mxu0 0.0
    %4416 = vmatpush1.msra.mxu0 0.0
    %4417 = vmatprep.subr.mxu0 0.0
    %4418 = vmatpush1.msra.mxu0 0.0
    %4419 = vmatprep.subr.mxu0 0.0
    %4420 = vmatpush1.msra.mxu0 0.0
    %4421 = vmatprep.subr.mxu0 0.0
    %4422 = vmatpush1.msra.mxu0 0.0
    %4423 = vmatprep.subr.mxu0 0.0
    %4424 = vmatpush1.msra.mxu0 0.0
    %4425 = vmatprep.subr.mxu0 0.0
    %4426 = vmatpush1.msra.mxu0 0.0
    %4427 = vmatprep.subr.mxu0 0.0
    %4428 = vmatpush1.msra.mxu0 0.0
    %4429 = vmatprep.subr.mxu0 0.0
    %4430 = vmatpush1.msra.mxu0 0.0
    %4431 = vmatprep.subr.mxu0 0.0
    %4432 = vmatpush1.msra.mxu0 0.0
    %4433 = vmatprep.subr.mxu0 0.0
    %4434 = vmatpush1.msra.mxu0 0.0
    %4435 = vmatprep.subr.mxu0 0.0
    %4436 = vmatpush1.msra.mxu0 0.0
    %4437 = vmatprep.subr.mxu0 0.0
    %4438 = vmatpush1.msra.mxu0 0.0
    %4439 = vmatprep.subr.mxu0 0.0
    %4440 = vmatpush1.msra.mxu0 0.0
    %4441 = vmatprep.subr.mxu0 0.0
    %4442 = vmatpush1.msra.mxu0 0.0
    %4443 = vmatprep.subr.mxu0 0.0
    %4444 = vmatpush1.msra.mxu0 0.0
    %4445 = vmatprep.subr.mxu0 0.0
    %4446 = vmatpush1.msra.mxu0 0.0
    %4447 = vmatprep.subr.mxu0 0.0
    %4448 = vmatpush1.msra.mxu0 0.0
    %4449 = vmatprep.subr.mxu0 0.0
    %4450 = vmatpush1.msra.mxu0 0.0
    %4451 = vmatprep.mubr.f32.mxu0 0.0
    %4452 = vmatmul.mubr.f32.gmra.mrb[0].mxu0 %v4385
    %v4453 = vpop.f32.mrb[0].mxu0
    %v4454 = vadd.f32 0.0, %v4453
    %v4455 = vpop.f32.mrb[0].mxu0
    %v4456 = vadd.f32 0.0, %v4455
    %4457 = vdwg.mxu0
    %4458 = vmatprep.subr.mxu0 %v31
    %4459 = vmatpush1.msra.mxu0 %v30
    %4460 = vmatprep.subr.mxu0 %v39
    %4461 = vmatpush1.msra.mxu0 %v38
    %4462 = vmatprep.subr.mxu0 %v47
    %4463 = vmatpush1.msra.mxu0 %v46
    %4464 = vmatprep.subr.mxu0 %v55
    %4465 = vmatpush1.msra.mxu0 %v54
    %4466 = vmatprep.subr.mxu0 0.0
    %4467 = vmatpush1.msra.mxu0 0.0
    %4468 = vmatprep.subr.mxu0 0.0
    %4469 = vmatpush1.msra.mxu0 0.0
    %4470 = vmatprep.subr.mxu0 0.0
    %4471 = vmatpush1.msra.mxu0 0.0
    %4472 = vmatprep.subr.mxu0 0.0
    %4473 = vmatpush1.msra.mxu0 0.0
    %4474 = vmatprep.subr.mxu0 0.0
    %4475 = vmatpush1.msra.mxu0 0.0
    %4476 = vmatprep.subr.mxu0 0.0
    %4477 = vmatpush1.msra.mxu0 0.0
    %4478 = vmatprep.subr.mxu0 0.0
    %4479 = vmatpush1.msra.mxu0 0.0
    %4480 = vmatprep.subr.mxu0 0.0
    %4481 = vmatpush1.msra.mxu0 0.0
    %4482 = vmatprep.subr.mxu0 0.0
    %4483 = vmatpush1.msra.mxu0 0.0
    %4484 = vmatprep.subr.mxu0 0.0
    %4485 = vmatpush1.msra.mxu0 0.0
    %4486 = vmatprep.subr.mxu0 0.0
    %4487 = vmatpush1.msra.mxu0 0.0
    %4488 = vmatprep.subr.mxu0 0.0
    %4489 = vmatpush1.msra.mxu0 0.0
    %4490 = vmatprep.subr.mxu0 0.0
    %4491 = vmatpush1.msra.mxu0 0.0
    %4492 = vmatprep.subr.mxu0 0.0
    %4493 = vmatpush1.msra.mxu0 0.0
    %4494 = vmatprep.subr.mxu0 0.0
    %4495 = vmatpush1.msra.mxu0 0.0
    %4496 = vmatprep.subr.mxu0 0.0
    %4497 = vmatpush1.msra.mxu0 0.0
    %4498 = vmatprep.subr.mxu0 0.0
    %4499 = vmatpush1.msra.mxu0 0.0
    %4500 = vmatprep.subr.mxu0 0.0
    %4501 = vmatpush1.msra.mxu0 0.0
    %4502 = vmatprep.subr.mxu0 0.0
    %4503 = vmatpush1.msra.mxu0 0.0
    %4504 = vmatprep.subr.mxu0 0.0
    %4505 = vmatpush1.msra.mxu0 0.0
    %4506 = vmatprep.subr.mxu0 0.0
    %4507 = vmatpush1.msra.mxu0 0.0
    %4508 = vmatprep.subr.mxu0 0.0
    %4509 = vmatpush1.msra.mxu0 0.0
    %4510 = vmatprep.subr.mxu0 0.0
    %4511 = vmatpush1.msra.mxu0 0.0
    %4512 = vmatprep.subr.mxu0 0.0
    %4513 = vmatpush1.msra.mxu0 0.0
    %4514 = vmatprep.subr.mxu0 0.0
    %4515 = vmatpush1.msra.mxu0 0.0
    %4516 = vmatprep.subr.mxu0 0.0
    %4517 = vmatpush1.msra.mxu0 0.0
    %4518 = vmatprep.subr.mxu0 0.0
    %4519 = vmatpush1.msra.mxu0 0.0
    %4520 = vmatprep.subr.mxu0 0.0
    %4521 = vmatpush1.msra.mxu0 0.0
    %4522 = vmatprep.mubr.f32.mxu0 0.0
    %4523 = vmatmul.mubr.f32.gmra.mrb[0].mxu0 %v4385
    %v4524 = vpop.f32.mrb[0].mxu0
    %v4525 = vadd.f32 0.0, %v4524
    %v4526 = vpop.f32.mrb[0].mxu0
    %v4527 = vadd.f32 0.0, %v4526
    %4528 = vdwg.mxu0
    %4529 = vmatprep.subr.mxu0 %v33
    %4530 = vmatpush1.msra.mxu0 %v32
    %4531 = vmatprep.subr.mxu0 %v41
    %4532 = vmatpush1.msra.mxu0 %v40
    %4533 = vmatprep.subr.mxu0 %v49
    %4534 = vmatpush1.msra.mxu0 %v48
    %4535 = vmatprep.subr.mxu0 %v57
    %4536 = vmatpush1.msra.mxu0 %v56
    %4537 = vmatprep.subr.mxu0 0.0
    %4538 = vmatpush1.msra.mxu0 0.0
    %4539 = vmatprep.subr.mxu0 0.0
    %4540 = vmatpush1.msra.mxu0 0.0
    %4541 = vmatprep.subr.mxu0 0.0
    %4542 = vmatpush1.msra.mxu0 0.0
    %4543 = vmatprep.subr.mxu0 0.0
    %4544 = vmatpush1.msra.mxu0 0.0
    %4545 = vmatprep.subr.mxu0 0.0
    %4546 = vmatpush1.msra.mxu0 0.0
    %4547 = vmatprep.subr.mxu0 0.0
    %4548 = vmatpush1.msra.mxu0 0.0
    %4549 = vmatprep.subr.mxu0 0.0
    %4550 = vmatpush1.msra.mxu0 0.0
    %4551 = vmatprep.subr.mxu0 0.0
    %4552 = vmatpush1.msra.mxu0 0.0
    %4553 = vmatprep.subr.mxu0 0.0
    %4554 = vmatpush1.msra.mxu0 0.0
    %4555 = vmatprep.subr.mxu0 0.0
    %4556 = vmatpush1.msra.mxu0 0.0
    %4557 = vmatprep.subr.mxu0 0.0
    %4558 = vmatpush1.msra.mxu0 0.0
    %4559 = vmatprep.subr.mxu0 0.0
    %4560 = vmatpush1.msra.mxu0 0.0
    %4561 = vmatprep.subr.mxu0 0.0
    %4562 = vmatpush1.msra.mxu0 0.0
    %4563 = vmatprep.subr.mxu0 0.0
    %4564 = vmatpush1.msra.mxu0 0.0
    %4565 = vmatprep.subr.mxu0 0.0
    %4566 = vmatpush1.msra.mxu0 0.0
    %4567 = vmatprep.subr.mxu0 0.0
    %4568 = vmatpush1.msra.mxu0 0.0
    %4569 = vmatprep.subr.mxu0 0.0
    %4570 = vmatpush1.msra.mxu0 0.0
    %4571 = vmatprep.subr.mxu0 0.0
    %4572 = vmatpush1.msra.mxu0 0.0
    %4573 = vmatprep.subr.mxu0 0.0
    %4574 = vmatpush1.msra.mxu0 0.0
    %4575 = vmatprep.subr.mxu0 0.0
    %4576 = vmatpush1.msra.mxu0 0.0
    %4577 = vmatprep.subr.mxu0 0.0
    %4578 = vmatpush1.msra.mxu0 0.0
    %4579 = vmatprep.subr.mxu0 0.0
    %4580 = vmatpush1.msra.mxu0 0.0
    %4581 = vmatprep.subr.mxu0 0.0
    %4582 = vmatpush1.msra.mxu0 0.0
    %4583 = vmatprep.subr.mxu0 0.0
    %4584 = vmatpush1.msra.mxu0 0.0
    %4585 = vmatprep.subr.mxu0 0.0
    %4586 = vmatpush1.msra.mxu0 0.0
    %4587 = vmatprep.subr.mxu0 0.0
    %4588 = vmatpush1.msra.mxu0 0.0
    %4589 = vmatprep.subr.mxu0 0.0
    %4590 = vmatpush1.msra.mxu0 0.0
    %4591 = vmatprep.subr.mxu0 0.0
    %4592 = vmatpush1.msra.mxu0 0.0
    %4593 = vmatprep.mubr.f32.mxu0 0.0
    %4594 = vmatmul.mubr.f32.gmra.mrb[0].mxu0 %v4385
    %v4595 = vpop.f32.mrb[0].mxu0
    %v4596 = vadd.f32 0.0, %v4595
    %v4597 = vpop.f32.mrb[0].mxu0
    %v4598 = vadd.f32 0.0, %v4597
    %4599 = vdwg.mxu0
    %4600 = vmatprep.subr.mxu0 %v35
    %4601 = vmatpush1.msra.mxu0 %v34
    %4602 = vmatprep.subr.mxu0 %v43
    %4603 = vmatpush1.msra.mxu0 %v42
    %4604 = vmatprep.subr.mxu0 %v51
    %4605 = vmatpush1.msra.mxu0 %v50
    %4606 = vmatprep.subr.mxu0 %v59
    %4607 = vmatpush1.msra.mxu0 %v58
    %4608 = vmatprep.subr.mxu0 0.0
    %4609 = vmatpush1.msra.mxu0 0.0
    %4610 = vmatprep.subr.mxu0 0.0
    %4611 = vmatpush1.msra.mxu0 0.0
    %4612 = vmatprep.subr.mxu0 0.0
    %4613 = vmatpush1.msra.mxu0 0.0
    %4614 = vmatprep.subr.mxu0 0.0
    %4615 = vmatpush1.msra.mxu0 0.0
    %4616 = vmatprep.subr.mxu0 0.0
    %4617 = vmatpush1.msra.mxu0 0.0
    %4618 = vmatprep.subr.mxu0 0.0
    %4619 = vmatpush1.msra.mxu0 0.0
    %4620 = vmatprep.subr.mxu0 0.0
    %4621 = vmatpush1.msra.mxu0 0.0
    %4622 = vmatprep.subr.mxu0 0.0
    %4623 = vmatpush1.msra.mxu0 0.0
    %4624 = vmatprep.subr.mxu0 0.0
    %4625 = vmatpush1.msra.mxu0 0.0
    %4626 = vmatprep.subr.mxu0 0.0
    %4627 = vmatpush1.msra.mxu0 0.0
    %4628 = vmatprep.subr.mxu0 0.0
    %4629 = vmatpush1.msra.mxu0 0.0
    %4630 = vmatprep.subr.mxu0 0.0
    %4631 = vmatpush1.msra.mxu0 0.0
    %4632 = vmatprep.subr.mxu0 0.0
    %4633 = vmatpush1.msra.mxu0 0.0
    %4634 = vmatprep.subr.mxu0 0.0
    %4635 = vmatpush1.msra.mxu0 0.0
    %4636 = vmatprep.subr.mxu0 0.0
    %4637 = vmatpush1.msra.mxu0 0.0
    %4638 = vmatprep.subr.mxu0 0.0
    %4639 = vmatpush1.msra.mxu0 0.0
    %4640 = vmatprep.subr.mxu0 0.0
    %4641 = vmatpush1.msra.mxu0 0.0
    %4642 = vmatprep.subr.mxu0 0.0
    %4643 = vmatpush1.msra.mxu0 0.0
    %4644 = vmatprep.subr.mxu0 0.0
    %4645 = vmatpush1.msra.mxu0 0.0
    %4646 = vmatprep.subr.mxu0 0.0
    %4647 = vmatpush1.msra.mxu0 0.0
    %4648 = vmatprep.subr.mxu0 0.0
    %4649 = vmatpush1.msra.mxu0 0.0
    %4650 = vmatprep.subr.mxu0 0.0
    %4651 = vmatpush1.msra.mxu0 0.0
    %4652 = vmatprep.subr.mxu0 0.0
    %4653 = vmatpush1.msra.mxu0 0.0
    %4654 = vmatprep.subr.mxu0 0.0
    %4655 = vmatpush1.msra.mxu0 0.0
    %4656 = vmatprep.subr.mxu0 0.0
    %4657 = vmatpush1.msra.mxu0 0.0
    %4658 = vmatprep.subr.mxu0 0.0
    %4659 = vmatpush1.msra.mxu0 0.0
    %4660 = vmatprep.subr.mxu0 0.0
    %4661 = vmatpush1.msra.mxu0 0.0
    %4662 = vmatprep.subr.mxu0 0.0
    %4663 = vmatpush1.msra.mxu0 0.0
    %4664 = vmatprep.mubr.f32.mxu0 0.0
    %4665 = vmatmul.mubr.f32.gmra.mrb[0].mxu0 %v4385
    %v4666 = vpop.f32.mrb[0].mxu0
    %v4667 = vadd.f32 0.0, %v4666
    %v4668 = vpop.f32.mrb[0].mxu0
    %v4669 = vadd.f32 0.0, %v4668
    %4670 = vdwg.mxu0
    %4671 = vrot.lane.b32.xlu0 %v4383, 32
    %v4672 = vpop.permute.xlu0 %4671
    %4674 = vrot.lane.b32.xlu0 %v4383, 64
    %v4675 = vpop.permute.xlu0 %4674
    %4677 = vrot.lane.b32.xlu0 %v4383, 96
    %v4678 = vpop.permute.xlu0 %4677
    %v4680 = vsel %vm190, %v4383, %v4672
    %v4681 = vsel %vm488, %v4680, %v4675
    %v4682 = vsel %vm490, %v4681, %v4678
    %v4683 = vmul.f32 %v4454, %v4682
    %v4684 = vmul.f32 %v4456, %v4682
    %v4685 = vmul.f32 %v4525, %v4682
    %v4686 = vmul.f32 %v4527, %v4682
    %v4687 = vmul.f32 %v4596, %v4682
    %v4688 = vmul.f32 %v4598, %v4682
    %v4689 = vmul.f32 %v4667, %v4682
    %v4690 = vmul.f32 %v4669, %v4682
    %s4691 = scalar_lea.vmem %s0, 14
    %v4692 = vld [vmem:[%s4691] sm:$0x3]
    %4693 = vmatprep.subr.mxu0 0.0
    %4694 = vmatpush1.msra.mxu0 %v60
    %4695 = vmatprep.subr.mxu0 0.0
    %4696 = vmatpush1.msra.mxu0 %v61
    %4697 = vmatprep.subr.mxu0 0.0
    %4698 = vmatpush1.msra.mxu0 %v62
    %4699 = vmatprep.subr.mxu0 0.0
    %4700 = vmatpush1.msra.mxu0 %v63
    %4701 = vmatprep.subr.mxu0 0.0
    %4702 = vmatpush1.msra.mxu0 %v64
    %4703 = vmatprep.subr.mxu0 0.0
    %4704 = vmatpush1.msra.mxu0 %v65
    %4705 = vmatprep.subr.mxu0 0.0
    %4706 = vmatpush1.msra.mxu0 %v66
    %4707 = vmatprep.subr.mxu0 0.0
    %4708 = vmatpush1.msra.mxu0 %v67
    %4709 = vmatprep.subr.mxu0 0.0
    %4710 = vmatpush1.msra.mxu0 %v68
    %4711 = vmatprep.subr.mxu0 0.0
    %4712 = vmatpush1.msra.mxu0 %v69
    %4713 = vmatprep.subr.mxu0 0.0
    %4714 = vmatpush1.msra.mxu0 %v70
    %4715 = vmatprep.subr.mxu0 0.0
    %4716 = vmatpush1.msra.mxu0 %v71
    %4717 = vmatprep.subr.mxu0 0.0
    %4718 = vmatpush1.msra.mxu0 %v72
    %4719 = vmatprep.subr.mxu0 0.0
    %4720 = vmatpush1.msra.mxu0 %v73
    %4721 = vmatprep.subr.mxu0 0.0
    %4722 = vmatpush1.msra.mxu0 %v74
    %4723 = vmatprep.subr.mxu0 0.0
    %4724 = vmatpush1.msra.mxu0 %v75
    %4725 = vmatprep.subr.mxu0 0.0
    %4726 = vmatpush1.msra.mxu0 %v76
    %4727 = vmatprep.subr.mxu0 0.0
    %4728 = vmatpush1.msra.mxu0 %v77
    %4729 = vmatprep.subr.mxu0 0.0
    %4730 = vmatpush1.msra.mxu0 %v78
    %4731 = vmatprep.subr.mxu0 0.0
    %4732 = vmatpush1.msra.mxu0 %v79
    %4733 = vmatprep.subr.mxu0 0.0
    %4734 = vmatpush1.msra.mxu0 %v80
    %4735 = vmatprep.subr.mxu0 0.0
    %4736 = vmatpush1.msra.mxu0 %v81
    %4737 = vmatprep.subr.mxu0 0.0
    %4738 = vmatpush1.msra.mxu0 %v82
    %4739 = vmatprep.subr.mxu0 0.0
    %4740 = vmatpush1.msra.mxu0 %v83
    %4741 = vmatprep.subr.mxu0 0.0
    %4742 = vmatpush1.msra.mxu0 %v84
    %4743 = vmatprep.subr.mxu0 0.0
    %4744 = vmatpush1.msra.mxu0 %v85
    %4745 = vmatprep.subr.mxu0 0.0
    %4746 = vmatpush1.msra.mxu0 %v86
    %4747 = vmatprep.subr.mxu0 0.0
    %4748 = vmatpush1.msra.mxu0 %v87
    %4749 = vmatprep.subr.mxu0 0.0
    %4750 = vmatpush1.msra.mxu0 %v88
    %4751 = vmatprep.subr.mxu0 0.0
    %4752 = vmatpush1.msra.mxu0 %v89
    %4753 = vmatprep.subr.mxu0 0.0
    %4754 = vmatpush1.msra.mxu0 %v90
    %4755 = vmatprep.subr.mxu0 0.0
    %4756 = vmatpush1.msra.mxu0 %v91
    %4757 = vmatprep.mubr.f32.mxu0 %v4684
    %4758 = vmatmul.mubr.f32.gmra.mrb[0].mxu0 %v4683
    %v4759 = vpop.f32.mrb[0].mxu0
    %v4760 = vadd.f32 %v4692, %v4759
    %v4761 = vpop.f32.mrb[0].mxu0
    %4762 = vdwg.mxu0
    %4763 = vmatprep.subr.mxu0 0.0
    %4764 = vmatpush1.msra.mxu0 %v92
    %4765 = vmatprep.subr.mxu0 0.0
    %4766 = vmatpush1.msra.mxu0 %v93
    %4767 = vmatprep.subr.mxu0 0.0
    %4768 = vmatpush1.msra.mxu0 %v94
    %4769 = vmatprep.subr.mxu0 0.0
    %4770 = vmatpush1.msra.mxu0 %v95
    %4771 = vmatprep.subr.mxu0 0.0
    %4772 = vmatpush1.msra.mxu0 %v96
    %4773 = vmatprep.subr.mxu0 0.0
    %4774 = vmatpush1.msra.mxu0 %v97
    %4775 = vmatprep.subr.mxu0 0.0
    %4776 = vmatpush1.msra.mxu0 %v98
    %4777 = vmatprep.subr.mxu0 0.0
    %4778 = vmatpush1.msra.mxu0 %v99
    %4779 = vmatprep.subr.mxu0 0.0
    %4780 = vmatpush1.msra.mxu0 %v100
    %4781 = vmatprep.subr.mxu0 0.0
    %4782 = vmatpush1.msra.mxu0 %v101
    %4783 = vmatprep.subr.mxu0 0.0
    %4784 = vmatpush1.msra.mxu0 %v102
    %4785 = vmatprep.subr.mxu0 0.0
    %4786 = vmatpush1.msra.mxu0 %v103
    %4787 = vmatprep.subr.mxu0 0.0
    %4788 = vmatpush1.msra.mxu0 %v104
    %4789 = vmatprep.subr.mxu0 0.0
    %4790 = vmatpush1.msra.mxu0 %v105
    %4791 = vmatprep.subr.mxu0 0.0
    %4792 = vmatpush1.msra.mxu0 %v106
    %4793 = vmatprep.subr.mxu0 0.0
    %4794 = vmatpush1.msra.mxu0 %v107
    %4795 = vmatprep.subr.mxu0 0.0
    %4796 = vmatpush1.msra.mxu0 %v108
    %4797 = vmatprep.subr.mxu0 0.0
    %4798 = vmatpush1.msra.mxu0 %v109
    %4799 = vmatprep.subr.mxu0 0.0
    %4800 = vmatpush1.msra.mxu0 %v110
    %4801 = vmatprep.subr.mxu0 0.0
    %4802 = vmatpush1.msra.mxu0 %v111
    %4803 = vmatprep.subr.mxu0 0.0
    %4804 = vmatpush1.msra.mxu0 %v112
    %4805 = vmatprep.subr.mxu0 0.0
    %4806 = vmatpush1.msra.mxu0 %v113
    %4807 = vmatprep.subr.mxu0 0.0
    %4808 = vmatpush1.msra.mxu0 %v114
    %4809 = vmatprep.subr.mxu0 0.0
    %4810 = vmatpush1.msra.mxu0 %v115
    %4811 = vmatprep.subr.mxu0 0.0
    %4812 = vmatpush1.msra.mxu0 %v116
    %4813 = vmatprep.subr.mxu0 0.0
    %4814 = vmatpush1.msra.mxu0 %v117
    %4815 = vmatprep.subr.mxu0 0.0
    %4816 = vmatpush1.msra.mxu0 %v118
    %4817 = vmatprep.subr.mxu0 0.0
    %4818 = vmatpush1.msra.mxu0 %v119
    %4819 = vmatprep.subr.mxu0 0.0
    %4820 = vmatpush1.msra.mxu0 %v120
    %4821 = vmatprep.subr.mxu0 0.0
    %4822 = vmatpush1.msra.mxu0 %v121
    %4823 = vmatprep.subr.mxu0 0.0
    %4824 = vmatpush1.msra.mxu0 %v122
    %4825 = vmatprep.subr.mxu0 0.0
    %4826 = vmatpush1.msra.mxu0 %v123
    %4827 = vmatprep.mubr.f32.mxu0 %v4686
    %4828 = vmatmul.mubr.f32.gmra.mrb[0].mxu0 %v4685
    %v4829 = vpop.f32.mrb[0].mxu0
    %v4830 = vadd.f32 %v4760, %v4829
    %v4831 = vpop.f32.mrb[0].mxu0
    %4832 = vdwg.mxu0
    %4833 = vmatprep.subr.mxu0 0.0
    %4834 = vmatpush1.msra.mxu0 %v124
    %4835 = vmatprep.subr.mxu0 0.0
    %4836 = vmatpush1.msra.mxu0 %v125
    %4837 = vmatprep.subr.mxu0 0.0
    %4838 = vmatpush1.msra.mxu0 %v126
    %4839 = vmatprep.subr.mxu0 0.0
    %4840 = vmatpush1.msra.mxu0 %v127
    %4841 = vmatprep.subr.mxu0 0.0
    %4842 = vmatpush1.msra.mxu0 %v128
    %4843 = vmatprep.subr.mxu0 0.0
    %4844 = vmatpush1.msra.mxu0 %v129
    %4845 = vmatprep.subr.mxu0 0.0
    %4846 = vmatpush1.msra.mxu0 %v130
    %4847 = vmatprep.subr.mxu0 0.0
    %4848 = vmatpush1.msra.mxu0 %v131
    %4849 = vmatprep.subr.mxu0 0.0
    %4850 = vmatpush1.msra.mxu0 %v132
    %4851 = vmatprep.subr.mxu0 0.0
    %4852 = vmatpush1.msra.mxu0 %v133
    %4853 = vmatprep.subr.mxu0 0.0
    %4854 = vmatpush1.msra.mxu0 %v134
    %4855 = vmatprep.subr.mxu0 0.0
    %4856 = vmatpush1.msra.mxu0 %v135
    %4857 = vmatprep.subr.mxu0 0.0
    %4858 = vmatpush1.msra.mxu0 %v136
    %4859 = vmatprep.subr.mxu0 0.0
    %4860 = vmatpush1.msra.mxu0 %v137
    %4861 = vmatprep.subr.mxu0 0.0
    %4862 = vmatpush1.msra.mxu0 %v138
    %4863 = vmatprep.subr.mxu0 0.0
    %4864 = vmatpush1.msra.mxu0 %v139
    %4865 = vmatprep.subr.mxu0 0.0
    %4866 = vmatpush1.msra.mxu0 %v140
    %4867 = vmatprep.subr.mxu0 0.0
    %4868 = vmatpush1.msra.mxu0 %v141
    %4869 = vmatprep.subr.mxu0 0.0
    %4870 = vmatpush1.msra.mxu0 %v142
    %4871 = vmatprep.subr.mxu0 0.0
    %4872 = vmatpush1.msra.mxu0 %v143
    %4873 = vmatprep.subr.mxu0 0.0
    %4874 = vmatpush1.msra.mxu0 %v144
    %4875 = vmatprep.subr.mxu0 0.0
    %4876 = vmatpush1.msra.mxu0 %v145
    %4877 = vmatprep.subr.mxu0 0.0
    %4878 = vmatpush1.msra.mxu0 %v146
    %4879 = vmatprep.subr.mxu0 0.0
    %4880 = vmatpush1.msra.mxu0 %v147
    %4881 = vmatprep.subr.mxu0 0.0
    %4882 = vmatpush1.msra.mxu0 %v148
    %4883 = vmatprep.subr.mxu0 0.0
    %4884 = vmatpush1.msra.mxu0 %v149
    %4885 = vmatprep.subr.mxu0 0.0
    %4886 = vmatpush1.msra.mxu0 %v150
    %4887 = vmatprep.subr.mxu0 0.0
    %4888 = vmatpush1.msra.mxu0 %v151
    %4889 = vmatprep.subr.mxu0 0.0
    %4890 = vmatpush1.msra.mxu0 %v152
    %4891 = vmatprep.subr.mxu0 0.0
    %4892 = vmatpush1.msra.mxu0 %v153
    %4893 = vmatprep.subr.mxu0 0.0
    %4894 = vmatpush1.msra.mxu0 %v154
    %4895 = vmatprep.subr.mxu0 0.0
    %4896 = vmatpush1.msra.mxu0 %v155
    %4897 = vmatprep.mubr.f32.mxu0 %v4688
    %4898 = vmatmul.mubr.f32.gmra.mrb[0].mxu0 %v4687
    %v4899 = vpop.f32.mrb[0].mxu0
    %v4900 = vadd.f32 %v4830, %v4899
    %v4901 = vpop.f32.mrb[0].mxu0
    %4902 = vdwg.mxu0
    %4903 = vmatprep.subr.mxu0 0.0
    %4904 = vmatpush1.msra.mxu0 %v156
    %4905 = vmatprep.subr.mxu0 0.0
    %4906 = vmatpush1.msra.mxu0 %v157
    %4907 = vmatprep.subr.mxu0 0.0
    %4908 = vmatpush1.msra.mxu0 %v158
    %4909 = vmatprep.subr.mxu0 0.0
    %4910 = vmatpush1.msra.mxu0 %v159
    %4911 = vmatprep.subr.mxu0 0.0
    %4912 = vmatpush1.msra.mxu0 %v160
    %4913 = vmatprep.subr.mxu0 0.0
    %4914 = vmatpush1.msra.mxu0 %v161
    %4915 = vmatprep.subr.mxu0 0.0
    %4916 = vmatpush1.msra.mxu0 %v162
    %4917 = vmatprep.subr.mxu0 0.0
    %4918 = vmatpush1.msra.mxu0 %v163
    %4919 = vmatprep.subr.mxu0 0.0
    %4920 = vmatpush1.msra.mxu0 %v164
    %4921 = vmatprep.subr.mxu0 0.0
    %4922 = vmatpush1.msra.mxu0 %v165
    %4923 = vmatprep.subr.mxu0 0.0
    %4924 = vmatpush1.msra.mxu0 %v166
    %4925 = vmatprep.subr.mxu0 0.0
    %4926 = vmatpush1.msra.mxu0 %v167
    %4927 = vmatprep.subr.mxu0 0.0
    %4928 = vmatpush1.msra.mxu0 %v168
    %4929 = vmatprep.subr.mxu0 0.0
    %4930 = vmatpush1.msra.mxu0 %v169
    %4931 = vmatprep.subr.mxu0 0.0
    %4932 = vmatpush1.msra.mxu0 %v170
    %4933 = vmatprep.subr.mxu0 0.0
    %4934 = vmatpush1.msra.mxu0 %v171
    %4935 = vmatprep.subr.mxu0 0.0
    %4936 = vmatpush1.msra.mxu0 %v172
    %4937 = vmatprep.subr.mxu0 0.0
    %4938 = vmatpush1.msra.mxu0 %v173
    %4939 = vmatprep.subr.mxu0 0.0
    %4940 = vmatpush1.msra.mxu0 %v174
    %4941 = vmatprep.subr.mxu0 0.0
    %4942 = vmatpush1.msra.mxu0 %v175
    %4943 = vmatprep.subr.mxu0 0.0
    %4944 = vmatpush1.msra.mxu0 %v176
    %4945 = vmatprep.subr.mxu0 0.0
    %4946 = vmatpush1.msra.mxu0 %v177
    %4947 = vmatprep.subr.mxu0 0.0
    %4948 = vmatpush1.msra.mxu0 %v178
    %4949 = vmatprep.subr.mxu0 0.0
    %4950 = vmatpush1.msra.mxu0 %v179
    %4951 = vmatprep.subr.mxu0 0.0
    %4952 = vmatpush1.msra.mxu0 %v180
    %4953 = vmatprep.subr.mxu0 0.0
    %4954 = vmatpush1.msra.mxu0 %v181
    %4955 = vmatprep.subr.mxu0 0.0
    %4956 = vmatpush1.msra.mxu0 %v182
    %4957 = vmatprep.subr.mxu0 0.0
    %4958 = vmatpush1.msra.mxu0 %v183
    %4959 = vmatprep.subr.mxu0 0.0
    %4960 = vmatpush1.msra.mxu0 %v184
    %4961 = vmatprep.subr.mxu0 0.0
    %4962 = vmatpush1.msra.mxu0 %v185
    %4963 = vmatprep.subr.mxu0 0.0
    %4964 = vmatpush1.msra.mxu0 %v186
    %4965 = vmatprep.subr.mxu0 0.0
    %4966 = vmatpush1.msra.mxu0 %v187
    %4967 = vmatprep.mubr.f32.mxu0 %v4690
    %4968 = vmatmul.mubr.f32.gmra.mrb[0].mxu0 %v4689
    %v4969 = vpop.f32.mrb[0].mxu0
    %v4970 = vadd.f32 %v4900, %v4969
    %v4971 = vpop.f32.mrb[0].mxu0
    %4972 = vdwg.mxu0
    %v4973 = vmul.f32 %v4380, 0.8
    %v4974 = vmul.f32 %v4970, 0.2
    %v4975 = vadd.f32 %v4973, %v4974
    %s4976 = scalar_lea.vmem %s1, 14
    %v4977 = vld [vmem:[%s4976] sm:$0x3]
    %v4978 = vmul.f32 %v4977, 0.05
    %v4979 = vadd.f32 %v4975, %v4978
    %s4980 = scalar_lea.vmem [#allocation3], 14
    %4981 = vst.msk [vmem:[%s4980] sm:$0x3] %vm787, %v4979
    %4982 = vst.msk [vmem:[#allocation2] sm:$0x3] %vm787, %v4979
    // Predicated region
    $region26: #{tpu_custom_call.1} parent=1 // pred_check
      _
    $region27: #{tpu_custom_call.1} parent=1 // pred_check_branch
      %4984 = sbr.rel (0) target = $region29
    $region28: #{tpu_custom_call.1} parent=1 // pred_region
      %s4986 = ssub.s32 256, 256
      %4987 = vsyncadd [#allocation4], %s4986
      %s4988 = sshll.u32 [#allocation3], 4
      %s4989 = int_to_ptr.vmem [resolvable:$true] %s4988
      %4994 = dma.vmem_to_hbm [thread:$0]  %s4989, 256, %s5, [#allocation4], 32, 32, 2
    $region29: #{tpu_custom_call.1} parent=1 // pred_fallthru
      _
    // Predicated region
    $region30: #{tpu_custom_call.1} parent=1 // pred_check
      _
    $region31: #{tpu_custom_call.1} parent=1 // pred_check_branch
      %4996 = sbr.rel (0) target = $region33
    $region32: #{tpu_custom_call.1} parent=1 // pred_region
      %4997 = dma.done [#allocation4], 256
    $region33: #{tpu_custom_call.1} parent=1 // pred_fallthru
      _
    %4998 = vsyncpa [#allocation4], 1

</llo_original>
